<compile_context>
chip_gen: v6e
topology: v6e:2x2x1
jax: 0.10.0
libtpu: 0.0.40
codegen_flags: <defaults>
</compile_context>

<pallas_src>
import functools

import jax
import jax.numpy as jnp
from jax.experimental import pallas as pl
from jax.experimental.pallas import tpu as pltpu

_SLOPE = 0.2
_BN_EPS = 1e-5


def _pick_tile(total, pref):
    """Largest divisor of `total` <= pref that is a multiple of 16 (else total)."""
    if total <= pref:
        return total
    start = (min(pref, total) // 16) * 16
    for t in range(start, 0, -16):
        if total % t == 0:
            return t
    return total


# ----------------------------------------------------------------------------
# Pallas kernels
# ----------------------------------------------------------------------------
def _pdist_kernel(xq_ref, xall_ref, sqh_ref, d_ref):
    # d[i, j] = x_i . x_j - 0.5*||x_j||^2  -- a positive-scale + per-row-constant
    # transform of the true -||x_i - x_j||^2 metric, so top-k over j is
    # unchanged.  bf16 operands on the MXU, f32 accumulation, bf16 output
    # (halves the dominant (B,N,N) HBM write).
    inner = jax.lax.dot_general(
        xq_ref[0], xall_ref[0], (((1,), (1,)), ((), ())),
        preferred_element_type=jnp.float32)
    d_ref[0] = (inner - sqh_ref[0]).astype(d_ref.dtype)


def _edge_pre_kernel(x_ref, wd_ref, wb_ref, t_ref, xd_ref, base_ref):
    # Per-point EdgeConv projections with BN scale pre-folded into the weights:
    #   xd   = x @ (Wd*s)                (gathered over neighbors afterwards)
    #   base = x @ ((Wc - Wd)*s) + shift (constant over the k neighbors)
    # The layer output is leaky(max_k xd[nbr_k] + base); no per-neighbor matmul.
    x = x_ref[...]
    xd = jnp.dot(x, wd_ref[...], preferred_element_type=jnp.float32)
    xd_ref[...] = xd.astype(xd_ref.dtype)
    base = jnp.dot(x, wb_ref[...], preferred_element_type=jnp.float32) + t_ref[...]
    base_ref[...] = base


def _conv5_pool_kernel(x1_ref, x2_ref, x3_ref, x4_ref,
                       w1_ref, w2_ref, w3_ref, w4_ref, t_ref,
                       mx_ref, mn_ref, mx_acc, sum_acc, *, slope, inv_n):
    # Fused conv5 (1x1 conv = matmul over the four un-concatenated feature
    # blocks) + folded-BN bias + LeakyReLU + global max/mean pooling.
    j = pl.program_id(1)

    @pl.when(j == 0)
    def _():
        mx_acc[...] = jnp.full(mx_acc.shape, -jnp.inf, mx_acc.dtype)
        sum_acc[...] = jnp.zeros(sum_acc.shape, sum_acc.dtype)

    y = jnp.dot(x1_ref[0], w1_ref[...], preferred_element_type=jnp.float32)
    y = y + jnp.dot(x2_ref[0], w2_ref[...], preferred_element_type=jnp.float32)
    y = y + jnp.dot(x3_ref[0], w3_ref[...], preferred_element_type=jnp.float32)
    y = y + jnp.dot(x4_ref[0], w4_ref[...], preferred_element_type=jnp.float32)
    y = y + t_ref[...]
    y = jnp.where(y >= 0, y, slope * y)

    # Keep the per-step reductions elementwise (VPU): fold rows in chunks of
    # `sub` sublanes and only collapse across sublanes in the epilogue (XLU).
    rows = y.shape[0]
    sub = mx_acc.shape[0]
    yr = y.reshape(rows // sub, sub, -1)
    mx_acc[...] = jnp.maximum(mx_acc[...], jnp.max(yr, axis=0))
    sum_acc[...] = sum_acc[...] + jnp.sum(yr, axis=0)

    @pl.when(j == pl.num_programs(1) - 1)
    def _():
        mx_ref[0] = jnp.max(mx_acc[...], axis=0, keepdims=True)
        mn_ref[0] = jnp.sum(sum_acc[...], axis=0, keepdims=True) * inv_n


def _linear_kernel(x_ref, w_ref, b_ref, o_ref, *, slope):
    # x_ref: (tm, K), w_ref: (K, N), b_ref: (1, N), o_ref: (tm, N).
    # BN is pre-folded into w/b by the caller.
    y = jnp.dot(x_ref[...], w_ref[...], preferred_element_type=jnp.float32)
    y = y + b_ref[...]
    if slope is not None:
        y = jnp.where(y >= 0, y, slope * y)
    o_ref[...] = y.astype(o_ref.dtype)


# ----------------------------------------------------------------------------
# pallas_call wrappers
# ----------------------------------------------------------------------------
def pairwise_metric(x_bf, sq_half, row_tile=512):
    # x_bf: (B, N, C) bf16, sq_half: (B, 1, N) f32 -> (B, N, N) bf16
    B, N, C = x_bf.shape
    tm = _pick_tile(N, row_tile)
    return pl.pallas_call(
        _pdist_kernel,
        out_shape=jax.ShapeDtypeStruct((B, N, N), jnp.bfloat16),
        grid_spec=pltpu.PrefetchScalarGridSpec(
            num_scalar_prefetch=0,
            grid=(B, N // tm),
            in_specs=[pl.BlockSpec((1, tm, C), lambda b, i: (b, i, 0)),
                      pl.BlockSpec((1, N, C), lambda b, i: (b, 0, 0)),
                      pl.BlockSpec((1, 1, N), lambda b, i: (b, 0, 0))],
            out_specs=pl.BlockSpec((1, tm, N), lambda b, i: (b, i, 0))),
        compiler_params=pltpu.CompilerParams(
            dimension_semantics=("parallel", "parallel")),
    )(x_bf, x_bf, sq_half)


def edge_pre_matmul(x_rows, wd, wb, shift, row_tile=1024):
    # x_rows: (M, C) bf16; wd/wb: (C, Cout) bf16 (BN scale pre-folded).
    # Returns xd (M, Cout) bf16 and base (M, Cout) f32.
    M, C = x_rows.shape
    Cout = wd.shape[1]
    tm = _pick_tile(M, row_tile)
    return pl.pallas_call(
        _edge_pre_kernel,
        out_shape=(jax.ShapeDtypeStruct((M, Cout), jnp.bfloat16),
                   jax.ShapeDtypeStruct((M, Cout), jnp.float32)),
        grid_spec=pltpu.PrefetchScalarGridSpec(
            num_scalar_prefetch=0,
            grid=(M // tm,),
            in_specs=[pl.BlockSpec((tm, C), lambda i: (i, 0)),
                      pl.BlockSpec((C, Cout), lambda i: (0, 0)),
                      pl.BlockSpec((C, Cout), lambda i: (0, 0)),
                      pl.BlockSpec((1, Cout), lambda i: (0, 0))],
            out_specs=[pl.BlockSpec((tm, Cout), lambda i: (i, 0)),
                       pl.BlockSpec((tm, Cout), lambda i: (i, 0))]),
        compiler_params=pltpu.CompilerParams(
            dimension_semantics=("parallel",)),
    )(x_rows, wd, wb, shift.reshape(1, -1))


def conv5_global_pool(feats, w_parts, shift, row_tile=1024):
    # feats: 4 tensors (B, N, Ci) bf16; w_parts: 4 tensors (Ci, emb) bf16 with
    # BN scale folded in; shift: (emb,) f32.  Returns (max, mean), each (B, emb).
    B, N, _ = feats[0].shape
    emb = w_parts[0].shape[1]
    tn = _pick_tile(N, row_tile)
    sub = 8 if tn % 8 == 0 else 1
    in_specs = (
        [pl.BlockSpec((1, tn, f.shape[2]), lambda b, j: (b, j, 0)) for f in feats]
        + [pl.BlockSpec((w.shape[0], emb), lambda b, j: (0, 0)) for w in w_parts]
        + [pl.BlockSpec((1, emb), lambda b, j: (0, 0))])
    mx, mn = pl.pallas_call(
        functools.partial(_conv5_pool_kernel, slope=_SLOPE, inv_n=1.0 / N),
        out_shape=(jax.ShapeDtypeStruct((B, 1, emb), jnp.float32),
                   jax.ShapeDtypeStruct((B, 1, emb), jnp.float32)),
        grid_spec=pltpu.PrefetchScalarGridSpec(
            num_scalar_prefetch=0,
            grid=(B, N // tn),
            in_specs=in_specs,
            out_specs=[pl.BlockSpec((1, 1, emb), lambda b, j: (b, 0, 0)),
                       pl.BlockSpec((1, 1, emb), lambda b, j: (b, 0, 0))],
            scratch_shapes=[pltpu.VMEM((sub, emb), jnp.float32),
                            pltpu.VMEM((sub, emb), jnp.float32)]),
        compiler_params=pltpu.CompilerParams(
            dimension_semantics=("parallel", "arbitrary")),
    )(*feats, *w_parts, shift.reshape(1, -1))
    return mx[:, 0, :], mn[:, 0, :]


def fused_linear(x, w, bias, slope, row_tile=512):
    M, K = x.shape
    Nout = w.shape[1]
    tm = _pick_tile(M, row_tile)
    return pl.pallas_call(
        functools.partial(_linear_kernel, slope=slope),
        out_shape=jax.ShapeDtypeStruct((M, Nout), jnp.float32),
        grid_spec=pltpu.PrefetchScalarGridSpec(
            num_scalar_prefetch=0,
            grid=(M // tm,),
            in_specs=[pl.BlockSpec((tm, K), lambda i: (i, 0)),
                      pl.BlockSpec((K, Nout), lambda i: (0, 0)),
                      pl.BlockSpec((1, Nout), lambda i: (0, 0))],
            out_specs=pl.BlockSpec((tm, Nout), lambda i: (i, 0))),
        compiler_params=pltpu.CompilerParams(
            dimension_semantics=("parallel",)),
    )(x, w, bias.reshape(1, -1))


# ----------------------------------------------------------------------------
# Model glue (plain JAX): kNN top-k, neighbor gather-max, layer composition
# ----------------------------------------------------------------------------
def bn_affine(gamma, beta, mean, var):
    # eval-mode BN folded into a per-channel affine using running statistics
    scale = gamma / jnp.sqrt(var + _BN_EPS)
    shift = beta - mean * scale
    return scale.astype(jnp.float32), shift.astype(jnp.float32)


def edge_conv_layer(x_nc, W, scale, shift, k, row_tile=1024):
    # x_nc: (B, N, C) channel-last features.
    # W: (2C, Cout) 1x1-conv weight with rows ordered [diff-half; center-half]
    #    (matches torch cat((x_j - x_i, x_i)); PyTorch Conv2d weights are
    #    (Cout, 2C, 1, 1) and need a transpose when imported).
    B, N, C = x_nc.shape
    Cout = W.shape[1]
    x_f32 = x_nc.astype(jnp.float32)
    x_bf = x_nc.astype(jnp.bfloat16)

    # kNN over the current feature space (self is its own nearest neighbor,
    # matching the reference).
    sq_half = 0.5 * jnp.sum(jnp.square(x_f32), axis=-1)[:, None, :]   # (B,1,N)
    d = pairwise_metric(x_bf, sq_half, row_tile=min(row_tile, 512))   # bf16
    idx = jax.lax.top_k(d, k)[1]                                      # (B,N,k)

    # BN scale folded into the weights; LeakyReLU deferred until after the max.
    wd = (W[:C] * scale[None, :]).astype(jnp.bfloat16)
    wb = ((W[C:] - W[:C]) * scale[None, :]).astype(jnp.bfloat16)
    xd, base = edge_pre_matmul(x_bf.reshape(B * N, C), wd, wb, shift, row_tile)
    xd = xd.reshape(B, N, Cout)
    base = base.reshape(B, N, Cout)

    # TODO(synk): move this neighbor gather-max in-kernel (scalar-prefetched
    # idx table + whole-batch xd resident in VMEM) once Mosaic dynamic row
    # gather is available; for now XLA does k fused take_along_axis/maximum
    # steps so the (B, N, k, Cout) tensor is never materialized.
    m = None
    for kk in range(k):
        g = jnp.take_along_axis(xd, idx[:, :, kk:kk + 1], axis=1)     # (B,N,Cout)
        m = g if m is None else jnp.maximum(m, g)

    y = m.astype(jnp.float32) + base
    y = jnp.where(y >= 0, y, _SLOPE * y)
    return y.astype(jnp.bfloat16)                                     # (B,N,Cout)


def dgcnn_forward(x, params, k, row_tile=1024):
    # x: (B, N, dim_in), matches torch forward input (before its transpose(2,1))
    h = x
    feats = []
    for i in range(1, 5):
        s, t = bn_affine(params[f"g{i}"], params[f"b{i}"],
                         params[f"m{i}"], params[f"v{i}"])
        h = edge_conv_layer(h, params[f"W{i}"], s, t, k, row_tile)
        feats.append(h)

    # conv5 + BN + LeakyReLU fused with global max/mean pooling; the 512-ch
    # `cat` is never materialized (W5 is split row-wise per feature block).
    s5, t5 = bn_affine(params["g5"], params["b5"], params["m5"], params["v5"])
    W5 = params["W5"]
    w_parts, off = [], 0
    for f in feats:
        c = f.shape[-1]
        w_parts.append((W5[off:off + c] * s5[None, :]).astype(jnp.bfloat16))
        off += c
    mx, mn = conv5_global_pool(feats, w_parts, t5, row_tile)
    g = jnp.concatenate([mx, mn], axis=-1)                 # (B, 2*emb) f32

    # Classifier head; BN folded into weights/bias, dropout = eval identity.
    s6, t6 = bn_affine(params["g6"], params["b6"], params["m6"], params["v6"])
    h = fused_linear(g, params["L1"] * s6[None, :], t6, slope=_SLOPE)
    s7, t7 = bn_affine(params["g7"], params["b7"], params["m7"], params["v7"])
    h = fused_linear(h, params["L2"] * s7[None, :],
                     params["L2b"] * s7 + t7, slope=_SLOPE)
    out = fused_linear(h, params["L3"], params["L3b"], slope=None)
    return out                                             # (B, output_channels)


# ----------------------------------------------------------------------------
# Deterministic parameter init (synthetic; matches module __init__ shapes)
# ----------------------------------------------------------------------------
def init_params(key, dim_in, emb_dims, output_channels=40):
    ks = jax.random.split(key, 32)
    w = lambda k_, s: (0.1 * jax.random.normal(k_, s, dtype=jnp.float32))
    p = {}
    conv_dims = [(2 * dim_in, 64), (2 * 64, 64), (2 * 64, 128), (2 * 128, 256)]
    bn_dims = [c for _, c in conv_dims] + [emb_dims, 512, 256]
    for i, (cin, cout) in enumerate(conv_dims, start=1):
        p[f"W{i}"] = w(ks[i], (cin, cout))
    p["W5"] = w(ks[5], (512, emb_dims))
    for i, c in enumerate(bn_dims, start=1):
        p[f"g{i}"] = 1.0 + 0.1 * jax.random.normal(ks[8 + i], (c,), dtype=jnp.float32)
        p[f"b{i}"] = 0.1 * jax.random.normal(ks[16 + i], (c,), dtype=jnp.float32)
        p[f"m{i}"] = jnp.zeros((c,), jnp.float32)   # running mean
        p[f"v{i}"] = jnp.ones((c,), jnp.float32)    # running var
    p["L1"] = w(ks[6], (2 * emb_dims, 512))
    p["L2"] = w(ks[7], (512, 256))
    p["L2b"] = 0.1 * jax.random.normal(ks[25], (256,), dtype=jnp.float32)
    p["L3"] = w(ks[26], (256, output_channels))
    p["L3b"] = 0.1 * jax.random.normal(ks[27], (output_channels,), dtype=jnp.float32)
    return p


if __name__ == "__main__":
    B, N, DIM_IN, K, EMB, NCLS = 2, 16, 3, 4, 64, 40
    x = jax.random.normal(jax.random.PRNGKey(0), (B, N, DIM_IN), dtype=jnp.float32)
    params = init_params(jax.random.PRNGKey(42), DIM_IN, EMB, NCLS)

    fwd = jax.jit(functools.partial(dgcnn_forward, k=K))
    out = fwd(x, params)
    out = jax.block_until_ready(out)

    assert out.shape == (B, NCLS), out.shape
    assert jnp.all(jnp.isfinite(out))
    print("KERNEL_OK")
</pallas_src>

<mosaic_0001>
module attributes {stable_mosaic.version = 11 : i64} {
  func.func @_edge_pre_kernel(%arg0: i32, %arg1: memref<32x3xbf16, #tpu.memory_space<vmem>>, %arg2: memref<3x64xbf16, #tpu.memory_space<vmem>>, %arg3: memref<3x64xbf16, #tpu.memory_space<vmem>>, %arg4: memref<1x64xf32, #tpu.memory_space<vmem>>, %arg5: memref<32x64xbf16, #tpu.memory_space<vmem>>, %arg6: memref<32x64xf32, #tpu.memory_space<vmem>>) attributes {dimension_semantics = [#tpu.dimension_semantics<parallel>], iteration_bounds = array<i64: 1>, scalar_prefetch = 0 : i64, scratch_operands = 0 : i64, tpu.core_type = #tpu.core_type<tc>, window_params = [{transform_indices = @transform_0, window_bounds = array<i64: 32, 3>}, {pipeline_mode = #tpu.pipeline_mode<synchronous>, transform_indices = @transform_1, window_bounds = array<i64: 3, 64>}, {pipeline_mode = #tpu.pipeline_mode<synchronous>, transform_indices = @transform_2, window_bounds = array<i64: 3, 64>}, {pipeline_mode = #tpu.pipeline_mode<synchronous>, transform_indices = @transform_3, window_bounds = array<i64: 1, 64>}, {transform_indices = @transform_4, window_bounds = array<i64: 32, 64>}, {transform_indices = @transform_5, window_bounds = array<i64: 32, 64>}]} {
    %c0 = arith.constant 0 : index
    %c0_0 = arith.constant 0 : index
    %0 = vector.load %arg1[%c0, %c0_0] : memref<32x3xbf16, #tpu.memory_space<vmem>>, vector<32x3xbf16>
    %c0_1 = arith.constant 0 : index
    %c0_2 = arith.constant 0 : index
    %1 = vector.load %arg2[%c0_1, %c0_2] : memref<3x64xbf16, #tpu.memory_space<vmem>>, vector<3x64xbf16>
    %cst = arith.constant dense<0.000000e+00> : vector<32x64xf32>
    %2 = tpu.matmul %0, %1, %cst {dimension_numbers = #tpu.dot_dimension_numbers<[1], [0], [0], [1], [0, 0, 1, 1], [], []>} : vector<32x3xbf16>, vector<3x64xbf16>, vector<32x64xf32> -> vector<32x64xf32>
    %3 = arith.truncf %2 : vector<32x64xf32> to vector<32x64xbf16>
    %c0_3 = arith.constant 0 : index
    %c0_4 = arith.constant 0 : index
    %4 = vector.load %arg5[%c0_3, %c0_4] : memref<32x64xbf16, #tpu.memory_space<vmem>>, vector<32x64xbf16>
    tpu.vector_store %arg5[%c0_3, %c0_4], %3 {strides = array<i32>} : memref<32x64xbf16, #tpu.memory_space<vmem>>, vector<32x64xbf16>,
    %c0_5 = arith.constant 0 : index
    %c0_6 = arith.constant 0 : index
    %5 = vector.load %arg3[%c0_5, %c0_6] : memref<3x64xbf16, #tpu.memory_space<vmem>>, vector<3x64xbf16>
    %cst_7 = arith.constant dense<0.000000e+00> : vector<32x64xf32>
    %6 = tpu.matmul %0, %5, %cst_7 {dimension_numbers = #tpu.dot_dimension_numbers<[1], [0], [0], [1], [0, 0, 1, 1], [], []>} : vector<32x3xbf16>, vector<3x64xbf16>, vector<32x64xf32> -> vector<32x64xf32>
    %c0_8 = arith.constant 0 : index
    %c0_9 = arith.constant 0 : index
    %7 = vector.load %arg4[%c0_8, %c0_9] : memref<1x64xf32, #tpu.memory_space<vmem>>, vector<1x64xf32>
    %8 = vector.broadcast %7 : vector<1x64xf32> to vector<32x64xf32>
    %9 = arith.addf %6, %8 : vector<32x64xf32>
    %c0_10 = arith.constant 0 : index
    %c0_11 = arith.constant 0 : index
    %10 = vector.load %arg6[%c0_10, %c0_11] : memref<32x64xf32, #tpu.memory_space<vmem>>, vector<32x64xf32>
    tpu.vector_store %arg6[%c0_10, %c0_11], %9 {strides = array<i32>} : memref<32x64xf32, #tpu.memory_space<vmem>>, vector<32x64xf32>,
    return
  }
  func.func @transform_0(%arg0: i32) -> (i32, i32) {
    %c0_i32 = arith.constant 0 : i32
    %c0_i32_0 = arith.constant 0 : i32
    return %arg0, %c0_i32 : i32, i32
  }
  func.func @transform_1(%arg0: i32) -> (i32, i32) {
    %c0_i32 = arith.constant 0 : i32
    %c0_i32_0 = arith.constant 0 : i32
    %c0_i32_1 = arith.constant 0 : i32
    return %c0_i32, %c0_i32_0 : i32, i32
  }
  func.func @transform_2(%arg0: i32) -> (i32, i32) {
    %c0_i32 = arith.constant 0 : i32
    %c0_i32_0 = arith.constant 0 : i32
    %c0_i32_1 = arith.constant 0 : i32
    return %c0_i32, %c0_i32_0 : i32, i32
  }
  func.func @transform_3(%arg0: i32) -> (i32, i32) {
    %c0_i32 = arith.constant 0 : i32
    %c0_i32_0 = arith.constant 0 : i32
    %c0_i32_1 = arith.constant 0 : i32
    return %c0_i32, %c0_i32_0 : i32, i32
  }
  func.func @transform_4(%arg0: i32) -> (i32, i32) {
    %c0_i32 = arith.constant 0 : i32
    %c0_i32_0 = arith.constant 0 : i32
    return %arg0, %c0_i32 : i32, i32
  }
  func.func @transform_5(%arg0: i32) -> (i32, i32) {
    %c0_i32 = arith.constant 0 : i32
    %c0_i32_0 = arith.constant 0 : i32
    return %arg0, %c0_i32 : i32, i32
  }
}

module attributes {stable_mosaic.version = 11 : i64} {
  func.func @_pdist_kernel(%arg0: i32, %arg1: i32, %arg2: memref<1x16x3xbf16, #tpu.memory_space<vmem>>, %arg3: memref<1x16x3xbf16, #tpu.memory_space<vmem>>, %arg4: memref<1x1x16xf32, #tpu.memory_space<vmem>>, %arg5: memref<1x16x16xbf16, #tpu.memory_space<vmem>>) attributes {dimension_semantics = [#tpu.dimension_semantics<parallel>, #tpu.dimension_semantics<parallel>], iteration_bounds = array<i64: 2, 1>, scalar_prefetch = 0 : i64, scratch_operands = 0 : i64, tpu.core_type = #tpu.core_type<tc>, window_params = [{transform_indices = @transform_0, window_bounds = array<i64: 1, 16, 3>}, {transform_indices = @transform_1, window_bounds = array<i64: 1, 16, 3>}, {transform_indices = @transform_2, window_bounds = array<i64: 1, 1, 16>}, {transform_indices = @transform_3, window_bounds = array<i64: 1, 16, 16>}]} {
    %c0 = arith.constant 0 : index
    %c0_0 = arith.constant 0 : index
    %c0_1 = arith.constant 0 : index
    %0 = vector.load %arg2[%c0, %c0_0, %c0_1] : memref<1x16x3xbf16, #tpu.memory_space<vmem>>, vector<1x16x3xbf16>
    %1 = vector.shape_cast %0 : vector<1x16x3xbf16> to vector<16x3xbf16>
    %c0_2 = arith.constant 0 : index
    %c0_3 = arith.constant 0 : index
    %c0_4 = arith.constant 0 : index
    %2 = vector.load %arg3[%c0_2, %c0_3, %c0_4] : memref<1x16x3xbf16, #tpu.memory_space<vmem>>, vector<1x16x3xbf16>
    %3 = vector.shape_cast %2 : vector<1x16x3xbf16> to vector<16x3xbf16>
    %cst = arith.constant dense<0.000000e+00> : vector<16x16xf32>
    %4 = tpu.matmul %1, %3, %cst {dimension_numbers = #tpu.dot_dimension_numbers<[1], [1], [0], [0], [0, 0, 1, 0], [], []>} : vector<16x3xbf16>, vector<16x3xbf16>, vector<16x16xf32> -> vector<16x16xf32>
    %c0_5 = arith.constant 0 : index
    %c0_6 = arith.constant 0 : index
    %c0_7 = arith.constant 0 : index
    %5 = vector.load %arg4[%c0_5, %c0_6, %c0_7] : memref<1x1x16xf32, #tpu.memory_space<vmem>>, vector<1x1x16xf32>
    %6 = vector.shape_cast %5 : vector<1x1x16xf32> to vector<1x16xf32>
    %7 = vector.broadcast %6 : vector<1x16xf32> to vector<16x16xf32>
    %8 = arith.subf %4, %7 : vector<16x16xf32>
    %9 = arith.truncf %8 : vector<16x16xf32> to vector<16x16xbf16>
    %c0_8 = arith.constant 0 : index
    %c0_9 = arith.constant 0 : index
    %c0_10 = arith.constant 0 : index
    %10 = vector.load %arg5[%c0_8, %c0_9, %c0_10] : memref<1x16x16xbf16, #tpu.memory_space<vmem>>, vector<1x16x16xbf16>
    %11 = vector.shape_cast %10 : vector<1x16x16xbf16> to vector<16x16xbf16>
    %12 = vector.shape_cast %9 : vector<16x16xbf16> to vector<1x16x16xbf16>
    tpu.vector_store %arg5[%c0_8, %c0_9, %c0_10], %12 {strides = array<i32>} : memref<1x16x16xbf16, #tpu.memory_space<vmem>>, vector<1x16x16xbf16>,
    return
  }
  func.func @transform_0(%arg0: i32, %arg1: i32) -> (i32, i32, i32) {
    %c0_i32 = arith.constant 0 : i32
    %c0_i32_0 = arith.constant 0 : i32
    return %arg0, %arg1, %c0_i32 : i32, i32, i32
  }
  func.func @transform_1(%arg0: i32, %arg1: i32) -> (i32, i32, i32) {
    %c0_i32 = arith.constant 0 : i32
    %c0_i32_0 = arith.constant 0 : i32
    %c0_i32_1 = arith.constant 0 : i32
    return %arg0, %c0_i32, %c0_i32_0 : i32, i32, i32
  }
  func.func @transform_2(%arg0: i32, %arg1: i32) -> (i32, i32, i32) {
    %c0_i32 = arith.constant 0 : i32
    %c0_i32_0 = arith.constant 0 : i32
    %c0_i32_1 = arith.constant 0 : i32
    return %arg0, %c0_i32, %c0_i32_0 : i32, i32, i32
  }
  func.func @transform_3(%arg0: i32, %arg1: i32) -> (i32, i32, i32) {
    %c0_i32 = arith.constant 0 : i32
    %c0_i32_0 = arith.constant 0 : i32
    return %arg0, %arg1, %c0_i32 : i32, i32, i32
  }
}

module attributes {stable_mosaic.version = 11 : i64} {
  func.func @_pdist_kernel(%arg0: i32, %arg1: i32, %arg2: memref<1x16x64xbf16, #tpu.memory_space<vmem>>, %arg3: memref<1x16x64xbf16, #tpu.memory_space<vmem>>, %arg4: memref<1x1x16xf32, #tpu.memory_space<vmem>>, %arg5: memref<1x16x16xbf16, #tpu.memory_space<vmem>>) attributes {dimension_semantics = [#tpu.dimension_semantics<parallel>, #tpu.dimension_semantics<parallel>], iteration_bounds = array<i64: 2, 1>, scalar_prefetch = 0 : i64, scratch_operands = 0 : i64, tpu.core_type = #tpu.core_type<tc>, window_params = [{transform_indices = @transform_0, window_bounds = array<i64: 1, 16, 64>}, {transform_indices = @transform_1, window_bounds = array<i64: 1, 16, 64>}, {transform_indices = @transform_2, window_bounds = array<i64: 1, 1, 16>}, {transform_indices = @transform_3, window_bounds = array<i64: 1, 16, 16>}]} {
    %c0 = arith.constant 0 : index
    %c0_0 = arith.constant 0 : index
    %c0_1 = arith.constant 0 : index
    %0 = vector.load %arg2[%c0, %c0_0, %c0_1] : memref<1x16x64xbf16, #tpu.memory_space<vmem>>, vector<1x16x64xbf16>
    %1 = vector.shape_cast %0 : vector<1x16x64xbf16> to vector<16x64xbf16>
    %c0_2 = arith.constant 0 : index
    %c0_3 = arith.constant 0 : index
    %c0_4 = arith.constant 0 : index
    %2 = vector.load %arg3[%c0_2, %c0_3, %c0_4] : memref<1x16x64xbf16, #tpu.memory_space<vmem>>, vector<1x16x64xbf16>
    %3 = vector.shape_cast %2 : vector<1x16x64xbf16> to vector<16x64xbf16>
    %cst = arith.constant dense<0.000000e+00> : vector<16x16xf32>
    %4 = tpu.matmul %1, %3, %cst {dimension_numbers = #tpu.dot_dimension_numbers<[1], [1], [0], [0], [0, 0, 1, 0], [], []>} : vector<16x64xbf16>, vector<16x64xbf16>, vector<16x16xf32> -> vector<16x16xf32>
    %c0_5 = arith.constant 0 : index
    %c0_6 = arith.constant 0 : index
    %c0_7 = arith.constant 0 : index
    %5 = vector.load %arg4[%c0_5, %c0_6, %c0_7] : memref<1x1x16xf32, #tpu.memory_space<vmem>>, vector<1x1x16xf32>
    %6 = vector.shape_cast %5 : vector<1x1x16xf32> to vector<1x16xf32>
    %7 = vector.broadcast %6 : vector<1x16xf32> to vector<16x16xf32>
    %8 = arith.subf %4, %7 : vector<16x16xf32>
    %9 = arith.truncf %8 : vector<16x16xf32> to vector<16x16xbf16>
    %c0_8 = arith.constant 0 : index
    %c0_9 = arith.constant 0 : index
    %c0_10 = arith.constant 0 : index
    %10 = vector.load %arg5[%c0_8, %c0_9, %c0_10] : memref<1x16x16xbf16, #tpu.memory_space<vmem>>, vector<1x16x16xbf16>
    %11 = vector.shape_cast %10 : vector<1x16x16xbf16> to vector<16x16xbf16>
    %12 = vector.shape_cast %9 : vector<16x16xbf16> to vector<1x16x16xbf16>
    tpu.vector_store %arg5[%c0_8, %c0_9, %c0_10], %12 {strides = array<i32>} : memref<1x16x16xbf16, #tpu.memory_space<vmem>>, vector<1x16x16xbf16>,
    return
  }
  func.func @transform_0(%arg0: i32, %arg1: i32) -> (i32, i32, i32) {
    %c0_i32 = arith.constant 0 : i32
    %c0_i32_0 = arith.constant 0 : i32
    return %arg0, %arg1, %c0_i32 : i32, i32, i32
  }
  func.func @transform_1(%arg0: i32, %arg1: i32) -> (i32, i32, i32) {
    %c0_i32 = arith.constant 0 : i32
    %c0_i32_0 = arith.constant 0 : i32
    %c0_i32_1 = arith.constant 0 : i32
    return %arg0, %c0_i32, %c0_i32_0 : i32, i32, i32
  }
  func.func @transform_2(%arg0: i32, %arg1: i32) -> (i32, i32, i32) {
    %c0_i32 = arith.constant 0 : i32
    %c0_i32_0 = arith.constant 0 : i32
    %c0_i32_1 = arith.constant 0 : i32
    return %arg0, %c0_i32, %c0_i32_0 : i32, i32, i32
  }
  func.func @transform_3(%arg0: i32, %arg1: i32) -> (i32, i32, i32) {
    %c0_i32 = arith.constant 0 : i32
    %c0_i32_0 = arith.constant 0 : i32
    return %arg0, %arg1, %c0_i32 : i32, i32, i32
  }
}

module attributes {stable_mosaic.version = 11 : i64} {
  func.func @_edge_pre_kernel(%arg0: i32, %arg1: memref<32x64xbf16, #tpu.memory_space<vmem>>, %arg2: memref<64x64xbf16, #tpu.memory_space<vmem>>, %arg3: memref<64x64xbf16, #tpu.memory_space<vmem>>, %arg4: memref<1x64xf32, #tpu.memory_space<vmem>>, %arg5: memref<32x64xbf16, #tpu.memory_space<vmem>>, %arg6: memref<32x64xf32, #tpu.memory_space<vmem>>) attributes {dimension_semantics = [#tpu.dimension_semantics<parallel>], iteration_bounds = array<i64: 1>, scalar_prefetch = 0 : i64, scratch_operands = 0 : i64, tpu.core_type = #tpu.core_type<tc>, window_params = [{transform_indices = @transform_0, window_bounds = array<i64: 32, 64>}, {pipeline_mode = #tpu.pipeline_mode<synchronous>, transform_indices = @transform_1, window_bounds = array<i64: 64, 64>}, {pipeline_mode = #tpu.pipeline_mode<synchronous>, transform_indices = @transform_2, window_bounds = array<i64: 64, 64>}, {pipeline_mode = #tpu.pipeline_mode<synchronous>, transform_indices = @transform_3, window_bounds = array<i64: 1, 64>}, {transform_indices = @transform_4, window_bounds = array<i64: 32, 64>}, {transform_indices = @transform_5, window_bounds = array<i64: 32, 64>}]} {
    %c0 = arith.constant 0 : index
    %c0_0 = arith.constant 0 : index
    %0 = vector.load %arg1[%c0, %c0_0] : memref<32x64xbf16, #tpu.memory_space<vmem>>, vector<32x64xbf16>
    %c0_1 = arith.constant 0 : index
    %c0_2 = arith.constant 0 : index
    %1 = vector.load %arg2[%c0_1, %c0_2] : memref<64x64xbf16, #tpu.memory_space<vmem>>, vector<64x64xbf16>
    %cst = arith.constant dense<0.000000e+00> : vector<32x64xf32>
    %2 = tpu.matmul %0, %1, %cst {dimension_numbers = #tpu.dot_dimension_numbers<[1], [0], [0], [1], [0, 0, 1, 1], [], []>} : vector<32x64xbf16>, vector<64x64xbf16>, vector<32x64xf32> -> vector<32x64xf32>
    %3 = arith.truncf %2 : vector<32x64xf32> to vector<32x64xbf16>
    %c0_3 = arith.constant 0 : index
    %c0_4 = arith.constant 0 : index
    %4 = vector.load %arg5[%c0_3, %c0_4] : memref<32x64xbf16, #tpu.memory_space<vmem>>, vector<32x64xbf16>
    tpu.vector_store %arg5[%c0_3, %c0_4], %3 {strides = array<i32>} : memref<32x64xbf16, #tpu.memory_space<vmem>>, vector<32x64xbf16>,
    %c0_5 = arith.constant 0 : index
    %c0_6 = arith.constant 0 : index
    %5 = vector.load %arg3[%c0_5, %c0_6] : memref<64x64xbf16, #tpu.memory_space<vmem>>, vector<64x64xbf16>
    %cst_7 = arith.constant dense<0.000000e+00> : vector<32x64xf32>
    %6 = tpu.matmul %0, %5, %cst_7 {dimension_numbers = #tpu.dot_dimension_numbers<[1], [0], [0], [1], [0, 0, 1, 1], [], []>} : vector<32x64xbf16>, vector<64x64xbf16>, vector<32x64xf32> -> vector<32x64xf32>
    %c0_8 = arith.constant 0 : index
    %c0_9 = arith.constant 0 : index
    %7 = vector.load %arg4[%c0_8, %c0_9] : memref<1x64xf32, #tpu.memory_space<vmem>>, vector<1x64xf32>
    %8 = vector.broadcast %7 : vector<1x64xf32> to vector<32x64xf32>
    %9 = arith.addf %6, %8 : vector<32x64xf32>
    %c0_10 = arith.constant 0 : index
    %c0_11 = arith.constant 0 : index
    %10 = vector.load %arg6[%c0_10, %c0_11] : memref<32x64xf32, #tpu.memory_space<vmem>>, vector<32x64xf32>
    tpu.vector_store %arg6[%c0_10, %c0_11], %9 {strides = array<i32>} : memref<32x64xf32, #tpu.memory_space<vmem>>, vector<32x64xf32>,
    return
  }
  func.func @transform_0(%arg0: i32) -> (i32, i32) {
    %c0_i32 = arith.constant 0 : i32
    %c0_i32_0 = arith.constant 0 : i32
    return %arg0, %c0_i32 : i32, i32
  }
  func.func @transform_1(%arg0: i32) -> (i32, i32) {
    %c0_i32 = arith.constant 0 : i32
    %c0_i32_0 = arith.constant 0 : i32
    %c0_i32_1 = arith.constant 0 : i32
    return %c0_i32, %c0_i32_0 : i32, i32
  }
  func.func @transform_2(%arg0: i32) -> (i32, i32) {
    %c0_i32 = arith.constant 0 : i32
    %c0_i32_0 = arith.constant 0 : i32
    %c0_i32_1 = arith.constant 0 : i32
    return %c0_i32, %c0_i32_0 : i32, i32
  }
  func.func @transform_3(%arg0: i32) -> (i32, i32) {
    %c0_i32 = arith.constant 0 : i32
    %c0_i32_0 = arith.constant 0 : i32
    %c0_i32_1 = arith.constant 0 : i32
    return %c0_i32, %c0_i32_0 : i32, i32
  }
  func.func @transform_4(%arg0: i32) -> (i32, i32) {
    %c0_i32 = arith.constant 0 : i32
    %c0_i32_0 = arith.constant 0 : i32
    return %arg0, %c0_i32 : i32, i32
  }
  func.func @transform_5(%arg0: i32) -> (i32, i32) {
    %c0_i32 = arith.constant 0 : i32
    %c0_i32_0 = arith.constant 0 : i32
    return %arg0, %c0_i32 : i32, i32
  }
}

module attributes {stable_mosaic.version = 11 : i64} {
  func.func @_edge_pre_kernel(%arg0: i32, %arg1: memref<32x64xbf16, #tpu.memory_space<vmem>>, %arg2: memref<64x128xbf16, #tpu.memory_space<vmem>>, %arg3: memref<64x128xbf16, #tpu.memory_space<vmem>>, %arg4: memref<1x128xf32, #tpu.memory_space<vmem>>, %arg5: memref<32x128xbf16, #tpu.memory_space<vmem>>, %arg6: memref<32x128xf32, #tpu.memory_space<vmem>>) attributes {dimension_semantics = [#tpu.dimension_semantics<parallel>], iteration_bounds = array<i64: 1>, scalar_prefetch = 0 : i64, scratch_operands = 0 : i64, tpu.core_type = #tpu.core_type<tc>, window_params = [{transform_indices = @transform_0, window_bounds = array<i64: 32, 64>}, {pipeline_mode = #tpu.pipeline_mode<synchronous>, transform_indices = @transform_1, window_bounds = array<i64: 64, 128>}, {pipeline_mode = #tpu.pipeline_mode<synchronous>, transform_indices = @transform_2, window_bounds = array<i64: 64, 128>}, {pipeline_mode = #tpu.pipeline_mode<synchronous>, transform_indices = @transform_3, window_bounds = array<i64: 1, 128>}, {transform_indices = @transform_4, window_bounds = array<i64: 32, 128>}, {transform_indices = @transform_5, window_bounds = array<i64: 32, 128>}]} {
    %c0 = arith.constant 0 : index
    %c0_0 = arith.constant 0 : index
    %0 = vector.load %arg1[%c0, %c0_0] : memref<32x64xbf16, #tpu.memory_space<vmem>>, vector<32x64xbf16>
    %c0_1 = arith.constant 0 : index
    %c0_2 = arith.constant 0 : index
    %1 = vector.load %arg2[%c0_1, %c0_2] : memref<64x128xbf16, #tpu.memory_space<vmem>>, vector<64x128xbf16>
    %cst = arith.constant dense<0.000000e+00> : vector<32x128xf32>
    %2 = tpu.matmul %0, %1, %cst {dimension_numbers = #tpu.dot_dimension_numbers<[1], [0], [0], [1], [0, 0, 1, 1], [], []>} : vector<32x64xbf16>, vector<64x128xbf16>, vector<32x128xf32> -> vector<32x128xf32>
    %3 = arith.truncf %2 : vector<32x128xf32> to vector<32x128xbf16>
    %c0_3 = arith.constant 0 : index
    %c0_4 = arith.constant 0 : index
    %4 = vector.load %arg5[%c0_3, %c0_4] : memref<32x128xbf16, #tpu.memory_space<vmem>>, vector<32x128xbf16>
    tpu.vector_store %arg5[%c0_3, %c0_4], %3 {strides = array<i32>} : memref<32x128xbf16, #tpu.memory_space<vmem>>, vector<32x128xbf16>,
    %c0_5 = arith.constant 0 : index
    %c0_6 = arith.constant 0 : index
    %5 = vector.load %arg3[%c0_5, %c0_6] : memref<64x128xbf16, #tpu.memory_space<vmem>>, vector<64x128xbf16>
    %cst_7 = arith.constant dense<0.000000e+00> : vector<32x128xf32>
    %6 = tpu.matmul %0, %5, %cst_7 {dimension_numbers = #tpu.dot_dimension_numbers<[1], [0], [0], [1], [0, 0, 1, 1], [], []>} : vector<32x64xbf16>, vector<64x128xbf16>, vector<32x128xf32> -> vector<32x128xf32>
    %c0_8 = arith.constant 0 : index
    %c0_9 = arith.constant 0 : index
    %7 = vector.load %arg4[%c0_8, %c0_9] : memref<1x128xf32, #tpu.memory_space<vmem>>, vector<1x128xf32>
    %8 = vector.broadcast %7 : vector<1x128xf32> to vector<32x128xf32>
    %9 = arith.addf %6, %8 : vector<32x128xf32>
    %c0_10 = arith.constant 0 : index
    %c0_11 = arith.constant 0 : index
    %10 = vector.load %arg6[%c0_10, %c0_11] : memref<32x128xf32, #tpu.memory_space<vmem>>, vector<32x128xf32>
    tpu.vector_store %arg6[%c0_10, %c0_11], %9 {strides = array<i32>} : memref<32x128xf32, #tpu.memory_space<vmem>>, vector<32x128xf32>,
    return
  }
  func.func @transform_0(%arg0: i32) -> (i32, i32) {
    %c0_i32 = arith.constant 0 : i32
    %c0_i32_0 = arith.constant 0 : i32
    return %arg0, %c0_i32 : i32, i32
  }
  func.func @transform_1(%arg0: i32) -> (i32, i32) {
    %c0_i32 = arith.constant 0 : i32
    %c0_i32_0 = arith.constant 0 : i32
    %c0_i32_1 = arith.constant 0 : i32
    return %c0_i32, %c0_i32_0 : i32, i32
  }
  func.func @transform_2(%arg0: i32) -> (i32, i32) {
    %c0_i32 = arith.constant 0 : i32
    %c0_i32_0 = arith.constant 0 : i32
    %c0_i32_1 = arith.constant 0 : i32
    return %c0_i32, %c0_i32_0 : i32, i32
  }
  func.func @transform_3(%arg0: i32) -> (i32, i32) {
    %c0_i32 = arith.constant 0 : i32
    %c0_i32_0 = arith.constant 0 : i32
    %c0_i32_1 = arith.constant 0 : i32
    return %c0_i32, %c0_i32_0 : i32, i32
  }
  func.func @transform_4(%arg0: i32) -> (i32, i32) {
    %c0_i32 = arith.constant 0 : i32
    %c0_i32_0 = arith.constant 0 : i32
    return %arg0, %c0_i32 : i32, i32
  }
  func.func @transform_5(%arg0: i32) -> (i32, i32) {
    %c0_i32 = arith.constant 0 : i32
    %c0_i32_0 = arith.constant 0 : i32
    return %arg0, %c0_i32 : i32, i32
  }
}

module attributes {stable_mosaic.version = 11 : i64} {
  func.func @_pdist_kernel(%arg0: i32, %arg1: i32, %arg2: memref<1x16x128xbf16, #tpu.memory_space<vmem>>, %arg3: memref<1x16x128xbf16, #tpu.memory_space<vmem>>, %arg4: memref<1x1x16xf32, #tpu.memory_space<vmem>>, %arg5: memref<1x16x16xbf16, #tpu.memory_space<vmem>>) attributes {dimension_semantics = [#tpu.dimension_semantics<parallel>, #tpu.dimension_semantics<parallel>], iteration_bounds = array<i64: 2, 1>, scalar_prefetch = 0 : i64, scratch_operands = 0 : i64, tpu.core_type = #tpu.core_type<tc>, window_params = [{transform_indices = @transform_0, window_bounds = array<i64: 1, 16, 128>}, {transform_indices = @transform_1, window_bounds = array<i64: 1, 16, 128>}, {transform_indices = @transform_2, window_bounds = array<i64: 1, 1, 16>}, {transform_indices = @transform_3, window_bounds = array<i64: 1, 16, 16>}]} {
    %c0 = arith.constant 0 : index
    %c0_0 = arith.constant 0 : index
    %c0_1 = arith.constant 0 : index
    %0 = vector.load %arg2[%c0, %c0_0, %c0_1] : memref<1x16x128xbf16, #tpu.memory_space<vmem>>, vector<1x16x128xbf16>
    %1 = vector.shape_cast %0 : vector<1x16x128xbf16> to vector<16x128xbf16>
    %c0_2 = arith.constant 0 : index
    %c0_3 = arith.constant 0 : index
    %c0_4 = arith.constant 0 : index
    %2 = vector.load %arg3[%c0_2, %c0_3, %c0_4] : memref<1x16x128xbf16, #tpu.memory_space<vmem>>, vector<1x16x128xbf16>
    %3 = vector.shape_cast %2 : vector<1x16x128xbf16> to vector<16x128xbf16>
    %cst = arith.constant dense<0.000000e+00> : vector<16x16xf32>
    %4 = tpu.matmul %1, %3, %cst {dimension_numbers = #tpu.dot_dimension_numbers<[1], [1], [0], [0], [0, 0, 1, 0], [], []>} : vector<16x128xbf16>, vector<16x128xbf16>, vector<16x16xf32> -> vector<16x16xf32>
    %c0_5 = arith.constant 0 : index
    %c0_6 = arith.constant 0 : index
    %c0_7 = arith.constant 0 : index
    %5 = vector.load %arg4[%c0_5, %c0_6, %c0_7] : memref<1x1x16xf32, #tpu.memory_space<vmem>>, vector<1x1x16xf32>
    %6 = vector.shape_cast %5 : vector<1x1x16xf32> to vector<1x16xf32>
    %7 = vector.broadcast %6 : vector<1x16xf32> to vector<16x16xf32>
    %8 = arith.subf %4, %7 : vector<16x16xf32>
    %9 = arith.truncf %8 : vector<16x16xf32> to vector<16x16xbf16>
    %c0_8 = arith.constant 0 : index
    %c0_9 = arith.constant 0 : index
    %c0_10 = arith.constant 0 : index
    %10 = vector.load %arg5[%c0_8, %c0_9, %c0_10] : memref<1x16x16xbf16, #tpu.memory_space<vmem>>, vector<1x16x16xbf16>
    %11 = vector.shape_cast %10 : vector<1x16x16xbf16> to vector<16x16xbf16>
    %12 = vector.shape_cast %9 : vector<16x16xbf16> to vector<1x16x16xbf16>
    tpu.vector_store %arg5[%c0_8, %c0_9, %c0_10], %12 {strides = array<i32>} : memref<1x16x16xbf16, #tpu.memory_space<vmem>>, vector<1x16x16xbf16>,
    return
  }
  func.func @transform_0(%arg0: i32, %arg1: i32) -> (i32, i32, i32) {
    %c0_i32 = arith.constant 0 : i32
    %c0_i32_0 = arith.constant 0 : i32
    return %arg0, %arg1, %c0_i32 : i32, i32, i32
  }
  func.func @transform_1(%arg0: i32, %arg1: i32) -> (i32, i32, i32) {
    %c0_i32 = arith.constant 0 : i32
    %c0_i32_0 = arith.constant 0 : i32
    %c0_i32_1 = arith.constant 0 : i32
    return %arg0, %c0_i32, %c0_i32_0 : i32, i32, i32
  }
  func.func @transform_2(%arg0: i32, %arg1: i32) -> (i32, i32, i32) {
    %c0_i32 = arith.constant 0 : i32
    %c0_i32_0 = arith.constant 0 : i32
    %c0_i32_1 = arith.constant 0 : i32
    return %arg0, %c0_i32, %c0_i32_0 : i32, i32, i32
  }
  func.func @transform_3(%arg0: i32, %arg1: i32) -> (i32, i32, i32) {
    %c0_i32 = arith.constant 0 : i32
    %c0_i32_0 = arith.constant 0 : i32
    return %arg0, %arg1, %c0_i32 : i32, i32, i32
  }
}

module attributes {stable_mosaic.version = 11 : i64} {
  func.func @_edge_pre_kernel(%arg0: i32, %arg1: memref<32x128xbf16, #tpu.memory_space<vmem>>, %arg2: memref<128x256xbf16, #tpu.memory_space<vmem>>, %arg3: memref<128x256xbf16, #tpu.memory_space<vmem>>, %arg4: memref<1x256xf32, #tpu.memory_space<vmem>>, %arg5: memref<32x256xbf16, #tpu.memory_space<vmem>>, %arg6: memref<32x256xf32, #tpu.memory_space<vmem>>) attributes {dimension_semantics = [#tpu.dimension_semantics<parallel>], iteration_bounds = array<i64: 1>, scalar_prefetch = 0 : i64, scratch_operands = 0 : i64, tpu.core_type = #tpu.core_type<tc>, window_params = [{transform_indices = @transform_0, window_bounds = array<i64: 32, 128>}, {pipeline_mode = #tpu.pipeline_mode<synchronous>, transform_indices = @transform_1, window_bounds = array<i64: 128, 256>}, {pipeline_mode = #tpu.pipeline_mode<synchronous>, transform_indices = @transform_2, window_bounds = array<i64: 128, 256>}, {pipeline_mode = #tpu.pipeline_mode<synchronous>, transform_indices = @transform_3, window_bounds = array<i64: 1, 256>}, {transform_indices = @transform_4, window_bounds = array<i64: 32, 256>}, {transform_indices = @transform_5, window_bounds = array<i64: 32, 256>}]} {
    %c0 = arith.constant 0 : index
    %c0_0 = arith.constant 0 : index
    %0 = vector.load %arg1[%c0, %c0_0] : memref<32x128xbf16, #tpu.memory_space<vmem>>, vector<32x128xbf16>
    %c0_1 = arith.constant 0 : index
    %c0_2 = arith.constant 0 : index
    %1 = vector.load %arg2[%c0_1, %c0_2] : memref<128x256xbf16, #tpu.memory_space<vmem>>, vector<128x256xbf16>
    %cst = arith.constant dense<0.000000e+00> : vector<32x256xf32>
    %2 = tpu.matmul %0, %1, %cst {dimension_numbers = #tpu.dot_dimension_numbers<[1], [0], [0], [1], [0, 0, 1, 1], [], []>} : vector<32x128xbf16>, vector<128x256xbf16>, vector<32x256xf32> -> vector<32x256xf32>
    %3 = arith.truncf %2 : vector<32x256xf32> to vector<32x256xbf16>
    %c0_3 = arith.constant 0 : index
    %c0_4 = arith.constant 0 : index
    %4 = vector.load %arg5[%c0_3, %c0_4] : memref<32x256xbf16, #tpu.memory_space<vmem>>, vector<32x256xbf16>
    tpu.vector_store %arg5[%c0_3, %c0_4], %3 {strides = array<i32>} : memref<32x256xbf16, #tpu.memory_space<vmem>>, vector<32x256xbf16>,
    %c0_5 = arith.constant 0 : index
    %c0_6 = arith.constant 0 : index
    %5 = vector.load %arg3[%c0_5, %c0_6] : memref<128x256xbf16, #tpu.memory_space<vmem>>, vector<128x256xbf16>
    %cst_7 = arith.constant dense<0.000000e+00> : vector<32x256xf32>
    %6 = tpu.matmul %0, %5, %cst_7 {dimension_numbers = #tpu.dot_dimension_numbers<[1], [0], [0], [1], [0, 0, 1, 1], [], []>} : vector<32x128xbf16>, vector<128x256xbf16>, vector<32x256xf32> -> vector<32x256xf32>
    %c0_8 = arith.constant 0 : index
    %c0_9 = arith.constant 0 : index
    %7 = vector.load %arg4[%c0_8, %c0_9] : memref<1x256xf32, #tpu.memory_space<vmem>>, vector<1x256xf32>
    %8 = vector.broadcast %7 : vector<1x256xf32> to vector<32x256xf32>
    %9 = arith.addf %6, %8 : vector<32x256xf32>
    %c0_10 = arith.constant 0 : index
    %c0_11 = arith.constant 0 : index
    %10 = vector.load %arg6[%c0_10, %c0_11] : memref<32x256xf32, #tpu.memory_space<vmem>>, vector<32x256xf32>
    tpu.vector_store %arg6[%c0_10, %c0_11], %9 {strides = array<i32>} : memref<32x256xf32, #tpu.memory_space<vmem>>, vector<32x256xf32>,
    return
  }
  func.func @transform_0(%arg0: i32) -> (i32, i32) {
    %c0_i32 = arith.constant 0 : i32
    %c0_i32_0 = arith.constant 0 : i32
    return %arg0, %c0_i32 : i32, i32
  }
  func.func @transform_1(%arg0: i32) -> (i32, i32) {
    %c0_i32 = arith.constant 0 : i32
    %c0_i32_0 = arith.constant 0 : i32
    %c0_i32_1 = arith.constant 0 : i32
    return %c0_i32, %c0_i32_0 : i32, i32
  }
  func.func @transform_2(%arg0: i32) -> (i32, i32) {
    %c0_i32 = arith.constant 0 : i32
    %c0_i32_0 = arith.constant 0 : i32
    %c0_i32_1 = arith.constant 0 : i32
    return %c0_i32, %c0_i32_0 : i32, i32
  }
  func.func @transform_3(%arg0: i32) -> (i32, i32) {
    %c0_i32 = arith.constant 0 : i32
    %c0_i32_0 = arith.constant 0 : i32
    %c0_i32_1 = arith.constant 0 : i32
    return %c0_i32, %c0_i32_0 : i32, i32
  }
  func.func @transform_4(%arg0: i32) -> (i32, i32) {
    %c0_i32 = arith.constant 0 : i32
    %c0_i32_0 = arith.constant 0 : i32
    return %arg0, %c0_i32 : i32, i32
  }
  func.func @transform_5(%arg0: i32) -> (i32, i32) {
    %c0_i32 = arith.constant 0 : i32
    %c0_i32_0 = arith.constant 0 : i32
    return %arg0, %c0_i32 : i32, i32
  }
}

module attributes {stable_mosaic.version = 11 : i64} {
  func.func @_conv5_pool_kernel(%arg0: i32, %arg1: i32, %arg2: memref<1x16x64xbf16, #tpu.memory_space<vmem>>, %arg3: memref<1x16x64xbf16, #tpu.memory_space<vmem>>, %arg4: memref<1x16x128xbf16, #tpu.memory_space<vmem>>, %arg5: memref<1x16x256xbf16, #tpu.memory_space<vmem>>, %arg6: memref<64x64xbf16, #tpu.memory_space<vmem>>, %arg7: memref<64x64xbf16, #tpu.memory_space<vmem>>, %arg8: memref<128x64xbf16, #tpu.memory_space<vmem>>, %arg9: memref<256x64xbf16, #tpu.memory_space<vmem>>, %arg10: memref<1x64xf32, #tpu.memory_space<vmem>>, %arg11: memref<1x1x64xf32, #tpu.memory_space<vmem>>, %arg12: memref<1x1x64xf32, #tpu.memory_space<vmem>>, %arg13: memref<8x64xf32, #tpu.memory_space<vmem>>, %arg14: memref<8x64xf32, #tpu.memory_space<vmem>>) attributes {dimension_semantics = [#tpu.dimension_semantics<parallel>, #tpu.dimension_semantics<arbitrary>], iteration_bounds = array<i64: 2, 1>, scalar_prefetch = 0 : i64, scratch_operands = 2 : i64, tpu.core_type = #tpu.core_type<tc>, window_params = [{transform_indices = @transform_0, window_bounds = array<i64: 1, 16, 64>}, {transform_indices = @transform_1, window_bounds = array<i64: 1, 16, 64>}, {transform_indices = @transform_2, window_bounds = array<i64: 1, 16, 128>}, {transform_indices = @transform_3, window_bounds = array<i64: 1, 16, 256>}, {pipeline_mode = #tpu.pipeline_mode<synchronous>, transform_indices = @transform_4, window_bounds = array<i64: 64, 64>}, {pipeline_mode = #tpu.pipeline_mode<synchronous>, transform_indices = @transform_5, window_bounds = array<i64: 64, 64>}, {pipeline_mode = #tpu.pipeline_mode<synchronous>, transform_indices = @transform_6, window_bounds = array<i64: 128, 64>}, {pipeline_mode = #tpu.pipeline_mode<synchronous>, transform_indices = @transform_7, window_bounds = array<i64: 256, 64>}, {pipeline_mode = #tpu.pipeline_mode<synchronous>, transform_indices = @transform_8, window_bounds = array<i64: 1, 64>}, {transform_indices = @transform_9, window_bounds = array<i64: 1, 1, 64>}, {transform_indices = @transform_10, window_bounds = array<i64: 1, 1, 64>}]} {
    %c0_i32 = arith.constant 0 : i32
    %0 = arith.cmpi eq, %arg1, %c0_i32 : i32
    %1 = arith.extui %0 : i1 to i32
    %c0_i32_0 = arith.constant 0 : i32
    %2 = arith.cmpi ne, %1, %c0_i32_0 : i32
    scf.if %2 {
      %cst_39 = arith.constant 0xFF800000 : f32
      %42 = vector.broadcast %cst_39 : f32 to vector<8x64xf32>
      %c0_40 = arith.constant 0 : index
      %c0_41 = arith.constant 0 : index
      %43 = vector.load %arg13[%c0_40, %c0_41] : memref<8x64xf32, #tpu.memory_space<vmem>>, vector<8x64xf32>
      tpu.vector_store %arg13[%c0_40, %c0_41], %42 {strides = array<i32>} : memref<8x64xf32, #tpu.memory_space<vmem>>, vector<8x64xf32>,
      %cst_42 = arith.constant 0.000000e+00 : f32
      %44 = vector.broadcast %cst_42 : f32 to vector<8x64xf32>
      %c0_43 = arith.constant 0 : index
      %c0_44 = arith.constant 0 : index
      %45 = vector.load %arg14[%c0_43, %c0_44] : memref<8x64xf32, #tpu.memory_space<vmem>>, vector<8x64xf32>
      tpu.vector_store %arg14[%c0_43, %c0_44], %44 {strides = array<i32>} : memref<8x64xf32, #tpu.memory_space<vmem>>, vector<8x64xf32>,
    } else {
    }
    %c0 = arith.constant 0 : index
    %c0_1 = arith.constant 0 : index
    %c0_2 = arith.constant 0 : index
    %3 = vector.load %arg2[%c0, %c0_1, %c0_2] : memref<1x16x64xbf16, #tpu.memory_space<vmem>>, vector<1x16x64xbf16>
    %4 = vector.shape_cast %3 : vector<1x16x64xbf16> to vector<16x64xbf16>
    %c0_3 = arith.constant 0 : index
    %c0_4 = arith.constant 0 : index
    %5 = vector.load %arg6[%c0_3, %c0_4] : memref<64x64xbf16, #tpu.memory_space<vmem>>, vector<64x64xbf16>
    %cst = arith.constant dense<0.000000e+00> : vector<16x64xf32>
    %6 = tpu.matmul %4, %5, %cst {dimension_numbers = #tpu.dot_dimension_numbers<[1], [0], [0], [1], [0, 0, 1, 1], [], []>} : vector<16x64xbf16>, vector<64x64xbf16>, vector<16x64xf32> -> vector<16x64xf32>
    %c0_5 = arith.constant 0 : index
    %c0_6 = arith.constant 0 : index
    %c0_7 = arith.constant 0 : index
    %7 = vector.load %arg3[%c0_5, %c0_6, %c0_7] : memref<1x16x64xbf16, #tpu.memory_space<vmem>>, vector<1x16x64xbf16>
    %8 = vector.shape_cast %7 : vector<1x16x64xbf16> to vector<16x64xbf16>
    %c0_8 = arith.constant 0 : index
    %c0_9 = arith.constant 0 : index
    %9 = vector.load %arg7[%c0_8, %c0_9] : memref<64x64xbf16, #tpu.memory_space<vmem>>, vector<64x64xbf16>
    %cst_10 = arith.constant dense<0.000000e+00> : vector<16x64xf32>
    %10 = tpu.matmul %8, %9, %cst_10 {dimension_numbers = #tpu.dot_dimension_numbers<[1], [0], [0], [1], [0, 0, 1, 1], [], []>} : vector<16x64xbf16>, vector<64x64xbf16>, vector<16x64xf32> -> vector<16x64xf32>
    %11 = arith.addf %6, %10 : vector<16x64xf32>
    %c0_11 = arith.constant 0 : index
    %c0_12 = arith.constant 0 : index
    %c0_13 = arith.constant 0 : index
    %12 = vector.load %arg4[%c0_11, %c0_12, %c0_13] : memref<1x16x128xbf16, #tpu.memory_space<vmem>>, vector<1x16x128xbf16>
    %13 = vector.shape_cast %12 : vector<1x16x128xbf16> to vector<16x128xbf16>
    %c0_14 = arith.constant 0 : index
    %c0_15 = arith.constant 0 : index
    %14 = vector.load %arg8[%c0_14, %c0_15] : memref<128x64xbf16, #tpu.memory_space<vmem>>, vector<128x64xbf16>
    %cst_16 = arith.constant dense<0.000000e+00> : vector<16x64xf32>
    %15 = tpu.matmul %13, %14, %cst_16 {dimension_numbers = #tpu.dot_dimension_numbers<[1], [0], [0], [1], [0, 0, 1, 1], [], []>} : vector<16x128xbf16>, vector<128x64xbf16>, vector<16x64xf32> -> vector<16x64xf32>
    %16 = arith.addf %11, %15 : vector<16x64xf32>
    %c0_17 = arith.constant 0 : index
    %c0_18 = arith.constant 0 : index
    %c0_19 = arith.constant 0 : index
    %17 = vector.load %arg5[%c0_17, %c0_18, %c0_19] : memref<1x16x256xbf16, #tpu.memory_space<vmem>>, vector<1x16x256xbf16>
    %18 = vector.shape_cast %17 : vector<1x16x256xbf16> to vector<16x256xbf16>
    %c0_20 = arith.constant 0 : index
    %c0_21 = arith.constant 0 : index
    %19 = vector.load %arg9[%c0_20, %c0_21] : memref<256x64xbf16, #tpu.memory_space<vmem>>, vector<256x64xbf16>
    %cst_22 = arith.constant dense<0.000000e+00> : vector<16x64xf32>
    %20 = tpu.matmul %18, %19, %cst_22 {dimension_numbers = #tpu.dot_dimension_numbers<[1], [0], [0], [1], [0, 0, 1, 1], [], []>} : vector<16x256xbf16>, vector<256x64xbf16>, vector<16x64xf32> -> vector<16x64xf32>
    %21 = arith.addf %16, %20 : vector<16x64xf32>
    %c0_23 = arith.constant 0 : index
    %c0_24 = arith.constant 0 : index
    %22 = vector.load %arg10[%c0_23, %c0_24] : memref<1x64xf32, #tpu.memory_space<vmem>>, vector<1x64xf32>
    %23 = vector.broadcast %22 : vector<1x64xf32> to vector<16x64xf32>
    %24 = arith.addf %21, %23 : vector<16x64xf32>
    %cst_25 = arith.constant 0.000000e+00 : f32
    %25 = vector.broadcast %cst_25 : f32 to vector<16x64xf32>
    %26 = arith.cmpf oge, %24, %25 : vector<16x64xf32>
    %cst_26 = arith.constant 2.000000e-01 : f32
    %27 = vector.broadcast %cst_26 : f32 to vector<16x64xf32>
    %28 = arith.mulf %27, %24 : vector<16x64xf32>
    %29 = arith.select %26, %24, %28 : vector<16x64xi1>, vector<16x64xf32>
    %30 = vector.shape_cast %29 : vector<16x64xf32> to vector<2x8x64xf32>
    %c0_27 = arith.constant 0 : index
    %c0_28 = arith.constant 0 : index
    %31 = vector.load %arg13[%c0_27, %c0_28] : memref<8x64xf32, #tpu.memory_space<vmem>>, vector<8x64xf32>
    %cst_29 = arith.constant dense<0xFF800000> : vector<8x64xf32>
    %32 = vector.multi_reduction <maximumf>, %30, %cst_29 [0] : vector<2x8x64xf32> to vector<8x64xf32>
    %33 = arith.maximumf %31, %32 : vector<8x64xf32>
    %c0_30 = arith.constant 0 : index
    %c0_31 = arith.constant 0 : index
    %34 = vector.load %arg13[%c0_30, %c0_31] : memref<8x64xf32, #tpu.memory_space<vmem>>, vector<8x64xf32>
    tpu.vector_store %arg13[%c0_30, %c0_31], %33 {strides = array<i32>} : memref<8x64xf32, #tpu.memory_space<vmem>>, vector<8x64xf32>,
    %c0_32 = arith.constant 0 : index
    %c0_33 = arith.constant 0 : index
    %35 = vector.load %arg14[%c0_32, %c0_33] : memref<8x64xf32, #tpu.memory_space<vmem>>, vector<8x64xf32>
    %cst_34 = arith.constant dense<0.000000e+00> : vector<8x64xf32>
    %36 = vector.multi_reduction <add>, %30, %cst_34 [0] : vector<2x8x64xf32> to vector<8x64xf32>
    %37 = arith.addf %35, %36 : vector<8x64xf32>
    %c0_35 = arith.constant 0 : index
    %c0_36 = arith.constant 0 : index
    %38 = vector.load %arg14[%c0_35, %c0_36] : memref<8x64xf32, #tpu.memory_space<vmem>>, vector<8x64xf32>
    tpu.vector_store %arg14[%c0_35, %c0_36], %37 {strides = array<i32>} : memref<8x64xf32, #tpu.memory_space<vmem>>, vector<8x64xf32>,
    %c0_i32_37 = arith.constant 0 : i32
    %39 = arith.cmpi eq, %arg1, %c0_i32_37 : i32
    %40 = arith.extui %39 : i1 to i32
    %c0_i32_38 = arith.constant 0 : i32
    %41 = arith.cmpi ne, %40, %c0_i32_38 : i32
    scf.if %41 {
      %c0_39 = arith.constant 0 : index
      %c0_40 = arith.constant 0 : index
      %42 = vector.load %arg13[%c0_39, %c0_40] : memref<8x64xf32, #tpu.memory_space<vmem>>, vector<8x64xf32>
      %cst_41 = arith.constant dense<0xFF800000> : vector<64xf32>
      %43 = vector.multi_reduction <maximumf>, %42, %cst_41 [0] : vector<8x64xf32> to vector<64xf32>
      %44 = vector.shape_cast %43 : vector<64xf32> to vector<1x64xf32>
      %c0_42 = arith.constant 0 : index
      %c0_43 = arith.constant 0 : index
      %c0_44 = arith.constant 0 : index
      %45 = vector.load %arg11[%c0_42, %c0_43, %c0_44] : memref<1x1x64xf32, #tpu.memory_space<vmem>>, vector<1x1x64xf32>
      %46 = vector.shape_cast %45 : vector<1x1x64xf32> to vector<1x64xf32>
      %47 = vector.shape_cast %44 : vector<1x64xf32> to vector<1x1x64xf32>
      tpu.vector_store %arg11[%c0_42, %c0_43, %c0_44], %47 {strides = array<i32>} : memref<1x1x64xf32, #tpu.memory_space<vmem>>, vector<1x1x64xf32>,
      %c0_45 = arith.constant 0 : index
      %c0_46 = arith.constant 0 : index
      %48 = vector.load %arg14[%c0_45, %c0_46] : memref<8x64xf32, #tpu.memory_space<vmem>>, vector<8x64xf32>
      %cst_47 = arith.constant dense<0.000000e+00> : vector<64xf32>
      %49 = vector.multi_reduction <add>, %48, %cst_47 [0] : vector<8x64xf32> to vector<64xf32>
      %50 = vector.shape_cast %49 : vector<64xf32> to vector<1x64xf32>
      %cst_48 = arith.constant 6.250000e-02 : f32
      %51 = vector.broadcast %cst_48 : f32 to vector<1x64xf32>
      %52 = arith.mulf %50, %51 : vector<1x64xf32>
      %c0_49 = arith.constant 0 : index
      %c0_50 = arith.constant 0 : index
      %c0_51 = arith.constant 0 : index
      %53 = vector.load %arg12[%c0_49, %c0_50, %c0_51] : memref<1x1x64xf32, #tpu.memory_space<vmem>>, vector<1x1x64xf32>
      %54 = vector.shape_cast %53 : vector<1x1x64xf32> to vector<1x64xf32>
      %55 = vector.shape_cast %52 : vector<1x64xf32> to vector<1x1x64xf32>
      tpu.vector_store %arg12[%c0_49, %c0_50, %c0_51], %55 {strides = array<i32>} : memref<1x1x64xf32, #tpu.memory_space<vmem>>, vector<1x1x64xf32>,
    } else {
    }
    return
  }
  func.func @transform_0(%arg0: i32, %arg1: i32) -> (i32, i32, i32) {
    %c0_i32 = arith.constant 0 : i32
    %c0_i32_0 = arith.constant 0 : i32
    return %arg0, %arg1, %c0_i32 : i32, i32, i32
  }
  func.func @transform_1(%arg0: i32, %arg1: i32) -> (i32, i32, i32) {
    %c0_i32 = arith.constant 0 : i32
    %c0_i32_0 = arith.constant 0 : i32
    return %arg0, %arg1, %c0_i32 : i32, i32, i32
  }
  func.func @transform_2(%arg0: i32, %arg1: i32) -> (i32, i32, i32) {
    %c0_i32 = arith.constant 0 : i32
    %c0_i32_0 = arith.constant 0 : i32
    return %arg0, %arg1, %c0_i32 : i32, i32, i32
  }
  func.func @transform_3(%arg0: i32, %arg1: i32) -> (i32, i32, i32) {
    %c0_i32 = arith.constant 0 : i32
    %c0_i32_0 = arith.constant 0 : i32
    return %arg0, %arg1, %c0_i32 : i32, i32, i32
  }
  func.func @transform_4(%arg0: i32, %arg1: i32) -> (i32, i32) {
    %c0_i32 = arith.constant 0 : i32
    %c0_i32_0 = arith.constant 0 : i32
    %c0_i32_1 = arith.constant 0 : i32
    return %c0_i32, %c0_i32_0 : i32, i32
  }
  func.func @transform_5(%arg0: i32, %arg1: i32) -> (i32, i32) {
    %c0_i32 = arith.constant 0 : i32
    %c0_i32_0 = arith.constant 0 : i32
    %c0_i32_1 = arith.constant 0 : i32
    return %c0_i32, %c0_i32_0 : i32, i32
  }
  func.func @transform_6(%arg0: i32, %arg1: i32) -> (i32, i32) {
    %c0_i32 = arith.constant 0 : i32
    %c0_i32_0 = arith.constant 0 : i32
    %c0_i32_1 = arith.constant 0 : i32
    return %c0_i32, %c0_i32_0 : i32, i32
  }
  func.func @transform_7(%arg0: i32, %arg1: i32) -> (i32, i32) {
    %c0_i32 = arith.constant 0 : i32
    %c0_i32_0 = arith.constant 0 : i32
    %c0_i32_1 = arith.constant 0 : i32
    return %c0_i32, %c0_i32_0 : i32, i32
  }
  func.func @transform_8(%arg0: i32, %arg1: i32) -> (i32, i32) {
    %c0_i32 = arith.constant 0 : i32
    %c0_i32_0 = arith.constant 0 : i32
    %c0_i32_1 = arith.constant 0 : i32
    return %c0_i32, %c0_i32_0 : i32, i32
  }
  func.func @transform_9(%arg0: i32, %arg1: i32) -> (i32, i32, i32) {
    %c0_i32 = arith.constant 0 : i32
    %c0_i32_0 = arith.constant 0 : i32
    %c0_i32_1 = arith.constant 0 : i32
    return %arg0, %c0_i32, %c0_i32_0 : i32, i32, i32
  }
  func.func @transform_10(%arg0: i32, %arg1: i32) -> (i32, i32, i32) {
    %c0_i32 = arith.constant 0 : i32
    %c0_i32_0 = arith.constant 0 : i32
    %c0_i32_1 = arith.constant 0 : i32
    return %arg0, %c0_i32, %c0_i32_0 : i32, i32, i32
  }
}

module attributes {stable_mosaic.version = 11 : i64} {
  func.func @_linear_kernel(%arg0: i32, %arg1: memref<2x128xf32, #tpu.memory_space<vmem>>, %arg2: memref<128x512xf32, #tpu.memory_space<vmem>>, %arg3: memref<1x512xf32, #tpu.memory_space<vmem>>, %arg4: memref<2x512xf32, #tpu.memory_space<vmem>>) attributes {dimension_semantics = [#tpu.dimension_semantics<parallel>], iteration_bounds = array<i64: 1>, scalar_prefetch = 0 : i64, scratch_operands = 0 : i64, tpu.core_type = #tpu.core_type<tc>, window_params = [{transform_indices = @transform_0, window_bounds = array<i64: 2, 128>}, {pipeline_mode = #tpu.pipeline_mode<synchronous>, transform_indices = @transform_1, window_bounds = array<i64: 128, 512>}, {pipeline_mode = #tpu.pipeline_mode<synchronous>, transform_indices = @transform_2, window_bounds = array<i64: 1, 512>}, {transform_indices = @transform_3, window_bounds = array<i64: 2, 512>}]} {
    %c0 = arith.constant 0 : index
    %c0_0 = arith.constant 0 : index
    %0 = vector.load %arg1[%c0, %c0_0] : memref<2x128xf32, #tpu.memory_space<vmem>>, vector<2x128xf32>
    %c0_1 = arith.constant 0 : index
    %c0_2 = arith.constant 0 : index
    %1 = vector.load %arg2[%c0_1, %c0_2] : memref<128x512xf32, #tpu.memory_space<vmem>>, vector<128x512xf32>
    %cst = arith.constant dense<0.000000e+00> : vector<2x512xf32>
    %2 = tpu.matmul %0, %1, %cst {dimension_numbers = #tpu.dot_dimension_numbers<[1], [0], [0], [1], [0, 0, 1, 1], [], []>} : vector<2x128xf32>, vector<128x512xf32>, vector<2x512xf32> -> vector<2x512xf32>
    %c0_3 = arith.constant 0 : index
    %c0_4 = arith.constant 0 : index
    %3 = vector.load %arg3[%c0_3, %c0_4] : memref<1x512xf32, #tpu.memory_space<vmem>>, vector<1x512xf32>
    %4 = vector.broadcast %3 : vector<1x512xf32> to vector<2x512xf32>
    %5 = arith.addf %2, %4 : vector<2x512xf32>
    %cst_5 = arith.constant 0.000000e+00 : f32
    %6 = vector.broadcast %cst_5 : f32 to vector<2x512xf32>
    %7 = arith.cmpf oge, %5, %6 : vector<2x512xf32>
    %cst_6 = arith.constant 2.000000e-01 : f32
    %8 = vector.broadcast %cst_6 : f32 to vector<2x512xf32>
    %9 = arith.mulf %8, %5 : vector<2x512xf32>
    %10 = arith.select %7, %5, %9 : vector<2x512xi1>, vector<2x512xf32>
    %c0_7 = arith.constant 0 : index
    %c0_8 = arith.constant 0 : index
    %11 = vector.load %arg4[%c0_7, %c0_8] : memref<2x512xf32, #tpu.memory_space<vmem>>, vector<2x512xf32>
    tpu.vector_store %arg4[%c0_7, %c0_8], %10 {strides = array<i32>} : memref<2x512xf32, #tpu.memory_space<vmem>>, vector<2x512xf32>,
    return
  }
  func.func @transform_0(%arg0: i32) -> (i32, i32) {
    %c0_i32 = arith.constant 0 : i32
    %c0_i32_0 = arith.constant 0 : i32
    return %arg0, %c0_i32 : i32, i32
  }
  func.func @transform_1(%arg0: i32) -> (i32, i32) {
    %c0_i32 = arith.constant 0 : i32
    %c0_i32_0 = arith.constant 0 : i32
    %c0_i32_1 = arith.constant 0 : i32
    return %c0_i32, %c0_i32_0 : i32, i32
  }
  func.func @transform_2(%arg0: i32) -> (i32, i32) {
    %c0_i32 = arith.constant 0 : i32
    %c0_i32_0 = arith.constant 0 : i32
    %c0_i32_1 = arith.constant 0 : i32
    return %c0_i32, %c0_i32_0 : i32, i32
  }
  func.func @transform_3(%arg0: i32) -> (i32, i32) {
    %c0_i32 = arith.constant 0 : i32
    %c0_i32_0 = arith.constant 0 : i32
    return %arg0, %c0_i32 : i32, i32
  }
}

module attributes {stable_mosaic.version = 11 : i64} {
  func.func @_linear_kernel(%arg0: i32, %arg1: memref<2x512xf32, #tpu.memory_space<vmem>>, %arg2: memref<512x256xf32, #tpu.memory_space<vmem>>, %arg3: memref<1x256xf32, #tpu.memory_space<vmem>>, %arg4: memref<2x256xf32, #tpu.memory_space<vmem>>) attributes {dimension_semantics = [#tpu.dimension_semantics<parallel>], iteration_bounds = array<i64: 1>, scalar_prefetch = 0 : i64, scratch_operands = 0 : i64, tpu.core_type = #tpu.core_type<tc>, window_params = [{transform_indices = @transform_0, window_bounds = array<i64: 2, 512>}, {pipeline_mode = #tpu.pipeline_mode<synchronous>, transform_indices = @transform_1, window_bounds = array<i64: 512, 256>}, {pipeline_mode = #tpu.pipeline_mode<synchronous>, transform_indices = @transform_2, window_bounds = array<i64: 1, 256>}, {transform_indices = @transform_3, window_bounds = array<i64: 2, 256>}]} {
    %c0 = arith.constant 0 : index
    %c0_0 = arith.constant 0 : index
    %0 = vector.load %arg1[%c0, %c0_0] : memref<2x512xf32, #tpu.memory_space<vmem>>, vector<2x512xf32>
    %c0_1 = arith.constant 0 : index
    %c0_2 = arith.constant 0 : index
    %1 = vector.load %arg2[%c0_1, %c0_2] : memref<512x256xf32, #tpu.memory_space<vmem>>, vector<512x256xf32>
    %cst = arith.constant dense<0.000000e+00> : vector<2x256xf32>
    %2 = tpu.matmul %0, %1, %cst {dimension_numbers = #tpu.dot_dimension_numbers<[1], [0], [0], [1], [0, 0, 1, 1], [], []>} : vector<2x512xf32>, vector<512x256xf32>, vector<2x256xf32> -> vector<2x256xf32>
    %c0_3 = arith.constant 0 : index
    %c0_4 = arith.constant 0 : index
    %3 = vector.load %arg3[%c0_3, %c0_4] : memref<1x256xf32, #tpu.memory_space<vmem>>, vector<1x256xf32>
    %4 = vector.broadcast %3 : vector<1x256xf32> to vector<2x256xf32>
    %5 = arith.addf %2, %4 : vector<2x256xf32>
    %cst_5 = arith.constant 0.000000e+00 : f32
    %6 = vector.broadcast %cst_5 : f32 to vector<2x256xf32>
    %7 = arith.cmpf oge, %5, %6 : vector<2x256xf32>
    %cst_6 = arith.constant 2.000000e-01 : f32
    %8 = vector.broadcast %cst_6 : f32 to vector<2x256xf32>
    %9 = arith.mulf %8, %5 : vector<2x256xf32>
    %10 = arith.select %7, %5, %9 : vector<2x256xi1>, vector<2x256xf32>
    %c0_7 = arith.constant 0 : index
    %c0_8 = arith.constant 0 : index
    %11 = vector.load %arg4[%c0_7, %c0_8] : memref<2x256xf32, #tpu.memory_space<vmem>>, vector<2x256xf32>
    tpu.vector_store %arg4[%c0_7, %c0_8], %10 {strides = array<i32>} : memref<2x256xf32, #tpu.memory_space<vmem>>, vector<2x256xf32>,
    return
  }
  func.func @transform_0(%arg0: i32) -> (i32, i32) {
    %c0_i32 = arith.constant 0 : i32
    %c0_i32_0 = arith.constant 0 : i32
    return %arg0, %c0_i32 : i32, i32
  }
  func.func @transform_1(%arg0: i32) -> (i32, i32) {
    %c0_i32 = arith.constant 0 : i32
    %c0_i32_0 = arith.constant 0 : i32
    %c0_i32_1 = arith.constant 0 : i32
    return %c0_i32, %c0_i32_0 : i32, i32
  }
  func.func @transform_2(%arg0: i32) -> (i32, i32) {
    %c0_i32 = arith.constant 0 : i32
    %c0_i32_0 = arith.constant 0 : i32
    %c0_i32_1 = arith.constant 0 : i32
    return %c0_i32, %c0_i32_0 : i32, i32
  }
  func.func @transform_3(%arg0: i32) -> (i32, i32) {
    %c0_i32 = arith.constant 0 : i32
    %c0_i32_0 = arith.constant 0 : i32
    return %arg0, %c0_i32 : i32, i32
  }
}

module attributes {stable_mosaic.version = 11 : i64} {
  func.func @_linear_kernel(%arg0: i32, %arg1: memref<2x256xf32, #tpu.memory_space<vmem>>, %arg2: memref<256x40xf32, #tpu.memory_space<vmem>>, %arg3: memref<1x40xf32, #tpu.memory_space<vmem>>, %arg4: memref<2x40xf32, #tpu.memory_space<vmem>>) attributes {dimension_semantics = [#tpu.dimension_semantics<parallel>], iteration_bounds = array<i64: 1>, scalar_prefetch = 0 : i64, scratch_operands = 0 : i64, tpu.core_type = #tpu.core_type<tc>, window_params = [{transform_indices = @transform_0, window_bounds = array<i64: 2, 256>}, {pipeline_mode = #tpu.pipeline_mode<synchronous>, transform_indices = @transform_1, window_bounds = array<i64: 256, 40>}, {pipeline_mode = #tpu.pipeline_mode<synchronous>, transform_indices = @transform_2, window_bounds = array<i64: 1, 40>}, {transform_indices = @transform_3, window_bounds = array<i64: 2, 40>}]} {
    %c0 = arith.constant 0 : index
    %c0_0 = arith.constant 0 : index
    %0 = vector.load %arg1[%c0, %c0_0] : memref<2x256xf32, #tpu.memory_space<vmem>>, vector<2x256xf32>
    %c0_1 = arith.constant 0 : index
    %c0_2 = arith.constant 0 : index
    %1 = vector.load %arg2[%c0_1, %c0_2] : memref<256x40xf32, #tpu.memory_space<vmem>>, vector<256x40xf32>
    %cst = arith.constant dense<0.000000e+00> : vector<2x40xf32>
    %2 = tpu.matmul %0, %1, %cst {dimension_numbers = #tpu.dot_dimension_numbers<[1], [0], [0], [1], [0, 0, 1, 1], [], []>} : vector<2x256xf32>, vector<256x40xf32>, vector<2x40xf32> -> vector<2x40xf32>
    %c0_3 = arith.constant 0 : index
    %c0_4 = arith.constant 0 : index
    %3 = vector.load %arg3[%c0_3, %c0_4] : memref<1x40xf32, #tpu.memory_space<vmem>>, vector<1x40xf32>
    %4 = vector.broadcast %3 : vector<1x40xf32> to vector<2x40xf32>
    %5 = arith.addf %2, %4 : vector<2x40xf32>
    %c0_5 = arith.constant 0 : index
    %c0_6 = arith.constant 0 : index
    %6 = vector.load %arg4[%c0_5, %c0_6] : memref<2x40xf32, #tpu.memory_space<vmem>>, vector<2x40xf32>
    tpu.vector_store %arg4[%c0_5, %c0_6], %5 {strides = array<i32>} : memref<2x40xf32, #tpu.memory_space<vmem>>, vector<2x40xf32>,
    return
  }
  func.func @transform_0(%arg0: i32) -> (i32, i32) {
    %c0_i32 = arith.constant 0 : i32
    %c0_i32_0 = arith.constant 0 : i32
    return %arg0, %c0_i32 : i32, i32
  }
  func.func @transform_1(%arg0: i32) -> (i32, i32) {
    %c0_i32 = arith.constant 0 : i32
    %c0_i32_0 = arith.constant 0 : i32
    %c0_i32_1 = arith.constant 0 : i32
    return %c0_i32, %c0_i32_0 : i32, i32
  }
  func.func @transform_2(%arg0: i32) -> (i32, i32) {
    %c0_i32 = arith.constant 0 : i32
    %c0_i32_0 = arith.constant 0 : i32
    %c0_i32_1 = arith.constant 0 : i32
    return %c0_i32, %c0_i32_0 : i32, i32
  }
  func.func @transform_3(%arg0: i32) -> (i32, i32) {
    %c0_i32 = arith.constant 0 : i32
    %c0_i32_0 = arith.constant 0 : i32
    return %arg0, %c0_i32 : i32, i32
  }
}

</mosaic_0001>

<llo_original>
// kernel: dgcnn_forward.13
$region0: #{dgcnn_forward.13}
  #allocation0 [shape = 'u32[]', space=smem, size = 0x4, offset = 0x4, fixed_abs, tag = 'smem constant byte address 0x4 - core index']
  #allocation1 [shape = 'u32[144,128]{1,0:T(1,128)}', space=vmem, size = 0x12000, scoped, tag = 'internal scratch']
  %s0 = inlined_call_operand.vmem [shape: bf16[32,3], index: 0, kind: input, shape index: {}]
  %s1 = inlined_call_operand.vmem [shape: bf16[3,64], index: 1, kind: input, shape index: {}]
  %s2 = inlined_call_operand.vmem [shape: bf16[3,64], index: 2, kind: input, shape index: {}]
  %s3 = inlined_call_operand.vmem [shape: f32[1,64], index: 3, kind: input, shape index: {}]
  %s4 = inlined_call_operand.vmem [shape: bf16[32,64], index: 4, kind: output, shape index: {0}]
  %s5 = inlined_call_operand.vmem [shape: f32[32,64], index: 5, kind: output, shape index: {1}]
  %6 = xla_tuple %s4, %s5
  %s7 = sld [smem:[#allocation0]]
  $region34: #{dgcnn_forward.13} parent=0
    _
  %s9 = ssub.s32 1, %s7
  %s10 = scalar_select 0, %s9, %s7
  // Predicated region
  $region2: #{dgcnn_forward.13} parent=0 // pred_check
    _
  $region3: #{dgcnn_forward.13} parent=0 // pred_check_branch
    %12 = sbr.rel (0) target = $region5
  $region4: #{dgcnn_forward.13} parent=0 // pred_region
    _
  $region5: #{dgcnn_forward.13} parent=0 // pred_fallthru
    _
  // Predicated region
  $region6: #{dgcnn_forward.13} parent=0 // pred_check
    _
  $region7: #{dgcnn_forward.13} parent=0 // pred_check_branch
    %14 = sbr.rel (0) target = $region9
  $region8: #{dgcnn_forward.13} parent=0 // pred_region
    _
  $region9: #{dgcnn_forward.13} parent=0 // pred_fallthru
    _
  // Predicated region
  $region10: #{dgcnn_forward.13} parent=0 // pred_check
    _
  $region11: #{dgcnn_forward.13} parent=0 // pred_check_branch
    %16 = sbr.rel (0) target = $region13
  $region12: #{dgcnn_forward.13} parent=0 // pred_region
    _
  $region13: #{dgcnn_forward.13} parent=0 // pred_fallthru
    _
  // Predicated region
  $region14: #{dgcnn_forward.13} parent=0 // pred_check
    _
  $region15: #{dgcnn_forward.13} parent=0 // pred_check_branch
    %18 = sbr.rel (0) target = $region17
  $region16: #{dgcnn_forward.13} parent=0 // pred_region
    _
  $region17: #{dgcnn_forward.13} parent=0 // pred_fallthru
    _
  %v20 = vld [vmem:[%s0] sm:$0xf]
  %v21 = vld [vmem:[%s0 + $0x4] sm:$0xf]
  %v22 = vld [vmem:[%s0 + $0x8] sm:$0xf]
  %v23 = vld [vmem:[%s0 + $0xc] sm:$0xf]
  %v24 = vld [vmem:[%s1] sm:$0x3]
  %v29 = vunpack.c.l.b16 %v20
  %v30 = vunpack.c.l.b16 %v21
  %v31 = vunpack.c.l.b16 %v22
  %v32 = vunpack.c.l.b16 %v23
  %v33 = vpack.c.b16 %v30, %v29
  %v34 = vpack.c.b16 %v32, %v31
  %vm35 = vcmask 23552
  %v37 = vsel %vm35, %v33, 0
  %v40 = vsel %vm35, %v34, 0
  %vm42 = vcmask 1040384
  %vm43 = vcmask 1041408
  %v44 = vsel %vm42, 4294967295, 65535
  %v45 = vsel %vm43, %v44, 0
  %v47 = vand.u32 %v24, %v45
  %49 = vmatprep.subr.bf16.mxu0 0
  %50 = vmatpush1.bf16.msra.mxu0 0
  %51 = vmatprep.subr.bf16.mxu0 0
  %52 = vmatpush1.bf16.msra.mxu0 0
  %53 = vmatprep.subr.bf16.mxu0 0
  %54 = vmatpush1.bf16.msra.mxu0 0
  %55 = vmatprep.subr.bf16.mxu0 0
  %56 = vmatpush1.bf16.msra.mxu0 0
  %57 = vmatprep.subr.bf16.mxu0 0
  %58 = vmatpush1.bf16.msra.mxu0 0
  %59 = vmatprep.subr.bf16.mxu0 0
  %60 = vmatpush1.bf16.msra.mxu0 0
  %61 = vmatprep.subr.bf16.mxu0 0
  %62 = vmatpush1.bf16.msra.mxu0 0
  %63 = vmatprep.subr.bf16.mxu0 0
  %64 = vmatpush1.bf16.msra.mxu0 %v47
  %65 = vmatprep.subr.bf16.mxu0 0
  %66 = vmatpush2.bf16.msra.mxu0 0
  %67 = vmatprep.subr.bf16.mxu0 0
  %68 = vmatpush2.bf16.msra.mxu0 0
  %69 = vmatprep.subr.bf16.mxu0 0
  %70 = vmatpush2.bf16.msra.mxu0 0
  %71 = vmatprep.subr.bf16.mxu0 0
  %72 = vmatpush2.bf16.msra.mxu0 0
  %73 = vmatprep.subr.bf16.mxu0 0
  %74 = vmatpush2.bf16.msra.mxu0 0
  %75 = vmatprep.subr.bf16.mxu0 0
  %76 = vmatpush2.bf16.msra.mxu0 0
  %77 = vmatprep.subr.bf16.mxu0 0
  %78 = vmatpush2.bf16.msra.mxu0 0
  %79 = vmatprep.subr.bf16.mxu0 0
  %80 = vmatpush2.bf16.msra.mxu0 0
  %81 = vmatprep.mubr.bf16.mxu0 0
  %82 = vmatmul.mubr.bf16.gmra.mxu0 %v37
  %v83 = vpop.f32.mrf.mxu0
  %v84 = vadd.f32 0.0, %v83
  %v85 = vpop.f32.mrf.mxu0
  %v86 = vpop.f32.mrf.mxu0
  %v87 = vadd.f32 0.0, %v86
  %v88 = vpop.f32.mrf.mxu0
  %89 = vmatprep.mubr.bf16.mxu0 0
  %90 = vmatmul.mubr.bf16.gmra.mxu0 %v40
  %v91 = vpop.f32.mrf.mxu0
  %v92 = vadd.f32 0.0, %v91
  %v93 = vpop.f32.mrf.mxu0
  %v94 = vpop.f32.mrf.mxu0
  %v95 = vadd.f32 0.0, %v94
  %v96 = vpop.f32.mrf.mxu0
  %97 = vdwg.mxu0
  %v98 = vpack.c.bf16 %v87, %v84
  %v99 = vpack.c.bf16 %v95, %v92
  %v102 = vunpack.c.l.b16 %v98
  %v103 = vunpack.c.h.b16 %v98
  %v104 = vunpack.c.l.b16 %v99
  %v105 = vunpack.c.h.b16 %v99
  %v106 = vpack.c.b16 %v102, %v102
  %v107 = vpack.c.b16 %v103, %v103
  %v108 = vpack.c.b16 %v104, %v104
  %v109 = vpack.c.b16 %v105, %v105
  %vm114 = vcmask 519168
  %115 = vst.msk [vmem:[%s4] sm:$0xf] %vm114, %v106
  %116 = vst.msk [vmem:[%s4 + $0x4] sm:$0xf] %vm114, %v107
  %117 = vst.msk [vmem:[%s4 + $0x8] sm:$0xf] %vm114, %v108
  %118 = vst.msk [vmem:[%s4 + $0xc] sm:$0xf] %vm114, %v109
  %v119 = vld [vmem:[%s2] sm:$0x3]
  %v120 = vld [vmem:[%s3] sm:$0x1]
  %v122 = vlaneseq
  %v123 = vshrl.u32 %v122, 7
  %v124 = vsub.s32 0, %v123
  %v125 = vrot.slane %v120, %v124
  %v128 = vand.u32 %v119, %v45
  %130 = vmatprep.subr.bf16.mxu0 0
  %131 = vmatpush1.bf16.msra.mxu0 0
  %132 = vmatprep.subr.bf16.mxu0 0
  %133 = vmatpush1.bf16.msra.mxu0 0
  %134 = vmatprep.subr.bf16.mxu0 0
  %135 = vmatpush1.bf16.msra.mxu0 0
  %136 = vmatprep.subr.bf16.mxu0 0
  %137 = vmatpush1.bf16.msra.mxu0 0
  %138 = vmatprep.subr.bf16.mxu0 0
  %139 = vmatpush1.bf16.msra.mxu0 0
  %140 = vmatprep.subr.bf16.mxu0 0
  %141 = vmatpush1.bf16.msra.mxu0 0
  %142 = vmatprep.subr.bf16.mxu0 0
  %143 = vmatpush1.bf16.msra.mxu0 0
  %144 = vmatprep.subr.bf16.mxu0 0
  %145 = vmatpush1.bf16.msra.mxu0 %v128
  %146 = vmatprep.subr.bf16.mxu0 0
  %147 = vmatpush2.bf16.msra.mxu0 0
  %148 = vmatprep.subr.bf16.mxu0 0
  %149 = vmatpush2.bf16.msra.mxu0 0
  %150 = vmatprep.subr.bf16.mxu0 0
  %151 = vmatpush2.bf16.msra.mxu0 0
  %152 = vmatprep.subr.bf16.mxu0 0
  %153 = vmatpush2.bf16.msra.mxu0 0
  %154 = vmatprep.subr.bf16.mxu0 0
  %155 = vmatpush2.bf16.msra.mxu0 0
  %156 = vmatprep.subr.bf16.mxu0 0
  %157 = vmatpush2.bf16.msra.mxu0 0
  %158 = vmatprep.subr.bf16.mxu0 0
  %159 = vmatpush2.bf16.msra.mxu0 0
  %160 = vmatprep.subr.bf16.mxu0 0
  %161 = vmatpush2.bf16.msra.mxu0 0
  %162 = vmatprep.mubr.bf16.mxu0 0
  %163 = vmatmul.mubr.bf16.gmra.mxu0 %v37
  %v164 = vpop.f32.mrf.mxu0
  %v165 = vadd.f32 %v125, %v164
  %v166 = vpop.f32.mrf.mxu0
  %v167 = vpop.f32.mrf.mxu0
  %v168 = vadd.f32 %v125, %v167
  %v169 = vpop.f32.mrf.mxu0
  %170 = vmatprep.mubr.bf16.mxu0 0
  %171 = vmatmul.mubr.bf16.gmra.mxu0 %v40
  %v172 = vpop.f32.mrf.mxu0
  %v173 = vadd.f32 %v125, %v172
  %v174 = vpop.f32.mrf.mxu0
  %v175 = vpop.f32.mrf.mxu0
  %v176 = vadd.f32 %v125, %v175
  %v177 = vpop.f32.mrf.mxu0
  %178 = vdwg.mxu0
  %vm179 = vcmask 523264
  %180 = vst.msk [vmem:[%s5] sm:$0xff] %vm179, %v165
  %181 = vst.msk [vmem:[%s5 + $0x8] sm:$0xff] %vm179, %v168
  %182 = vst.msk [vmem:[%s5 + $0x10] sm:$0xff] %vm179, %v173
  %183 = vst.msk [vmem:[%s5 + $0x18] sm:$0xff] %vm179, %v176
  // Predicated region
  $region18: #{dgcnn_forward.13} parent=0 // pred_check
    _
  $region19: #{dgcnn_forward.13} parent=0 // pred_check_branch
    %185 = sbr.rel (0) target = $region21
  $region20: #{dgcnn_forward.13} parent=0 // pred_region
    _
  $region21: #{dgcnn_forward.13} parent=0 // pred_fallthru
    _
  // Predicated region
  $region22: #{dgcnn_forward.13} parent=0 // pred_check
    _
  $region23: #{dgcnn_forward.13} parent=0 // pred_check_branch
    %187 = sbr.rel (0) target = $region25
  $region24: #{dgcnn_forward.13} parent=0 // pred_region
    _
  $region25: #{dgcnn_forward.13} parent=0 // pred_fallthru
    _
  // Predicated region
  $region26: #{dgcnn_forward.13} parent=0 // pred_check
    _
  $region27: #{dgcnn_forward.13} parent=0 // pred_check_branch
    %189 = sbr.rel (0) target = $region29
  $region28: #{dgcnn_forward.13} parent=0 // pred_region
    _
  $region29: #{dgcnn_forward.13} parent=0 // pred_fallthru
    _
  // Predicated region
  $region30: #{dgcnn_forward.13} parent=0 // pred_check
    _
  $region31: #{dgcnn_forward.13} parent=0 // pred_check_branch
    %191 = sbr.rel (0) target = $region33
  $region32: #{dgcnn_forward.13} parent=0 // pred_region
    _
  $region33: #{dgcnn_forward.13} parent=0 // pred_fallthru
    _

// kernel: dgcnn_forward.12
$region0: #{dgcnn_forward.12}
  #allocation0 [shape = 'u32[]', space=smem, size = 0x4, offset = 0x4, fixed_abs, tag = 'smem constant byte address 0x4 - core index']
  #allocation1 [shape = 'u32[144,128]{1,0:T(1,128)}', space=vmem, size = 0x12000, scoped, tag = 'internal scratch']
  %s0 = inlined_call_operand.vmem [shape: bf16[2,16,3], index: 0, kind: input, shape index: {}, may-alias: {0,1}]
  %s1 = inlined_call_operand.vmem [shape: bf16[2,16,3], index: 1, kind: input, shape index: {}, may-alias: {0,1}]
  %s2 = inlined_call_operand.vmem [shape: f32[2,1,16], index: 2, kind: input, shape index: {}]
  %s3 = inlined_call_operand.vmem [shape: bf16[2,16,16], index: 3, kind: output, shape index: {}]
  %s4 = sld [smem:[#allocation0]]
  $region45: #{dgcnn_forward.12} parent=0
    _
  %s6 = ssub.s32 1, %s4
  %s7 = scalar_select 0, %s6, %s4
  loop: start=0, step=1, limit=4
  $region2: #{dgcnn_forward.12} parent=0 // loop_pre_header
    _
  $region3: #{dgcnn_forward.12} parent=0 // loop_header
    %s9 = sphi 0, %s13
    %p10 = scmp.ge.s32.totalorder %s9, 4
    %s16 = sphi 0, %s28
    %s17 = sphi 0, %s24
    %s18 = sphi 0, %s16
    %s19 = sphi 0, %s17
    %s20 = sphi 0, %s18
    %s21 = sphi 0, %s19
    %s33 = sphi 0, %s35
    %s36 = sphi 0, %s33
    %s37 = sphi 0, %s36
    %s53 = sphi 0, %s37
    %s59 = sphi 0, %s61
    %s62 = sphi 0, %s59
    %s63 = sphi 0, %s62
    %s79 = sphi 0, %s63
    %s85 = sphi 0, %s87
    %s88 = sphi 0, %s85
    %s89 = sphi 0, %s88
    %s105 = sphi 0, %s89
    %s113 = sphi 0, %s115
    %s116 = sphi 0, %s113
    %s117 = sphi 0, %s116
    %s133 = sphi 0, %s117
  $region4: #{dgcnn_forward.12} parent=0 // loop_header_branch
    %12 = sbr.rel (%p10) target = $region8
  $region5: #{dgcnn_forward.12} parent=0 // loop_body
    %s14 = ssub.s32 %s9, 1
    %s15 = ssub.s32 %s9, 2
    %s22 = sadd.s32 1, %s17
    %p23 = scmp.ge.s32.totalorder %s22, 1
    %s24 = scalar_select %p23, 0, %s22
    %s25 = sadd.s32 1, %s16
    %s26 = scalar_select %p23, %s25, %s16
    %p27 = scmp.ge.s32.totalorder %s26, 2
    %s28 = scalar_select %p27, 0, %s26
    %s29 = ssub.s32 %s16, %s28
    %s30 = ssub.s32 %s17, %s24
    %s31 = sor.u32 %s29, %s30
    %p32 = scmp.eq.s32.totalorder %s31, 0
    %s34 = sadd.s32 %s33, 1
    %s35 = scalar_select %p32, %s33, %s34
    %p38 = pneg %p32
    %p39 = scmp.eq.s32.totalorder %s9, 1
    %p40 = por %p38, %p39
    %p41 = scmp.ne.s32.totalorder %s33, %s36
    %p42 = scmp.eq.s32.totalorder %s9, 0
    %p43 = por %p41, %p42
    %p44 = scmp.ne.s32.totalorder %s33, %s36
    %p45 = scmp.eq.s32.totalorder %s14, 1
    %p46 = por %p44, %p45
    %p47 = scmp.ne.s32.totalorder %s36, %s37
    %p48 = scmp.eq.s32.totalorder %s14, 0
    %p49 = por %p47, %p48
    %p50 = scmp.ne.s32.totalorder %s36, %s37
    %p51 = scmp.eq.s32.totalorder %s15, 1
    %p52 = por %p50, %p51
    %p54 = scmp.ne.s32.totalorder %s37, %s53
    %p55 = scmp.eq.s32.totalorder %s15, 0
    %p56 = por %p54, %p55
    %s57 = ssub.s32 %s16, %s28
    %p58 = scmp.eq.s32.totalorder %s57, 0
    %s60 = sadd.s32 %s59, 1
    %s61 = scalar_select %p58, %s59, %s60
    %p64 = pneg %p58
    %p65 = scmp.eq.s32.totalorder %s9, 1
    %p66 = por %p64, %p65
    %p67 = scmp.ne.s32.totalorder %s59, %s62
    %p68 = scmp.eq.s32.totalorder %s9, 0
    %p69 = por %p67, %p68
    %p70 = scmp.ne.s32.totalorder %s59, %s62
    %p71 = scmp.eq.s32.totalorder %s14, 1
    %p72 = por %p70, %p71
    %p73 = scmp.ne.s32.totalorder %s62, %s63
    %p74 = scmp.eq.s32.totalorder %s14, 0
    %p75 = por %p73, %p74
    %p76 = scmp.ne.s32.totalorder %s62, %s63
    %p77 = scmp.eq.s32.totalorder %s15, 1
    %p78 = por %p76, %p77
    %p80 = scmp.ne.s32.totalorder %s63, %s79
    %p81 = scmp.eq.s32.totalorder %s15, 0
    %p82 = por %p80, %p81
    %s83 = ssub.s32 %s16, %s28
    %p84 = scmp.eq.s32.totalorder %s83, 0
    %s86 = sadd.s32 %s85, 1
    %s87 = scalar_select %p84, %s85, %s86
    %p90 = pneg %p84
    %p91 = scmp.eq.s32.totalorder %s9, 1
    %p92 = por %p90, %p91
    %p93 = scmp.ne.s32.totalorder %s85, %s88
    %p94 = scmp.eq.s32.totalorder %s9, 0
    %p95 = por %p93, %p94
    %p96 = scmp.ne.s32.totalorder %s85, %s88
    %p97 = scmp.eq.s32.totalorder %s14, 1
    %p98 = por %p96, %p97
    %p99 = scmp.ne.s32.totalorder %s88, %s89
    %p100 = scmp.eq.s32.totalorder %s14, 0
    %p101 = por %p99, %p100
    %p102 = scmp.ne.s32.totalorder %s88, %s89
    %p103 = scmp.eq.s32.totalorder %s15, 1
    %p104 = por %p102, %p103
    %p106 = scmp.ne.s32.totalorder %s89, %s105
    %p107 = scmp.eq.s32.totalorder %s15, 0
    %p108 = por %p106, %p107
    %s109 = ssub.s32 %s16, %s28
    %s110 = ssub.s32 %s17, %s24
    %s111 = sor.u32 %s109, %s110
    %p112 = scmp.eq.s32.totalorder %s111, 0
    %s114 = sadd.s32 %s113, 1
    %s115 = scalar_select %p112, %s113, %s114
    %p118 = pneg %p112
    %p119 = scmp.eq.s32.totalorder %s9, 1
    %p120 = por %p118, %p119
    %p121 = scmp.ne.s32.totalorder %s113, %s116
    %p122 = scmp.eq.s32.totalorder %s9, 0
    %p123 = por %p121, %p122
    %p124 = scmp.ne.s32.totalorder %s113, %s116
    %p125 = scmp.eq.s32.totalorder %s14, 1
    %p126 = por %p124, %p125
    %p127 = scmp.ne.s32.totalorder %s116, %s117
    %p128 = scmp.eq.s32.totalorder %s14, 0
    %p129 = por %p127, %p128
    %p130 = scmp.ne.s32.totalorder %s116, %s117
    %p131 = scmp.eq.s32.totalorder %s15, 1
    %p132 = por %p130, %p131
    %p134 = scmp.ne.s32.totalorder %s117, %s133
    %p135 = scmp.eq.s32.totalorder %s15, 0
    %p136 = por %p134, %p135
    %p137 = scmp.le.s32.totalorder 1, %s9
    %p138 = scmp.lt.s32.totalorder %s9, 3
    %p139 = pnand %p137, %p138
    %p140 = pneg %p139
    // Predicated region
    $region9: #{dgcnn_forward.12} parent=5 // pred_check
      _
    $region10: #{dgcnn_forward.12} parent=5 // pred_check_branch
      %142 = sbr.rel (%p139) target = $region12
    $region11: #{dgcnn_forward.12} parent=5 // pred_region
      %s143 = ssub.s32 %s9, 1
    $region12: #{dgcnn_forward.12} parent=5 // pred_fallthru
      _
    %p144 = scmp.lt.s32.totalorder %s9, 2
    // Predicated region
    $region13: #{dgcnn_forward.12} parent=5 // pred_check
      %p145 = pneg %p144
    $region14: #{dgcnn_forward.12} parent=5 // pred_check_branch
      %147 = sbr.rel (%p145) target = $region16
    $region15: #{dgcnn_forward.12} parent=5 // pred_region
      // Predicated region
      $region17: #{dgcnn_forward.12} parent=15 // pred_check
        %p148 = pneg %p43
      $region18: #{dgcnn_forward.12} parent=15 // pred_check_branch
        %150 = sbr.rel (%p148) target = $region20
      $region19: #{dgcnn_forward.12} parent=15 // pred_region
        %s151 = smul.u32 2, %s17
        %p152 = scmp.lt.s32.totalorder %s16, 1
        %s153 = scalar_select %p152, %s16, 1
        %p154 = scmp.lt.s32.totalorder %s151, 1
        %s155 = scalar_select %p154, %s151, 1
        %s156 = smul.addr %s153, 2
        %s157 = sadd.s32 %s155, %s156
        %s158 = smul.addr %s157, 4
        %s159 = scalar_lea.vmem %s0, %s158
        %s160 = smul.u32 2, %s17
      $region20: #{dgcnn_forward.12} parent=15 // pred_fallthru
        _
      // Predicated region
      $region21: #{dgcnn_forward.12} parent=15 // pred_check
        %p161 = pneg %p69
      $region22: #{dgcnn_forward.12} parent=15 // pred_check_branch
        %163 = sbr.rel (%p161) target = $region24
      $region23: #{dgcnn_forward.12} parent=15 // pred_region
        %p164 = scmp.lt.s32.totalorder %s16, 1
        %s165 = scalar_select %p164, %s16, 1
        %s166 = smul.addr %s165, 2
        %s167 = smul.addr %s166, 4
        %s168 = scalar_lea.vmem %s1, %s167
      $region24: #{dgcnn_forward.12} parent=15 // pred_fallthru
        _
      // Predicated region
      $region25: #{dgcnn_forward.12} parent=15 // pred_check
        %p169 = pneg %p95
      $region26: #{dgcnn_forward.12} parent=15 // pred_check_branch
        %171 = sbr.rel (%p169) target = $region28
      $region27: #{dgcnn_forward.12} parent=15 // pred_region
        %p172 = scmp.lt.s32.totalorder %s16, 1
        %s173 = scalar_select %p172, %s16, 1
        %s174 = scalar_lea.vmem %s2, %s173
      $region28: #{dgcnn_forward.12} parent=15 // pred_fallthru
        _
    $region16: #{dgcnn_forward.12} parent=5 // pred_fallthru
      _
    %p175 = scmp.le.s32.totalorder 1, %s9
    %p176 = scmp.lt.s32.totalorder %s9, 3
    %p177 = pnand %p175, %p176
    %p178 = pneg %p177
    // Predicated region
    $region29: #{dgcnn_forward.12} parent=5 // pred_check
      _
    $region30: #{dgcnn_forward.12} parent=5 // pred_check_branch
      %180 = sbr.rel (%p177) target = $region32
    $region31: #{dgcnn_forward.12} parent=5 // pred_region
      %s181 = ssub.s32 %s9, 1
      %s182 = smul.u32 2, %s19
      %p183 = scmp.lt.s32.totalorder %s18, 1
      %s184 = scalar_select %p183, %s18, 1
      %p185 = scmp.lt.s32.totalorder %s182, 1
      %s186 = scalar_select %p185, %s182, 1
      %s187 = smul.addr %s184, 2
      %s188 = sadd.s32 %s186, %s187
      %s189 = smul.addr %s188, 4
      %s190 = scalar_lea.vmem %s0, %s189
      %p191 = pneg %p49
      %p192 = pneg %p46
      %p193 = scmp.lt.s32.totalorder %s18, 1
      %s194 = scalar_select %p193, %s18, 1
      %s195 = smul.addr %s194, 2
      %s196 = smul.addr %s195, 4
      %s197 = scalar_lea.vmem %s1, %s196
      %p198 = pneg %p75
      %p199 = pneg %p72
      %p200 = scmp.lt.s32.totalorder %s18, 1
      %s201 = scalar_select %p200, %s18, 1
      %s202 = scalar_lea.vmem %s2, %s201
      %p203 = pneg %p101
      %p204 = pneg %p98
      %p205 = pneg %p129
      %p206 = pneg %p126
      %s207 = smul.u32 2, %s19
      %p208 = scmp.lt.s32.totalorder %s18, 1
      %s209 = scalar_select %p208, %s18, 1
      %p210 = scmp.lt.s32.totalorder %s207, 1
      %s211 = scalar_select %p210, %s207, 1
      %s212 = smul.addr %s209, 2
      %s213 = sadd.s32 %s211, %s212
      %s214 = smul.addr %s213, 4
      %s215 = scalar_lea.vmem %s3, %s214
      %s216 = smul.u32 2, %s19
      %p217 = scmp.lt.s32.totalorder %s18, 1
      %s218 = scalar_select %p217, %s18, 1
      %p219 = scmp.lt.s32.totalorder %s216, 1
      %s220 = scalar_select %p219, %s216, 1
      %s221 = smul.addr %s218, 2
      %s222 = sadd.s32 %s220, %s221
      %s223 = smul.addr %s222, 4
      %s224 = scalar_lea.vmem %s0, %s223
      %s225 = smul.u32 2, %s19
      %p226 = scmp.lt.s32.totalorder %s18, 1
      %s227 = scalar_select %p226, %s18, 1
      %s228 = smul.addr %s227, 2
      %s229 = smul.addr %s228, 4
      %s230 = scalar_lea.vmem %s1, %s229
      %p231 = scmp.lt.s32.totalorder %s18, 1
      %s232 = scalar_select %p231, %s18, 1
      %s233 = scalar_lea.vmem %s2, %s232
      %s234 = smul.u32 2, %s19
      %p235 = scmp.lt.s32.totalorder %s18, 1
      %s236 = scalar_select %p235, %s18, 1
      %p237 = scmp.lt.s32.totalorder %s234, 1
      %s238 = scalar_select %p237, %s234, 1
      %s239 = smul.addr %s236, 2
      %s240 = sadd.s32 %s238, %s239
      %s241 = smul.addr %s240, 4
      %s242 = scalar_lea.vmem %s3, %s241
      %s243 = smul.u32 2, %s19
      %v245 = vld [vmem:[%s224] sm:$0xf]
      %v246 = vld [vmem:[%s224 + $0x4] sm:$0xf]
      %v247 = vld [vmem:[%s230] sm:$0xf]
      %v248 = vld [vmem:[%s230 + $0x4] sm:$0xf]
      %v251 = vunpack.c.l.b16 %v245
      %v252 = vunpack.c.l.b16 %v246
      %v253 = vpack.c.b16 %v252, %v251
      %v256 = vunpack.c.l.b16 %v247
      %v257 = vunpack.c.l.b16 %v248
      %v258 = vpack.c.b16 %v257, %v256
      %vm259 = vcmask 23552
      %v261 = vsel %vm259, %v253, 0
      %v264 = vsel %vm259, %v258, 0
      %266 = vmatprep.subr.bf16.mxu0 0
      %267 = vmatpush1.bf16.xpose.msra.mxu0 0
      %268 = vmatprep.subr.bf16.mxu0 0
      %269 = vmatpush1.bf16.xpose.msra.mxu0 0
      %270 = vmatprep.subr.bf16.mxu0 0
      %271 = vmatpush1.bf16.xpose.msra.mxu0 0
      %272 = vmatprep.subr.bf16.mxu0 0
      %273 = vmatpush1.bf16.xpose.msra.mxu0 0
      %274 = vmatprep.subr.bf16.mxu0 0
      %275 = vmatpush1.bf16.xpose.msra.mxu0 0
      %276 = vmatprep.subr.bf16.mxu0 0
      %277 = vmatpush1.bf16.xpose.msra.mxu0 0
      %278 = vmatprep.subr.bf16.mxu0 0
      %279 = vmatpush1.bf16.xpose.msra.mxu0 0
      %280 = vmatprep.subr.bf16.mxu0 0
      %281 = vmatpush1.bf16.xpose.msra.mxu0 %v264
      %282 = vmatprep.subr.bf16.mxu0 0
      %283 = vmatpush2.bf16.xpose.msra.mxu0 0
      %284 = vmatprep.subr.bf16.mxu0 0
      %285 = vmatpush2.bf16.xpose.msra.mxu0 0
      %286 = vmatprep.subr.bf16.mxu0 0
      %287 = vmatpush2.bf16.xpose.msra.mxu0 0
      %288 = vmatprep.subr.bf16.mxu0 0
      %289 = vmatpush2.bf16.xpose.msra.mxu0 0
      %290 = vmatprep.subr.bf16.mxu0 0
      %291 = vmatpush2.bf16.xpose.msra.mxu0 0
      %292 = vmatprep.subr.bf16.mxu0 0
      %293 = vmatpush2.bf16.xpose.msra.mxu0 0
      %294 = vmatprep.subr.bf16.mxu0 0
      %295 = vmatpush2.bf16.xpose.msra.mxu0 0
      %296 = vmatprep.subr.bf16.mxu0 0
      %297 = vmatpush2.bf16.xpose.msra.mxu0 0
      %298 = vmatprep.mubr.bf16.mxu0 0
      %299 = vmatmul.mubr.bf16.gmra.mxu0 %v261
      %v300 = vpop.f32.mrf.mxu0
      %v301 = vadd.f32 0.0, %v300
      %v302 = vpop.f32.mrf.mxu0
      %v303 = vpop.f32.mrf.mxu0
      %v304 = vadd.f32 0.0, %v303
      %v305 = vpop.f32.mrf.mxu0
      %306 = vdwg.mxu0
      %v307 = vld [vmem:[%s233] sm:$0x1]
      %v309 = vlaneseq
      %v310 = vshrl.u32 %v309, 7
      %v311 = vsub.s32 0, %v310
      %v312 = vrot.slane %v307, %v311
      %v314 = vsub.f32 %v301, %v312
      %v315 = vsub.f32 %v304, %v312
      %v316 = vpack.c.bf16 %v315, %v314
      %v318 = vunpack.c.l.b16 %v316
      %v319 = vunpack.c.h.b16 %v316
      %v320 = vpack.c.b16 %v318, %v318
      %v321 = vpack.c.b16 %v319, %v319
      %vm324 = vcmask 125952
      %325 = vst.msk [vmem:[%s242] sm:$0xf] %vm324, %v320
      %326 = vst.msk [vmem:[%s242 + $0x4] sm:$0xf] %vm324, %v321
      %s327 = smul.u32 2, %s19
      %p328 = scmp.lt.s32.totalorder %s18, 1
      %s329 = scalar_select %p328, %s18, 1
      %p330 = scmp.lt.s32.totalorder %s327, 1
      %s331 = scalar_select %p330, %s327, 1
      %s332 = smul.addr %s329, 2
      %s333 = sadd.s32 %s331, %s332
      %s334 = smul.addr %s333, 4
      %s335 = scalar_lea.vmem %s3, %s334
      // Predicated region
      $region33: #{dgcnn_forward.12} parent=31 // pred_check
        %p336 = pneg %p126
      $region34: #{dgcnn_forward.12} parent=31 // pred_check_branch
        %338 = sbr.rel (%p336) target = $region36
      $region35: #{dgcnn_forward.12} parent=31 // pred_region
        %s339 = smul.u32 2, %s19
      $region36: #{dgcnn_forward.12} parent=31 // pred_fallthru
        _
    $region32: #{dgcnn_forward.12} parent=5 // pred_fallthru
      _
    %p340 = scmp.le.s32.totalorder 2, %s9
    // Predicated region
    $region37: #{dgcnn_forward.12} parent=5 // pred_check
      %p341 = pneg %p340
    $region38: #{dgcnn_forward.12} parent=5 // pred_check_branch
      %343 = sbr.rel (%p341) target = $region40
    $region39: #{dgcnn_forward.12} parent=5 // pred_region
      %s344 = ssub.s32 %s9, 2
      // Predicated region
      $region41: #{dgcnn_forward.12} parent=39 // pred_check
        %p345 = pneg %p132
      $region42: #{dgcnn_forward.12} parent=39 // pred_check_branch
        %347 = sbr.rel (%p345) target = $region44
      $region43: #{dgcnn_forward.12} parent=39 // pred_region
        %s348 = smul.u32 2, %s21
        %p349 = scmp.lt.s32.totalorder %s20, 1
        %s350 = scalar_select %p349, %s20, 1
        %p351 = scmp.lt.s32.totalorder %s348, 1
        %s352 = scalar_select %p351, %s348, 1
        %s353 = smul.addr %s350, 2
        %s354 = sadd.s32 %s352, %s353
        %s355 = smul.addr %s354, 4
        %s356 = scalar_lea.vmem %s3, %s355
      $region44: #{dgcnn_forward.12} parent=39 // pred_fallthru
        _
    $region40: #{dgcnn_forward.12} parent=5 // pred_fallthru
      _
  $region6: #{dgcnn_forward.12} parent=0 // loop_footer
    %s13 = sadd.s32 1, %s9
  $region7: #{dgcnn_forward.12} parent=0 // loop_footer_branch
    %8 = sbr.rel target = $region3
  $region8: #{dgcnn_forward.12} parent=0 // loop_exit
    _

// kernel: dgcnn_forward.14
$region0: #{dgcnn_forward.14}
  #allocation0 [shape = 'u32[]', space=smem, size = 0x4, offset = 0x4, fixed_abs, tag = 'smem constant byte address 0x4 - core index']
  #allocation1 [shape = 'u32[144,128]{1,0:T(1,128)}', space=vmem, size = 0x12000, scoped, tag = 'internal scratch']
  %s0 = inlined_call_operand.vmem [shape: bf16[2,16,64], index: 0, kind: input, shape index: {}, may-alias: {0,1}]
  %s1 = inlined_call_operand.vmem [shape: bf16[2,16,64], index: 1, kind: input, shape index: {}, may-alias: {0,1}]
  %s2 = inlined_call_operand.vmem [shape: f32[2,1,16], index: 2, kind: input, shape index: {}]
  %s3 = inlined_call_operand.vmem [shape: bf16[2,16,16], index: 3, kind: output, shape index: {}]
  %s4 = sld [smem:[#allocation0]]
  $region45: #{dgcnn_forward.14} parent=0
    _
  %s6 = ssub.s32 1, %s4
  %s7 = scalar_select 0, %s6, %s4
  loop: start=0, step=1, limit=4
  $region2: #{dgcnn_forward.14} parent=0 // loop_pre_header
    _
  $region3: #{dgcnn_forward.14} parent=0 // loop_header
    %s9 = sphi 0, %s13
    %p10 = scmp.ge.s32.totalorder %s9, 4
    %s16 = sphi 0, %s28
    %s17 = sphi 0, %s24
    %s18 = sphi 0, %s16
    %s19 = sphi 0, %s17
    %s20 = sphi 0, %s18
    %s21 = sphi 0, %s19
    %s33 = sphi 0, %s35
    %s36 = sphi 0, %s33
    %s37 = sphi 0, %s36
    %s53 = sphi 0, %s37
    %s59 = sphi 0, %s61
    %s62 = sphi 0, %s59
    %s63 = sphi 0, %s62
    %s79 = sphi 0, %s63
    %s85 = sphi 0, %s87
    %s88 = sphi 0, %s85
    %s89 = sphi 0, %s88
    %s105 = sphi 0, %s89
    %s113 = sphi 0, %s115
    %s116 = sphi 0, %s113
    %s117 = sphi 0, %s116
    %s133 = sphi 0, %s117
  $region4: #{dgcnn_forward.14} parent=0 // loop_header_branch
    %12 = sbr.rel (%p10) target = $region8
  $region5: #{dgcnn_forward.14} parent=0 // loop_body
    %s14 = ssub.s32 %s9, 1
    %s15 = ssub.s32 %s9, 2
    %s22 = sadd.s32 1, %s17
    %p23 = scmp.ge.s32.totalorder %s22, 1
    %s24 = scalar_select %p23, 0, %s22
    %s25 = sadd.s32 1, %s16
    %s26 = scalar_select %p23, %s25, %s16
    %p27 = scmp.ge.s32.totalorder %s26, 2
    %s28 = scalar_select %p27, 0, %s26
    %s29 = ssub.s32 %s16, %s28
    %s30 = ssub.s32 %s17, %s24
    %s31 = sor.u32 %s29, %s30
    %p32 = scmp.eq.s32.totalorder %s31, 0
    %s34 = sadd.s32 %s33, 1
    %s35 = scalar_select %p32, %s33, %s34
    %p38 = pneg %p32
    %p39 = scmp.eq.s32.totalorder %s9, 1
    %p40 = por %p38, %p39
    %p41 = scmp.ne.s32.totalorder %s33, %s36
    %p42 = scmp.eq.s32.totalorder %s9, 0
    %p43 = por %p41, %p42
    %p44 = scmp.ne.s32.totalorder %s33, %s36
    %p45 = scmp.eq.s32.totalorder %s14, 1
    %p46 = por %p44, %p45
    %p47 = scmp.ne.s32.totalorder %s36, %s37
    %p48 = scmp.eq.s32.totalorder %s14, 0
    %p49 = por %p47, %p48
    %p50 = scmp.ne.s32.totalorder %s36, %s37
    %p51 = scmp.eq.s32.totalorder %s15, 1
    %p52 = por %p50, %p51
    %p54 = scmp.ne.s32.totalorder %s37, %s53
    %p55 = scmp.eq.s32.totalorder %s15, 0
    %p56 = por %p54, %p55
    %s57 = ssub.s32 %s16, %s28
    %p58 = scmp.eq.s32.totalorder %s57, 0
    %s60 = sadd.s32 %s59, 1
    %s61 = scalar_select %p58, %s59, %s60
    %p64 = pneg %p58
    %p65 = scmp.eq.s32.totalorder %s9, 1
    %p66 = por %p64, %p65
    %p67 = scmp.ne.s32.totalorder %s59, %s62
    %p68 = scmp.eq.s32.totalorder %s9, 0
    %p69 = por %p67, %p68
    %p70 = scmp.ne.s32.totalorder %s59, %s62
    %p71 = scmp.eq.s32.totalorder %s14, 1
    %p72 = por %p70, %p71
    %p73 = scmp.ne.s32.totalorder %s62, %s63
    %p74 = scmp.eq.s32.totalorder %s14, 0
    %p75 = por %p73, %p74
    %p76 = scmp.ne.s32.totalorder %s62, %s63
    %p77 = scmp.eq.s32.totalorder %s15, 1
    %p78 = por %p76, %p77
    %p80 = scmp.ne.s32.totalorder %s63, %s79
    %p81 = scmp.eq.s32.totalorder %s15, 0
    %p82 = por %p80, %p81
    %s83 = ssub.s32 %s16, %s28
    %p84 = scmp.eq.s32.totalorder %s83, 0
    %s86 = sadd.s32 %s85, 1
    %s87 = scalar_select %p84, %s85, %s86
    %p90 = pneg %p84
    %p91 = scmp.eq.s32.totalorder %s9, 1
    %p92 = por %p90, %p91
    %p93 = scmp.ne.s32.totalorder %s85, %s88
    %p94 = scmp.eq.s32.totalorder %s9, 0
    %p95 = por %p93, %p94
    %p96 = scmp.ne.s32.totalorder %s85, %s88
    %p97 = scmp.eq.s32.totalorder %s14, 1
    %p98 = por %p96, %p97
    %p99 = scmp.ne.s32.totalorder %s88, %s89
    %p100 = scmp.eq.s32.totalorder %s14, 0
    %p101 = por %p99, %p100
    %p102 = scmp.ne.s32.totalorder %s88, %s89
    %p103 = scmp.eq.s32.totalorder %s15, 1
    %p104 = por %p102, %p103
    %p106 = scmp.ne.s32.totalorder %s89, %s105
    %p107 = scmp.eq.s32.totalorder %s15, 0
    %p108 = por %p106, %p107
    %s109 = ssub.s32 %s16, %s28
    %s110 = ssub.s32 %s17, %s24
    %s111 = sor.u32 %s109, %s110
    %p112 = scmp.eq.s32.totalorder %s111, 0
    %s114 = sadd.s32 %s113, 1
    %s115 = scalar_select %p112, %s113, %s114
    %p118 = pneg %p112
    %p119 = scmp.eq.s32.totalorder %s9, 1
    %p120 = por %p118, %p119
    %p121 = scmp.ne.s32.totalorder %s113, %s116
    %p122 = scmp.eq.s32.totalorder %s9, 0
    %p123 = por %p121, %p122
    %p124 = scmp.ne.s32.totalorder %s113, %s116
    %p125 = scmp.eq.s32.totalorder %s14, 1
    %p126 = por %p124, %p125
    %p127 = scmp.ne.s32.totalorder %s116, %s117
    %p128 = scmp.eq.s32.totalorder %s14, 0
    %p129 = por %p127, %p128
    %p130 = scmp.ne.s32.totalorder %s116, %s117
    %p131 = scmp.eq.s32.totalorder %s15, 1
    %p132 = por %p130, %p131
    %p134 = scmp.ne.s32.totalorder %s117, %s133
    %p135 = scmp.eq.s32.totalorder %s15, 0
    %p136 = por %p134, %p135
    %p137 = scmp.le.s32.totalorder 1, %s9
    %p138 = scmp.lt.s32.totalorder %s9, 3
    %p139 = pnand %p137, %p138
    %p140 = pneg %p139
    // Predicated region
    $region9: #{dgcnn_forward.14} parent=5 // pred_check
      _
    $region10: #{dgcnn_forward.14} parent=5 // pred_check_branch
      %142 = sbr.rel (%p139) target = $region12
    $region11: #{dgcnn_forward.14} parent=5 // pred_region
      %s143 = ssub.s32 %s9, 1
    $region12: #{dgcnn_forward.14} parent=5 // pred_fallthru
      _
    %p144 = scmp.lt.s32.totalorder %s9, 2
    // Predicated region
    $region13: #{dgcnn_forward.14} parent=5 // pred_check
      %p145 = pneg %p144
    $region14: #{dgcnn_forward.14} parent=5 // pred_check_branch
      %147 = sbr.rel (%p145) target = $region16
    $region15: #{dgcnn_forward.14} parent=5 // pred_region
      // Predicated region
      $region17: #{dgcnn_forward.14} parent=15 // pred_check
        %p148 = pneg %p43
      $region18: #{dgcnn_forward.14} parent=15 // pred_check_branch
        %150 = sbr.rel (%p148) target = $region20
      $region19: #{dgcnn_forward.14} parent=15 // pred_region
        %s151 = smul.u32 2, %s17
        %p152 = scmp.lt.s32.totalorder %s16, 1
        %s153 = scalar_select %p152, %s16, 1
        %p154 = scmp.lt.s32.totalorder %s151, 1
        %s155 = scalar_select %p154, %s151, 1
        %s156 = smul.addr %s153, 2
        %s157 = sadd.s32 %s155, %s156
        %s158 = smul.addr %s157, 4
        %s159 = scalar_lea.vmem %s0, %s158
        %s160 = smul.u32 2, %s17
      $region20: #{dgcnn_forward.14} parent=15 // pred_fallthru
        _
      // Predicated region
      $region21: #{dgcnn_forward.14} parent=15 // pred_check
        %p161 = pneg %p69
      $region22: #{dgcnn_forward.14} parent=15 // pred_check_branch
        %163 = sbr.rel (%p161) target = $region24
      $region23: #{dgcnn_forward.14} parent=15 // pred_region
        %p164 = scmp.lt.s32.totalorder %s16, 1
        %s165 = scalar_select %p164, %s16, 1
        %s166 = smul.addr %s165, 2
        %s167 = smul.addr %s166, 4
        %s168 = scalar_lea.vmem %s1, %s167
      $region24: #{dgcnn_forward.14} parent=15 // pred_fallthru
        _
      // Predicated region
      $region25: #{dgcnn_forward.14} parent=15 // pred_check
        %p169 = pneg %p95
      $region26: #{dgcnn_forward.14} parent=15 // pred_check_branch
        %171 = sbr.rel (%p169) target = $region28
      $region27: #{dgcnn_forward.14} parent=15 // pred_region
        %p172 = scmp.lt.s32.totalorder %s16, 1
        %s173 = scalar_select %p172, %s16, 1
        %s174 = scalar_lea.vmem %s2, %s173
      $region28: #{dgcnn_forward.14} parent=15 // pred_fallthru
        _
    $region16: #{dgcnn_forward.14} parent=5 // pred_fallthru
      _
    %p175 = scmp.le.s32.totalorder 1, %s9
    %p176 = scmp.lt.s32.totalorder %s9, 3
    %p177 = pnand %p175, %p176
    %p178 = pneg %p177
    // Predicated region
    $region29: #{dgcnn_forward.14} parent=5 // pred_check
      _
    $region30: #{dgcnn_forward.14} parent=5 // pred_check_branch
      %180 = sbr.rel (%p177) target = $region32
    $region31: #{dgcnn_forward.14} parent=5 // pred_region
      %s181 = ssub.s32 %s9, 1
      %s182 = smul.u32 2, %s19
      %p183 = scmp.lt.s32.totalorder %s18, 1
      %s184 = scalar_select %p183, %s18, 1
      %p185 = scmp.lt.s32.totalorder %s182, 1
      %s186 = scalar_select %p185, %s182, 1
      %s187 = smul.addr %s184, 2
      %s188 = sadd.s32 %s186, %s187
      %s189 = smul.addr %s188, 4
      %s190 = scalar_lea.vmem %s0, %s189
      %p191 = pneg %p49
      %p192 = pneg %p46
      %p193 = scmp.lt.s32.totalorder %s18, 1
      %s194 = scalar_select %p193, %s18, 1
      %s195 = smul.addr %s194, 2
      %s196 = smul.addr %s195, 4
      %s197 = scalar_lea.vmem %s1, %s196
      %p198 = pneg %p75
      %p199 = pneg %p72
      %p200 = scmp.lt.s32.totalorder %s18, 1
      %s201 = scalar_select %p200, %s18, 1
      %s202 = scalar_lea.vmem %s2, %s201
      %p203 = pneg %p101
      %p204 = pneg %p98
      %p205 = pneg %p129
      %p206 = pneg %p126
      %s207 = smul.u32 2, %s19
      %p208 = scmp.lt.s32.totalorder %s18, 1
      %s209 = scalar_select %p208, %s18, 1
      %p210 = scmp.lt.s32.totalorder %s207, 1
      %s211 = scalar_select %p210, %s207, 1
      %s212 = smul.addr %s209, 2
      %s213 = sadd.s32 %s211, %s212
      %s214 = smul.addr %s213, 4
      %s215 = scalar_lea.vmem %s3, %s214
      %s216 = smul.u32 2, %s19
      %p217 = scmp.lt.s32.totalorder %s18, 1
      %s218 = scalar_select %p217, %s18, 1
      %p219 = scmp.lt.s32.totalorder %s216, 1
      %s220 = scalar_select %p219, %s216, 1
      %s221 = smul.addr %s218, 2
      %s222 = sadd.s32 %s220, %s221
      %s223 = smul.addr %s222, 4
      %s224 = scalar_lea.vmem %s0, %s223
      %s225 = smul.u32 2, %s19
      %p226 = scmp.lt.s32.totalorder %s18, 1
      %s227 = scalar_select %p226, %s18, 1
      %s228 = smul.addr %s227, 2
      %s229 = smul.addr %s228, 4
      %s230 = scalar_lea.vmem %s1, %s229
      %p231 = scmp.lt.s32.totalorder %s18, 1
      %s232 = scalar_select %p231, %s18, 1
      %s233 = scalar_lea.vmem %s2, %s232
      %s234 = smul.u32 2, %s19
      %p235 = scmp.lt.s32.totalorder %s18, 1
      %s236 = scalar_select %p235, %s18, 1
      %p237 = scmp.lt.s32.totalorder %s234, 1
      %s238 = scalar_select %p237, %s234, 1
      %s239 = smul.addr %s236, 2
      %s240 = sadd.s32 %s238, %s239
      %s241 = smul.addr %s240, 4
      %s242 = scalar_lea.vmem %s3, %s241
      %s243 = smul.u32 2, %s19
      %v245 = vld [vmem:[%s224] sm:$0xf]
      %v246 = vld [vmem:[%s224 + $0x4] sm:$0xf]
      %v247 = vld [vmem:[%s230] sm:$0xf]
      %v248 = vld [vmem:[%s230 + $0x4] sm:$0xf]
      %v251 = vunpack.c.l.b16 %v245
      %v252 = vunpack.c.l.b16 %v246
      %v253 = vpack.c.b16 %v252, %v251
      %v256 = vunpack.c.l.b16 %v247
      %v257 = vunpack.c.l.b16 %v248
      %v258 = vpack.c.b16 %v257, %v256
      %vm259 = vcmask 523264
      %v261 = vsel %vm259, %v253, 0
      %v264 = vsel %vm259, %v258, 0
      %266 = vmatprep.subr.bf16.mxu0 0
      %267 = vmatpush1.bf16.xpose.msra.mxu0 0
      %268 = vmatprep.subr.bf16.mxu0 0
      %269 = vmatpush1.bf16.xpose.msra.mxu0 0
      %270 = vmatprep.subr.bf16.mxu0 0
      %271 = vmatpush1.bf16.xpose.msra.mxu0 0
      %272 = vmatprep.subr.bf16.mxu0 0
      %273 = vmatpush1.bf16.xpose.msra.mxu0 0
      %274 = vmatprep.subr.bf16.mxu0 0
      %275 = vmatpush1.bf16.xpose.msra.mxu0 0
      %276 = vmatprep.subr.bf16.mxu0 0
      %277 = vmatpush1.bf16.xpose.msra.mxu0 0
      %278 = vmatprep.subr.bf16.mxu0 0
      %279 = vmatpush1.bf16.xpose.msra.mxu0 0
      %280 = vmatprep.subr.bf16.mxu0 0
      %281 = vmatpush1.bf16.xpose.msra.mxu0 %v264
      %282 = vmatprep.subr.bf16.mxu0 0
      %283 = vmatpush2.bf16.xpose.msra.mxu0 0
      %284 = vmatprep.subr.bf16.mxu0 0
      %285 = vmatpush2.bf16.xpose.msra.mxu0 0
      %286 = vmatprep.subr.bf16.mxu0 0
      %287 = vmatpush2.bf16.xpose.msra.mxu0 0
      %288 = vmatprep.subr.bf16.mxu0 0
      %289 = vmatpush2.bf16.xpose.msra.mxu0 0
      %290 = vmatprep.subr.bf16.mxu0 0
      %291 = vmatpush2.bf16.xpose.msra.mxu0 0
      %292 = vmatprep.subr.bf16.mxu0 0
      %293 = vmatpush2.bf16.xpose.msra.mxu0 0
      %294 = vmatprep.subr.bf16.mxu0 0
      %295 = vmatpush2.bf16.xpose.msra.mxu0 0
      %296 = vmatprep.subr.bf16.mxu0 0
      %297 = vmatpush2.bf16.xpose.msra.mxu0 0
      %298 = vmatprep.mubr.bf16.mxu0 0
      %299 = vmatmul.mubr.bf16.gmra.mxu0 %v261
      %v300 = vpop.f32.mrf.mxu0
      %v301 = vadd.f32 0.0, %v300
      %v302 = vpop.f32.mrf.mxu0
      %v303 = vpop.f32.mrf.mxu0
      %v304 = vadd.f32 0.0, %v303
      %v305 = vpop.f32.mrf.mxu0
      %306 = vdwg.mxu0
      %v307 = vld [vmem:[%s233] sm:$0x1]
      %v309 = vlaneseq
      %v310 = vshrl.u32 %v309, 7
      %v311 = vsub.s32 0, %v310
      %v312 = vrot.slane %v307, %v311
      %v314 = vsub.f32 %v301, %v312
      %v315 = vsub.f32 %v304, %v312
      %v316 = vpack.c.bf16 %v315, %v314
      %v318 = vunpack.c.l.b16 %v316
      %v319 = vunpack.c.h.b16 %v316
      %v320 = vpack.c.b16 %v318, %v318
      %v321 = vpack.c.b16 %v319, %v319
      %vm324 = vcmask 125952
      %325 = vst.msk [vmem:[%s242] sm:$0xf] %vm324, %v320
      %326 = vst.msk [vmem:[%s242 + $0x4] sm:$0xf] %vm324, %v321
      %s327 = smul.u32 2, %s19
      %p328 = scmp.lt.s32.totalorder %s18, 1
      %s329 = scalar_select %p328, %s18, 1
      %p330 = scmp.lt.s32.totalorder %s327, 1
      %s331 = scalar_select %p330, %s327, 1
      %s332 = smul.addr %s329, 2
      %s333 = sadd.s32 %s331, %s332
      %s334 = smul.addr %s333, 4
      %s335 = scalar_lea.vmem %s3, %s334
      // Predicated region
      $region33: #{dgcnn_forward.14} parent=31 // pred_check
        %p336 = pneg %p126
      $region34: #{dgcnn_forward.14} parent=31 // pred_check_branch
        %338 = sbr.rel (%p336) target = $region36
      $region35: #{dgcnn_forward.14} parent=31 // pred_region
        %s339 = smul.u32 2, %s19
      $region36: #{dgcnn_forward.14} parent=31 // pred_fallthru
        _
    $region32: #{dgcnn_forward.14} parent=5 // pred_fallthru
      _
    %p340 = scmp.le.s32.totalorder 2, %s9
    // Predicated region
    $region37: #{dgcnn_forward.14} parent=5 // pred_check
      %p341 = pneg %p340
    $region38: #{dgcnn_forward.14} parent=5 // pred_check_branch
      %343 = sbr.rel (%p341) target = $region40
    $region39: #{dgcnn_forward.14} parent=5 // pred_region
      %s344 = ssub.s32 %s9, 2
      // Predicated region
      $region41: #{dgcnn_forward.14} parent=39 // pred_check
        %p345 = pneg %p132
      $region42: #{dgcnn_forward.14} parent=39 // pred_check_branch
        %347 = sbr.rel (%p345) target = $region44
      $region43: #{dgcnn_forward.14} parent=39 // pred_region
        %s348 = smul.u32 2, %s21
        %p349 = scmp.lt.s32.totalorder %s20, 1
        %s350 = scalar_select %p349, %s20, 1
        %p351 = scmp.lt.s32.totalorder %s348, 1
        %s352 = scalar_select %p351, %s348, 1
        %s353 = smul.addr %s350, 2
        %s354 = sadd.s32 %s352, %s353
        %s355 = smul.addr %s354, 4
        %s356 = scalar_lea.vmem %s3, %s355
      $region44: #{dgcnn_forward.14} parent=39 // pred_fallthru
        _
    $region40: #{dgcnn_forward.14} parent=5 // pred_fallthru
      _
  $region6: #{dgcnn_forward.14} parent=0 // loop_footer
    %s13 = sadd.s32 1, %s9
  $region7: #{dgcnn_forward.14} parent=0 // loop_footer_branch
    %8 = sbr.rel target = $region3
  $region8: #{dgcnn_forward.14} parent=0 // loop_exit
    _

// kernel: dgcnn_forward.15
$region0: #{dgcnn_forward.15}
  #allocation0 [shape = 'u32[]', space=smem, size = 0x4, offset = 0x4, fixed_abs, tag = 'smem constant byte address 0x4 - core index']
  #allocation1 [shape = 'u32[144,128]{1,0:T(1,128)}', space=vmem, size = 0x12000, scoped, tag = 'internal scratch']
  %s0 = inlined_call_operand.vmem [shape: bf16[32,64], index: 0, kind: input, shape index: {}]
  %s1 = inlined_call_operand.vmem [shape: bf16[64,64], index: 1, kind: input, shape index: {}]
  %s2 = inlined_call_operand.vmem [shape: bf16[64,64], index: 2, kind: input, shape index: {}]
  %s3 = inlined_call_operand.vmem [shape: f32[1,64], index: 3, kind: input, shape index: {}]
  %s4 = inlined_call_operand.vmem [shape: bf16[32,64], index: 4, kind: output, shape index: {0}]
  %s5 = inlined_call_operand.vmem [shape: f32[32,64], index: 5, kind: output, shape index: {1}]
  %6 = xla_tuple %s4, %s5
  %s7 = sld [smem:[#allocation0]]
  $region34: #{dgcnn_forward.15} parent=0
    _
  %s9 = ssub.s32 1, %s7
  %s10 = scalar_select 0, %s9, %s7
  // Predicated region
  $region2: #{dgcnn_forward.15} parent=0 // pred_check
    _
  $region3: #{dgcnn_forward.15} parent=0 // pred_check_branch
    %12 = sbr.rel (0) target = $region5
  $region4: #{dgcnn_forward.15} parent=0 // pred_region
    _
  $region5: #{dgcnn_forward.15} parent=0 // pred_fallthru
    _
  // Predicated region
  $region6: #{dgcnn_forward.15} parent=0 // pred_check
    _
  $region7: #{dgcnn_forward.15} parent=0 // pred_check_branch
    %14 = sbr.rel (0) target = $region9
  $region8: #{dgcnn_forward.15} parent=0 // pred_region
    _
  $region9: #{dgcnn_forward.15} parent=0 // pred_fallthru
    _
  // Predicated region
  $region10: #{dgcnn_forward.15} parent=0 // pred_check
    _
  $region11: #{dgcnn_forward.15} parent=0 // pred_check_branch
    %16 = sbr.rel (0) target = $region13
  $region12: #{dgcnn_forward.15} parent=0 // pred_region
    _
  $region13: #{dgcnn_forward.15} parent=0 // pred_fallthru
    _
  // Predicated region
  $region14: #{dgcnn_forward.15} parent=0 // pred_check
    _
  $region15: #{dgcnn_forward.15} parent=0 // pred_check_branch
    %18 = sbr.rel (0) target = $region17
  $region16: #{dgcnn_forward.15} parent=0 // pred_region
    _
  $region17: #{dgcnn_forward.15} parent=0 // pred_fallthru
    _
  %v20 = vld [vmem:[%s0] sm:$0xf]
  %v21 = vld [vmem:[%s0 + $0x4] sm:$0xf]
  %v22 = vld [vmem:[%s0 + $0x8] sm:$0xf]
  %v23 = vld [vmem:[%s0 + $0xc] sm:$0xf]
  %v24 = vld [vmem:[%s1] sm:$0xf]
  %v25 = vld [vmem:[%s1 + $0x4] sm:$0xf]
  %v26 = vld [vmem:[%s1 + $0x8] sm:$0xf]
  %v27 = vld [vmem:[%s1 + $0xc] sm:$0xf]
  %v28 = vld [vmem:[%s1 + $0x10] sm:$0xf]
  %v29 = vld [vmem:[%s1 + $0x14] sm:$0xf]
  %v30 = vld [vmem:[%s1 + $0x18] sm:$0xf]
  %v31 = vld [vmem:[%s1 + $0x1c] sm:$0xf]
  %v36 = vunpack.c.l.b16 %v20
  %v37 = vunpack.c.l.b16 %v21
  %v38 = vunpack.c.l.b16 %v22
  %v39 = vunpack.c.l.b16 %v23
  %v40 = vpack.c.b16 %v37, %v36
  %v41 = vpack.c.b16 %v39, %v38
  %v50 = vunpack.c.l.b16 %v24
  %v51 = vunpack.c.l.b16 %v25
  %v52 = vunpack.c.l.b16 %v26
  %v53 = vunpack.c.l.b16 %v27
  %v54 = vunpack.c.l.b16 %v28
  %v55 = vunpack.c.l.b16 %v29
  %v56 = vunpack.c.l.b16 %v30
  %v57 = vunpack.c.l.b16 %v31
  %v58 = vpack.c.b16 %v51, %v50
  %v59 = vpack.c.b16 %v53, %v52
  %v60 = vpack.c.b16 %v55, %v54
  %v61 = vpack.c.b16 %v57, %v56
  %vm66 = vcmask 523264
  %v68 = vsel %vm66, %v40, 0
  %v71 = vsel %vm66, %v41, 0
  %73 = vmatprep.subr.bf16.mxu0 0
  %74 = vmatpush1.bf16.msra.mxu0 0
  %75 = vmatprep.subr.bf16.mxu0 0
  %76 = vmatpush1.bf16.msra.mxu0 0
  %77 = vmatprep.subr.bf16.mxu0 0
  %78 = vmatpush1.bf16.msra.mxu0 0
  %79 = vmatprep.subr.bf16.mxu0 0
  %80 = vmatpush1.bf16.msra.mxu0 0
  %81 = vmatprep.subr.bf16.mxu0 0
  %82 = vmatpush1.bf16.msra.mxu0 %v61
  %83 = vmatprep.subr.bf16.mxu0 0
  %84 = vmatpush1.bf16.msra.mxu0 %v60
  %85 = vmatprep.subr.bf16.mxu0 0
  %86 = vmatpush1.bf16.msra.mxu0 %v59
  %87 = vmatprep.subr.bf16.mxu0 0
  %88 = vmatpush1.bf16.msra.mxu0 %v58
  %89 = vmatprep.subr.bf16.mxu0 0
  %90 = vmatpush2.bf16.msra.mxu0 0
  %91 = vmatprep.subr.bf16.mxu0 0
  %92 = vmatpush2.bf16.msra.mxu0 0
  %93 = vmatprep.subr.bf16.mxu0 0
  %94 = vmatpush2.bf16.msra.mxu0 0
  %95 = vmatprep.subr.bf16.mxu0 0
  %96 = vmatpush2.bf16.msra.mxu0 0
  %97 = vmatprep.subr.bf16.mxu0 0
  %98 = vmatpush2.bf16.msra.mxu0 0
  %99 = vmatprep.subr.bf16.mxu0 0
  %100 = vmatpush2.bf16.msra.mxu0 0
  %101 = vmatprep.subr.bf16.mxu0 0
  %102 = vmatpush2.bf16.msra.mxu0 0
  %103 = vmatprep.subr.bf16.mxu0 0
  %104 = vmatpush2.bf16.msra.mxu0 0
  %105 = vmatprep.mubr.bf16.mxu0 0
  %106 = vmatmul.mubr.bf16.gmra.mxu0 %v68
  %v107 = vpop.f32.mrf.mxu0
  %v108 = vadd.f32 0.0, %v107
  %v109 = vpop.f32.mrf.mxu0
  %v110 = vpop.f32.mrf.mxu0
  %v111 = vadd.f32 0.0, %v110
  %v112 = vpop.f32.mrf.mxu0
  %113 = vmatprep.mubr.bf16.mxu0 0
  %114 = vmatmul.mubr.bf16.gmra.mxu0 %v71
  %v115 = vpop.f32.mrf.mxu0
  %v116 = vadd.f32 0.0, %v115
  %v117 = vpop.f32.mrf.mxu0
  %v118 = vpop.f32.mrf.mxu0
  %v119 = vadd.f32 0.0, %v118
  %v120 = vpop.f32.mrf.mxu0
  %121 = vdwg.mxu0
  %v122 = vpack.c.bf16 %v111, %v108
  %v123 = vpack.c.bf16 %v119, %v116
  %v126 = vunpack.c.l.b16 %v122
  %v127 = vunpack.c.h.b16 %v122
  %v128 = vunpack.c.l.b16 %v123
  %v129 = vunpack.c.h.b16 %v123
  %v130 = vpack.c.b16 %v126, %v126
  %v131 = vpack.c.b16 %v127, %v127
  %v132 = vpack.c.b16 %v128, %v128
  %v133 = vpack.c.b16 %v129, %v129
  %vm138 = vcmask 519168
  %139 = vst.msk [vmem:[%s4] sm:$0xf] %vm138, %v130
  %140 = vst.msk [vmem:[%s4 + $0x4] sm:$0xf] %vm138, %v131
  %141 = vst.msk [vmem:[%s4 + $0x8] sm:$0xf] %vm138, %v132
  %142 = vst.msk [vmem:[%s4 + $0xc] sm:$0xf] %vm138, %v133
  %v143 = vld [vmem:[%s2] sm:$0xf]
  %v144 = vld [vmem:[%s2 + $0x4] sm:$0xf]
  %v145 = vld [vmem:[%s2 + $0x8] sm:$0xf]
  %v146 = vld [vmem:[%s2 + $0xc] sm:$0xf]
  %v147 = vld [vmem:[%s2 + $0x10] sm:$0xf]
  %v148 = vld [vmem:[%s2 + $0x14] sm:$0xf]
  %v149 = vld [vmem:[%s2 + $0x18] sm:$0xf]
  %v150 = vld [vmem:[%s2 + $0x1c] sm:$0xf]
  %v151 = vld [vmem:[%s3] sm:$0x1]
  %v153 = vlaneseq
  %v154 = vshrl.u32 %v153, 7
  %v155 = vsub.s32 0, %v154
  %v156 = vrot.slane %v151, %v155
  %v166 = vunpack.c.l.b16 %v143
  %v167 = vunpack.c.l.b16 %v144
  %v168 = vunpack.c.l.b16 %v145
  %v169 = vunpack.c.l.b16 %v146
  %v170 = vunpack.c.l.b16 %v147
  %v171 = vunpack.c.l.b16 %v148
  %v172 = vunpack.c.l.b16 %v149
  %v173 = vunpack.c.l.b16 %v150
  %v174 = vpack.c.b16 %v167, %v166
  %v175 = vpack.c.b16 %v169, %v168
  %v176 = vpack.c.b16 %v171, %v170
  %v177 = vpack.c.b16 %v173, %v172
  %182 = vmatprep.subr.bf16.mxu0 0
  %183 = vmatpush1.bf16.msra.mxu0 0
  %184 = vmatprep.subr.bf16.mxu0 0
  %185 = vmatpush1.bf16.msra.mxu0 0
  %186 = vmatprep.subr.bf16.mxu0 0
  %187 = vmatpush1.bf16.msra.mxu0 0
  %188 = vmatprep.subr.bf16.mxu0 0
  %189 = vmatpush1.bf16.msra.mxu0 0
  %190 = vmatprep.subr.bf16.mxu0 0
  %191 = vmatpush1.bf16.msra.mxu0 %v177
  %192 = vmatprep.subr.bf16.mxu0 0
  %193 = vmatpush1.bf16.msra.mxu0 %v176
  %194 = vmatprep.subr.bf16.mxu0 0
  %195 = vmatpush1.bf16.msra.mxu0 %v175
  %196 = vmatprep.subr.bf16.mxu0 0
  %197 = vmatpush1.bf16.msra.mxu0 %v174
  %198 = vmatprep.subr.bf16.mxu0 0
  %199 = vmatpush2.bf16.msra.mxu0 0
  %200 = vmatprep.subr.bf16.mxu0 0
  %201 = vmatpush2.bf16.msra.mxu0 0
  %202 = vmatprep.subr.bf16.mxu0 0
  %203 = vmatpush2.bf16.msra.mxu0 0
  %204 = vmatprep.subr.bf16.mxu0 0
  %205 = vmatpush2.bf16.msra.mxu0 0
  %206 = vmatprep.subr.bf16.mxu0 0
  %207 = vmatpush2.bf16.msra.mxu0 0
  %208 = vmatprep.subr.bf16.mxu0 0
  %209 = vmatpush2.bf16.msra.mxu0 0
  %210 = vmatprep.subr.bf16.mxu0 0
  %211 = vmatpush2.bf16.msra.mxu0 0
  %212 = vmatprep.subr.bf16.mxu0 0
  %213 = vmatpush2.bf16.msra.mxu0 0
  %214 = vmatprep.mubr.bf16.mxu0 0
  %215 = vmatmul.mubr.bf16.gmra.mxu0 %v68
  %v216 = vpop.f32.mrf.mxu0
  %v217 = vadd.f32 %v156, %v216
  %v218 = vpop.f32.mrf.mxu0
  %v219 = vpop.f32.mrf.mxu0
  %v220 = vadd.f32 %v156, %v219
  %v221 = vpop.f32.mrf.mxu0
  %222 = vmatprep.mubr.bf16.mxu0 0
  %223 = vmatmul.mubr.bf16.gmra.mxu0 %v71
  %v224 = vpop.f32.mrf.mxu0
  %v225 = vadd.f32 %v156, %v224
  %v226 = vpop.f32.mrf.mxu0
  %v227 = vpop.f32.mrf.mxu0
  %v228 = vadd.f32 %v156, %v227
  %v229 = vpop.f32.mrf.mxu0
  %230 = vdwg.mxu0
  %231 = vst.msk [vmem:[%s5] sm:$0xff] %vm66, %v217
  %232 = vst.msk [vmem:[%s5 + $0x8] sm:$0xff] %vm66, %v220
  %233 = vst.msk [vmem:[%s5 + $0x10] sm:$0xff] %vm66, %v225
  %234 = vst.msk [vmem:[%s5 + $0x18] sm:$0xff] %vm66, %v228
  // Predicated region
  $region18: #{dgcnn_forward.15} parent=0 // pred_check
    _
  $region19: #{dgcnn_forward.15} parent=0 // pred_check_branch
    %236 = sbr.rel (0) target = $region21
  $region20: #{dgcnn_forward.15} parent=0 // pred_region
    _
  $region21: #{dgcnn_forward.15} parent=0 // pred_fallthru
    _
  // Predicated region
  $region22: #{dgcnn_forward.15} parent=0 // pred_check
    _
  $region23: #{dgcnn_forward.15} parent=0 // pred_check_branch
    %238 = sbr.rel (0) target = $region25
  $region24: #{dgcnn_forward.15} parent=0 // pred_region
    _
  $region25: #{dgcnn_forward.15} parent=0 // pred_fallthru
    _
  // Predicated region
  $region26: #{dgcnn_forward.15} parent=0 // pred_check
    _
  $region27: #{dgcnn_forward.15} parent=0 // pred_check_branch
    %240 = sbr.rel (0) target = $region29
  $region28: #{dgcnn_forward.15} parent=0 // pred_region
    _
  $region29: #{dgcnn_forward.15} parent=0 // pred_fallthru
    _
  // Predicated region
  $region30: #{dgcnn_forward.15} parent=0 // pred_check
    _
  $region31: #{dgcnn_forward.15} parent=0 // pred_check_branch
    %242 = sbr.rel (0) target = $region33
  $region32: #{dgcnn_forward.15} parent=0 // pred_region
    _
  $region33: #{dgcnn_forward.15} parent=0 // pred_fallthru
    _

// kernel: dgcnn_forward.17
$region0: #{dgcnn_forward.17}
  #allocation0 [shape = 'u32[]', space=smem, size = 0x4, offset = 0x4, fixed_abs, tag = 'smem constant byte address 0x4 - core index']
  #allocation1 [shape = 'u32[144,128]{1,0:T(1,128)}', space=vmem, size = 0x12000, scoped, tag = 'internal scratch']
  %s0 = inlined_call_operand.vmem [shape: bf16[32,64], index: 0, kind: input, shape index: {}]
  %s1 = inlined_call_operand.vmem [shape: bf16[64,128], index: 1, kind: input, shape index: {}]
  %s2 = inlined_call_operand.vmem [shape: bf16[64,128], index: 2, kind: input, shape index: {}]
  %s3 = inlined_call_operand.vmem [shape: f32[1,128], index: 3, kind: input, shape index: {}]
  %s4 = inlined_call_operand.vmem [shape: bf16[32,128], index: 4, kind: output, shape index: {0}]
  %s5 = inlined_call_operand.vmem [shape: f32[32,128], index: 5, kind: output, shape index: {1}]
  %6 = xla_tuple %s4, %s5
  %s7 = sld [smem:[#allocation0]]
  $region34: #{dgcnn_forward.17} parent=0
    _
  %s9 = ssub.s32 1, %s7
  %s10 = scalar_select 0, %s9, %s7
  // Predicated region
  $region2: #{dgcnn_forward.17} parent=0 // pred_check
    _
  $region3: #{dgcnn_forward.17} parent=0 // pred_check_branch
    %12 = sbr.rel (0) target = $region5
  $region4: #{dgcnn_forward.17} parent=0 // pred_region
    _
  $region5: #{dgcnn_forward.17} parent=0 // pred_fallthru
    _
  // Predicated region
  $region6: #{dgcnn_forward.17} parent=0 // pred_check
    _
  $region7: #{dgcnn_forward.17} parent=0 // pred_check_branch
    %14 = sbr.rel (0) target = $region9
  $region8: #{dgcnn_forward.17} parent=0 // pred_region
    _
  $region9: #{dgcnn_forward.17} parent=0 // pred_fallthru
    _
  // Predicated region
  $region10: #{dgcnn_forward.17} parent=0 // pred_check
    _
  $region11: #{dgcnn_forward.17} parent=0 // pred_check_branch
    %16 = sbr.rel (0) target = $region13
  $region12: #{dgcnn_forward.17} parent=0 // pred_region
    _
  $region13: #{dgcnn_forward.17} parent=0 // pred_fallthru
    _
  // Predicated region
  $region14: #{dgcnn_forward.17} parent=0 // pred_check
    _
  $region15: #{dgcnn_forward.17} parent=0 // pred_check_branch
    %18 = sbr.rel (0) target = $region17
  $region16: #{dgcnn_forward.17} parent=0 // pred_region
    _
  $region17: #{dgcnn_forward.17} parent=0 // pred_fallthru
    _
  %v20 = vld [vmem:[%s0] sm:$0xf]
  %v21 = vld [vmem:[%s0 + $0x4] sm:$0xf]
  %v22 = vld [vmem:[%s0 + $0x8] sm:$0xf]
  %v23 = vld [vmem:[%s0 + $0xc] sm:$0xf]
  %v24 = vld [vmem:[%s1] sm:$0xf]
  %v25 = vld [vmem:[%s1 + $0x4] sm:$0xf]
  %v26 = vld [vmem:[%s1 + $0x8] sm:$0xf]
  %v27 = vld [vmem:[%s1 + $0xc] sm:$0xf]
  %v28 = vld [vmem:[%s1 + $0x10] sm:$0xf]
  %v29 = vld [vmem:[%s1 + $0x14] sm:$0xf]
  %v30 = vld [vmem:[%s1 + $0x18] sm:$0xf]
  %v31 = vld [vmem:[%s1 + $0x1c] sm:$0xf]
  %v36 = vunpack.c.l.b16 %v20
  %v37 = vunpack.c.l.b16 %v21
  %v38 = vunpack.c.l.b16 %v22
  %v39 = vunpack.c.l.b16 %v23
  %v40 = vpack.c.b16 %v37, %v36
  %v41 = vpack.c.b16 %v39, %v38
  %v50 = vunpack.c.l.b16 %v24
  %v51 = vunpack.c.l.b16 %v25
  %v52 = vunpack.c.l.b16 %v26
  %v53 = vunpack.c.l.b16 %v27
  %v54 = vunpack.c.l.b16 %v28
  %v55 = vunpack.c.l.b16 %v29
  %v56 = vunpack.c.l.b16 %v30
  %v57 = vunpack.c.l.b16 %v31
  %v58 = vpack.c.b16 %v51, %v50
  %v59 = vpack.c.b16 %v53, %v52
  %v60 = vpack.c.b16 %v55, %v54
  %v61 = vpack.c.b16 %v57, %v56
  %vm66 = vcmask 523264
  %v68 = vsel %vm66, %v40, 0
  %v71 = vsel %vm66, %v41, 0
  %73 = vmatprep.subr.bf16.mxu0 0
  %74 = vmatpush1.bf16.msra.mxu0 0
  %75 = vmatprep.subr.bf16.mxu0 0
  %76 = vmatpush1.bf16.msra.mxu0 0
  %77 = vmatprep.subr.bf16.mxu0 0
  %78 = vmatpush1.bf16.msra.mxu0 0
  %79 = vmatprep.subr.bf16.mxu0 0
  %80 = vmatpush1.bf16.msra.mxu0 0
  %81 = vmatprep.subr.bf16.mxu0 0
  %82 = vmatpush1.bf16.msra.mxu0 %v61
  %83 = vmatprep.subr.bf16.mxu0 0
  %84 = vmatpush1.bf16.msra.mxu0 %v60
  %85 = vmatprep.subr.bf16.mxu0 0
  %86 = vmatpush1.bf16.msra.mxu0 %v59
  %87 = vmatprep.subr.bf16.mxu0 0
  %88 = vmatpush1.bf16.msra.mxu0 %v58
  %89 = vmatprep.subr.bf16.mxu0 0
  %90 = vmatpush2.bf16.msra.mxu0 0
  %91 = vmatprep.subr.bf16.mxu0 0
  %92 = vmatpush2.bf16.msra.mxu0 0
  %93 = vmatprep.subr.bf16.mxu0 0
  %94 = vmatpush2.bf16.msra.mxu0 0
  %95 = vmatprep.subr.bf16.mxu0 0
  %96 = vmatpush2.bf16.msra.mxu0 0
  %97 = vmatprep.subr.bf16.mxu0 0
  %98 = vmatpush2.bf16.msra.mxu0 0
  %99 = vmatprep.subr.bf16.mxu0 0
  %100 = vmatpush2.bf16.msra.mxu0 0
  %101 = vmatprep.subr.bf16.mxu0 0
  %102 = vmatpush2.bf16.msra.mxu0 0
  %103 = vmatprep.subr.bf16.mxu0 0
  %104 = vmatpush2.bf16.msra.mxu0 0
  %105 = vmatprep.mubr.bf16.mxu0 0
  %106 = vmatmul.mubr.bf16.gmra.mxu0 %v68
  %v107 = vpop.f32.mrf.mxu0
  %v108 = vadd.f32 0.0, %v107
  %v109 = vpop.f32.mrf.mxu0
  %v110 = vpop.f32.mrf.mxu0
  %v111 = vadd.f32 0.0, %v110
  %v112 = vpop.f32.mrf.mxu0
  %113 = vmatprep.mubr.bf16.mxu0 0
  %114 = vmatmul.mubr.bf16.gmra.mxu0 %v71
  %v115 = vpop.f32.mrf.mxu0
  %v116 = vadd.f32 0.0, %v115
  %v117 = vpop.f32.mrf.mxu0
  %v118 = vpop.f32.mrf.mxu0
  %v119 = vadd.f32 0.0, %v118
  %v120 = vpop.f32.mrf.mxu0
  %121 = vdwg.mxu0
  %v122 = vpack.c.bf16 %v111, %v108
  %v123 = vpack.c.bf16 %v119, %v116
  %v126 = vunpack.c.l.b16 %v122
  %v127 = vunpack.c.h.b16 %v122
  %v128 = vunpack.c.l.b16 %v123
  %v129 = vunpack.c.h.b16 %v123
  %v130 = vpack.c.b16 %v126, %v126
  %v131 = vpack.c.b16 %v127, %v127
  %v132 = vpack.c.b16 %v128, %v128
  %v133 = vpack.c.b16 %v129, %v129
  %138 = vst [vmem:[%s4] sm:$0xf] %v130
  %139 = vst [vmem:[%s4 + $0x4] sm:$0xf] %v131
  %140 = vst [vmem:[%s4 + $0x8] sm:$0xf] %v132
  %141 = vst [vmem:[%s4 + $0xc] sm:$0xf] %v133
  %v142 = vld [vmem:[%s2] sm:$0xf]
  %v143 = vld [vmem:[%s2 + $0x4] sm:$0xf]
  %v144 = vld [vmem:[%s2 + $0x8] sm:$0xf]
  %v145 = vld [vmem:[%s2 + $0xc] sm:$0xf]
  %v146 = vld [vmem:[%s2 + $0x10] sm:$0xf]
  %v147 = vld [vmem:[%s2 + $0x14] sm:$0xf]
  %v148 = vld [vmem:[%s2 + $0x18] sm:$0xf]
  %v149 = vld [vmem:[%s2 + $0x1c] sm:$0xf]
  %v150 = vld [vmem:[%s3] sm:$0x1]
  %v152 = vlaneseq
  %v153 = vshrl.u32 %v152, 7
  %v154 = vsub.s32 0, %v153
  %v155 = vrot.slane %v150, %v154
  %v165 = vunpack.c.l.b16 %v142
  %v166 = vunpack.c.l.b16 %v143
  %v167 = vunpack.c.l.b16 %v144
  %v168 = vunpack.c.l.b16 %v145
  %v169 = vunpack.c.l.b16 %v146
  %v170 = vunpack.c.l.b16 %v147
  %v171 = vunpack.c.l.b16 %v148
  %v172 = vunpack.c.l.b16 %v149
  %v173 = vpack.c.b16 %v166, %v165
  %v174 = vpack.c.b16 %v168, %v167
  %v175 = vpack.c.b16 %v170, %v169
  %v176 = vpack.c.b16 %v172, %v171
  %181 = vmatprep.subr.bf16.mxu0 0
  %182 = vmatpush1.bf16.msra.mxu0 0
  %183 = vmatprep.subr.bf16.mxu0 0
  %184 = vmatpush1.bf16.msra.mxu0 0
  %185 = vmatprep.subr.bf16.mxu0 0
  %186 = vmatpush1.bf16.msra.mxu0 0
  %187 = vmatprep.subr.bf16.mxu0 0
  %188 = vmatpush1.bf16.msra.mxu0 0
  %189 = vmatprep.subr.bf16.mxu0 0
  %190 = vmatpush1.bf16.msra.mxu0 %v176
  %191 = vmatprep.subr.bf16.mxu0 0
  %192 = vmatpush1.bf16.msra.mxu0 %v175
  %193 = vmatprep.subr.bf16.mxu0 0
  %194 = vmatpush1.bf16.msra.mxu0 %v174
  %195 = vmatprep.subr.bf16.mxu0 0
  %196 = vmatpush1.bf16.msra.mxu0 %v173
  %197 = vmatprep.subr.bf16.mxu0 0
  %198 = vmatpush2.bf16.msra.mxu0 0
  %199 = vmatprep.subr.bf16.mxu0 0
  %200 = vmatpush2.bf16.msra.mxu0 0
  %201 = vmatprep.subr.bf16.mxu0 0
  %202 = vmatpush2.bf16.msra.mxu0 0
  %203 = vmatprep.subr.bf16.mxu0 0
  %204 = vmatpush2.bf16.msra.mxu0 0
  %205 = vmatprep.subr.bf16.mxu0 0
  %206 = vmatpush2.bf16.msra.mxu0 0
  %207 = vmatprep.subr.bf16.mxu0 0
  %208 = vmatpush2.bf16.msra.mxu0 0
  %209 = vmatprep.subr.bf16.mxu0 0
  %210 = vmatpush2.bf16.msra.mxu0 0
  %211 = vmatprep.subr.bf16.mxu0 0
  %212 = vmatpush2.bf16.msra.mxu0 0
  %213 = vmatprep.mubr.bf16.mxu0 0
  %214 = vmatmul.mubr.bf16.gmra.mxu0 %v68
  %v215 = vpop.f32.mrf.mxu0
  %v216 = vadd.f32 %v155, %v215
  %v217 = vpop.f32.mrf.mxu0
  %v218 = vpop.f32.mrf.mxu0
  %v219 = vadd.f32 %v155, %v218
  %v220 = vpop.f32.mrf.mxu0
  %221 = vmatprep.mubr.bf16.mxu0 0
  %222 = vmatmul.mubr.bf16.gmra.mxu0 %v71
  %v223 = vpop.f32.mrf.mxu0
  %v224 = vadd.f32 %v155, %v223
  %v225 = vpop.f32.mrf.mxu0
  %v226 = vpop.f32.mrf.mxu0
  %v227 = vadd.f32 %v155, %v226
  %v228 = vpop.f32.mrf.mxu0
  %229 = vdwg.mxu0
  %230 = vst [vmem:[%s5] sm:$0xff] %v216
  %231 = vst [vmem:[%s5 + $0x8] sm:$0xff] %v219
  %232 = vst [vmem:[%s5 + $0x10] sm:$0xff] %v224
  %233 = vst [vmem:[%s5 + $0x18] sm:$0xff] %v227
  // Predicated region
  $region18: #{dgcnn_forward.17} parent=0 // pred_check
    _
  $region19: #{dgcnn_forward.17} parent=0 // pred_check_branch
    %235 = sbr.rel (0) target = $region21
  $region20: #{dgcnn_forward.17} parent=0 // pred_region
    _
  $region21: #{dgcnn_forward.17} parent=0 // pred_fallthru
    _
  // Predicated region
  $region22: #{dgcnn_forward.17} parent=0 // pred_check
    _
  $region23: #{dgcnn_forward.17} parent=0 // pred_check_branch
    %237 = sbr.rel (0) target = $region25
  $region24: #{dgcnn_forward.17} parent=0 // pred_region
    _
  $region25: #{dgcnn_forward.17} parent=0 // pred_fallthru
    _
  // Predicated region
  $region26: #{dgcnn_forward.17} parent=0 // pred_check
    _
  $region27: #{dgcnn_forward.17} parent=0 // pred_check_branch
    %239 = sbr.rel (0) target = $region29
  $region28: #{dgcnn_forward.17} parent=0 // pred_region
    _
  $region29: #{dgcnn_forward.17} parent=0 // pred_fallthru
    _
  // Predicated region
  $region30: #{dgcnn_forward.17} parent=0 // pred_check
    _
  $region31: #{dgcnn_forward.17} parent=0 // pred_check_branch
    %241 = sbr.rel (0) target = $region33
  $region32: #{dgcnn_forward.17} parent=0 // pred_region
    _
  $region33: #{dgcnn_forward.17} parent=0 // pred_fallthru
    _

// kernel: dgcnn_forward.18
$region0: #{dgcnn_forward.18}
  #allocation0 [shape = 'u32[]', space=smem, size = 0x4, offset = 0x4, fixed_abs, tag = 'smem constant byte address 0x4 - core index']
  #allocation1 [shape = 'u32[144,128]{1,0:T(1,128)}', space=vmem, size = 0x12000, scoped, tag = 'internal scratch']
  %s0 = inlined_call_operand.vmem [shape: bf16[2,16,128], index: 0, kind: input, shape index: {}, may-alias: {0,1}]
  %s1 = inlined_call_operand.vmem [shape: bf16[2,16,128], index: 1, kind: input, shape index: {}, may-alias: {0,1}]
  %s2 = inlined_call_operand.vmem [shape: f32[2,1,16], index: 2, kind: input, shape index: {}]
  %s3 = inlined_call_operand.vmem [shape: bf16[2,16,16], index: 3, kind: output, shape index: {}]
  %s4 = sld [smem:[#allocation0]]
  $region45: #{dgcnn_forward.18} parent=0
    _
  %s6 = ssub.s32 1, %s4
  %s7 = scalar_select 0, %s6, %s4
  loop: start=0, step=1, limit=4
  $region2: #{dgcnn_forward.18} parent=0 // loop_pre_header
    _
  $region3: #{dgcnn_forward.18} parent=0 // loop_header
    %s9 = sphi 0, %s13
    %p10 = scmp.ge.s32.totalorder %s9, 4
    %s16 = sphi 0, %s28
    %s17 = sphi 0, %s24
    %s18 = sphi 0, %s16
    %s19 = sphi 0, %s17
    %s20 = sphi 0, %s18
    %s21 = sphi 0, %s19
    %s33 = sphi 0, %s35
    %s36 = sphi 0, %s33
    %s37 = sphi 0, %s36
    %s53 = sphi 0, %s37
    %s59 = sphi 0, %s61
    %s62 = sphi 0, %s59
    %s63 = sphi 0, %s62
    %s79 = sphi 0, %s63
    %s85 = sphi 0, %s87
    %s88 = sphi 0, %s85
    %s89 = sphi 0, %s88
    %s105 = sphi 0, %s89
    %s113 = sphi 0, %s115
    %s116 = sphi 0, %s113
    %s117 = sphi 0, %s116
    %s133 = sphi 0, %s117
  $region4: #{dgcnn_forward.18} parent=0 // loop_header_branch
    %12 = sbr.rel (%p10) target = $region8
  $region5: #{dgcnn_forward.18} parent=0 // loop_body
    %s14 = ssub.s32 %s9, 1
    %s15 = ssub.s32 %s9, 2
    %s22 = sadd.s32 1, %s17
    %p23 = scmp.ge.s32.totalorder %s22, 1
    %s24 = scalar_select %p23, 0, %s22
    %s25 = sadd.s32 1, %s16
    %s26 = scalar_select %p23, %s25, %s16
    %p27 = scmp.ge.s32.totalorder %s26, 2
    %s28 = scalar_select %p27, 0, %s26
    %s29 = ssub.s32 %s16, %s28
    %s30 = ssub.s32 %s17, %s24
    %s31 = sor.u32 %s29, %s30
    %p32 = scmp.eq.s32.totalorder %s31, 0
    %s34 = sadd.s32 %s33, 1
    %s35 = scalar_select %p32, %s33, %s34
    %p38 = pneg %p32
    %p39 = scmp.eq.s32.totalorder %s9, 1
    %p40 = por %p38, %p39
    %p41 = scmp.ne.s32.totalorder %s33, %s36
    %p42 = scmp.eq.s32.totalorder %s9, 0
    %p43 = por %p41, %p42
    %p44 = scmp.ne.s32.totalorder %s33, %s36
    %p45 = scmp.eq.s32.totalorder %s14, 1
    %p46 = por %p44, %p45
    %p47 = scmp.ne.s32.totalorder %s36, %s37
    %p48 = scmp.eq.s32.totalorder %s14, 0
    %p49 = por %p47, %p48
    %p50 = scmp.ne.s32.totalorder %s36, %s37
    %p51 = scmp.eq.s32.totalorder %s15, 1
    %p52 = por %p50, %p51
    %p54 = scmp.ne.s32.totalorder %s37, %s53
    %p55 = scmp.eq.s32.totalorder %s15, 0
    %p56 = por %p54, %p55
    %s57 = ssub.s32 %s16, %s28
    %p58 = scmp.eq.s32.totalorder %s57, 0
    %s60 = sadd.s32 %s59, 1
    %s61 = scalar_select %p58, %s59, %s60
    %p64 = pneg %p58
    %p65 = scmp.eq.s32.totalorder %s9, 1
    %p66 = por %p64, %p65
    %p67 = scmp.ne.s32.totalorder %s59, %s62
    %p68 = scmp.eq.s32.totalorder %s9, 0
    %p69 = por %p67, %p68
    %p70 = scmp.ne.s32.totalorder %s59, %s62
    %p71 = scmp.eq.s32.totalorder %s14, 1
    %p72 = por %p70, %p71
    %p73 = scmp.ne.s32.totalorder %s62, %s63
    %p74 = scmp.eq.s32.totalorder %s14, 0
    %p75 = por %p73, %p74
    %p76 = scmp.ne.s32.totalorder %s62, %s63
    %p77 = scmp.eq.s32.totalorder %s15, 1
    %p78 = por %p76, %p77
    %p80 = scmp.ne.s32.totalorder %s63, %s79
    %p81 = scmp.eq.s32.totalorder %s15, 0
    %p82 = por %p80, %p81
    %s83 = ssub.s32 %s16, %s28
    %p84 = scmp.eq.s32.totalorder %s83, 0
    %s86 = sadd.s32 %s85, 1
    %s87 = scalar_select %p84, %s85, %s86
    %p90 = pneg %p84
    %p91 = scmp.eq.s32.totalorder %s9, 1
    %p92 = por %p90, %p91
    %p93 = scmp.ne.s32.totalorder %s85, %s88
    %p94 = scmp.eq.s32.totalorder %s9, 0
    %p95 = por %p93, %p94
    %p96 = scmp.ne.s32.totalorder %s85, %s88
    %p97 = scmp.eq.s32.totalorder %s14, 1
    %p98 = por %p96, %p97
    %p99 = scmp.ne.s32.totalorder %s88, %s89
    %p100 = scmp.eq.s32.totalorder %s14, 0
    %p101 = por %p99, %p100
    %p102 = scmp.ne.s32.totalorder %s88, %s89
    %p103 = scmp.eq.s32.totalorder %s15, 1
    %p104 = por %p102, %p103
    %p106 = scmp.ne.s32.totalorder %s89, %s105
    %p107 = scmp.eq.s32.totalorder %s15, 0
    %p108 = por %p106, %p107
    %s109 = ssub.s32 %s16, %s28
    %s110 = ssub.s32 %s17, %s24
    %s111 = sor.u32 %s109, %s110
    %p112 = scmp.eq.s32.totalorder %s111, 0
    %s114 = sadd.s32 %s113, 1
    %s115 = scalar_select %p112, %s113, %s114
    %p118 = pneg %p112
    %p119 = scmp.eq.s32.totalorder %s9, 1
    %p120 = por %p118, %p119
    %p121 = scmp.ne.s32.totalorder %s113, %s116
    %p122 = scmp.eq.s32.totalorder %s9, 0
    %p123 = por %p121, %p122
    %p124 = scmp.ne.s32.totalorder %s113, %s116
    %p125 = scmp.eq.s32.totalorder %s14, 1
    %p126 = por %p124, %p125
    %p127 = scmp.ne.s32.totalorder %s116, %s117
    %p128 = scmp.eq.s32.totalorder %s14, 0
    %p129 = por %p127, %p128
    %p130 = scmp.ne.s32.totalorder %s116, %s117
    %p131 = scmp.eq.s32.totalorder %s15, 1
    %p132 = por %p130, %p131
    %p134 = scmp.ne.s32.totalorder %s117, %s133
    %p135 = scmp.eq.s32.totalorder %s15, 0
    %p136 = por %p134, %p135
    %p137 = scmp.le.s32.totalorder 1, %s9
    %p138 = scmp.lt.s32.totalorder %s9, 3
    %p139 = pnand %p137, %p138
    %p140 = pneg %p139
    // Predicated region
    $region9: #{dgcnn_forward.18} parent=5 // pred_check
      _
    $region10: #{dgcnn_forward.18} parent=5 // pred_check_branch
      %142 = sbr.rel (%p139) target = $region12
    $region11: #{dgcnn_forward.18} parent=5 // pred_region
      %s143 = ssub.s32 %s9, 1
    $region12: #{dgcnn_forward.18} parent=5 // pred_fallthru
      _
    %p144 = scmp.lt.s32.totalorder %s9, 2
    // Predicated region
    $region13: #{dgcnn_forward.18} parent=5 // pred_check
      %p145 = pneg %p144
    $region14: #{dgcnn_forward.18} parent=5 // pred_check_branch
      %147 = sbr.rel (%p145) target = $region16
    $region15: #{dgcnn_forward.18} parent=5 // pred_region
      // Predicated region
      $region17: #{dgcnn_forward.18} parent=15 // pred_check
        %p148 = pneg %p43
      $region18: #{dgcnn_forward.18} parent=15 // pred_check_branch
        %150 = sbr.rel (%p148) target = $region20
      $region19: #{dgcnn_forward.18} parent=15 // pred_region
        %s151 = smul.u32 2, %s17
        %p152 = scmp.lt.s32.totalorder %s16, 1
        %s153 = scalar_select %p152, %s16, 1
        %p154 = scmp.lt.s32.totalorder %s151, 1
        %s155 = scalar_select %p154, %s151, 1
        %s156 = smul.addr %s153, 2
        %s157 = sadd.s32 %s155, %s156
        %s158 = smul.addr %s157, 4
        %s159 = scalar_lea.vmem %s0, %s158
        %s160 = smul.u32 2, %s17
      $region20: #{dgcnn_forward.18} parent=15 // pred_fallthru
        _
      // Predicated region
      $region21: #{dgcnn_forward.18} parent=15 // pred_check
        %p161 = pneg %p69
      $region22: #{dgcnn_forward.18} parent=15 // pred_check_branch
        %163 = sbr.rel (%p161) target = $region24
      $region23: #{dgcnn_forward.18} parent=15 // pred_region
        %p164 = scmp.lt.s32.totalorder %s16, 1
        %s165 = scalar_select %p164, %s16, 1
        %s166 = smul.addr %s165, 2
        %s167 = smul.addr %s166, 4
        %s168 = scalar_lea.vmem %s1, %s167
      $region24: #{dgcnn_forward.18} parent=15 // pred_fallthru
        _
      // Predicated region
      $region25: #{dgcnn_forward.18} parent=15 // pred_check
        %p169 = pneg %p95
      $region26: #{dgcnn_forward.18} parent=15 // pred_check_branch
        %171 = sbr.rel (%p169) target = $region28
      $region27: #{dgcnn_forward.18} parent=15 // pred_region
        %p172 = scmp.lt.s32.totalorder %s16, 1
        %s173 = scalar_select %p172, %s16, 1
        %s174 = scalar_lea.vmem %s2, %s173
      $region28: #{dgcnn_forward.18} parent=15 // pred_fallthru
        _
    $region16: #{dgcnn_forward.18} parent=5 // pred_fallthru
      _
    %p175 = scmp.le.s32.totalorder 1, %s9
    %p176 = scmp.lt.s32.totalorder %s9, 3
    %p177 = pnand %p175, %p176
    %p178 = pneg %p177
    // Predicated region
    $region29: #{dgcnn_forward.18} parent=5 // pred_check
      _
    $region30: #{dgcnn_forward.18} parent=5 // pred_check_branch
      %180 = sbr.rel (%p177) target = $region32
    $region31: #{dgcnn_forward.18} parent=5 // pred_region
      %s181 = ssub.s32 %s9, 1
      %s182 = smul.u32 2, %s19
      %p183 = scmp.lt.s32.totalorder %s18, 1
      %s184 = scalar_select %p183, %s18, 1
      %p185 = scmp.lt.s32.totalorder %s182, 1
      %s186 = scalar_select %p185, %s182, 1
      %s187 = smul.addr %s184, 2
      %s188 = sadd.s32 %s186, %s187
      %s189 = smul.addr %s188, 4
      %s190 = scalar_lea.vmem %s0, %s189
      %p191 = pneg %p49
      %p192 = pneg %p46
      %p193 = scmp.lt.s32.totalorder %s18, 1
      %s194 = scalar_select %p193, %s18, 1
      %s195 = smul.addr %s194, 2
      %s196 = smul.addr %s195, 4
      %s197 = scalar_lea.vmem %s1, %s196
      %p198 = pneg %p75
      %p199 = pneg %p72
      %p200 = scmp.lt.s32.totalorder %s18, 1
      %s201 = scalar_select %p200, %s18, 1
      %s202 = scalar_lea.vmem %s2, %s201
      %p203 = pneg %p101
      %p204 = pneg %p98
      %p205 = pneg %p129
      %p206 = pneg %p126
      %s207 = smul.u32 2, %s19
      %p208 = scmp.lt.s32.totalorder %s18, 1
      %s209 = scalar_select %p208, %s18, 1
      %p210 = scmp.lt.s32.totalorder %s207, 1
      %s211 = scalar_select %p210, %s207, 1
      %s212 = smul.addr %s209, 2
      %s213 = sadd.s32 %s211, %s212
      %s214 = smul.addr %s213, 4
      %s215 = scalar_lea.vmem %s3, %s214
      %s216 = smul.u32 2, %s19
      %p217 = scmp.lt.s32.totalorder %s18, 1
      %s218 = scalar_select %p217, %s18, 1
      %p219 = scmp.lt.s32.totalorder %s216, 1
      %s220 = scalar_select %p219, %s216, 1
      %s221 = smul.addr %s218, 2
      %s222 = sadd.s32 %s220, %s221
      %s223 = smul.addr %s222, 4
      %s224 = scalar_lea.vmem %s0, %s223
      %s225 = smul.u32 2, %s19
      %p226 = scmp.lt.s32.totalorder %s18, 1
      %s227 = scalar_select %p226, %s18, 1
      %s228 = smul.addr %s227, 2
      %s229 = smul.addr %s228, 4
      %s230 = scalar_lea.vmem %s1, %s229
      %p231 = scmp.lt.s32.totalorder %s18, 1
      %s232 = scalar_select %p231, %s18, 1
      %s233 = scalar_lea.vmem %s2, %s232
      %s234 = smul.u32 2, %s19
      %p235 = scmp.lt.s32.totalorder %s18, 1
      %s236 = scalar_select %p235, %s18, 1
      %p237 = scmp.lt.s32.totalorder %s234, 1
      %s238 = scalar_select %p237, %s234, 1
      %s239 = smul.addr %s236, 2
      %s240 = sadd.s32 %s238, %s239
      %s241 = smul.addr %s240, 4
      %s242 = scalar_lea.vmem %s3, %s241
      %s243 = smul.u32 2, %s19
      %v245 = vld [vmem:[%s224] sm:$0xf]
      %v246 = vld [vmem:[%s224 + $0x4] sm:$0xf]
      %v247 = vld [vmem:[%s230] sm:$0xf]
      %v248 = vld [vmem:[%s230 + $0x4] sm:$0xf]
      %v251 = vunpack.c.l.b16 %v245
      %v252 = vunpack.c.l.b16 %v246
      %v253 = vpack.c.b16 %v252, %v251
      %v257 = vunpack.c.l.b16 %v247
      %v258 = vunpack.c.l.b16 %v248
      %v259 = vpack.c.b16 %v258, %v257
      %261 = vmatprep.subr.bf16.mxu0 0
      %262 = vmatpush1.bf16.xpose.msra.mxu0 0
      %263 = vmatprep.subr.bf16.mxu0 0
      %264 = vmatpush1.bf16.xpose.msra.mxu0 0
      %265 = vmatprep.subr.bf16.mxu0 0
      %266 = vmatpush1.bf16.xpose.msra.mxu0 0
      %267 = vmatprep.subr.bf16.mxu0 0
      %268 = vmatpush1.bf16.xpose.msra.mxu0 0
      %269 = vmatprep.subr.bf16.mxu0 0
      %270 = vmatpush1.bf16.xpose.msra.mxu0 0
      %271 = vmatprep.subr.bf16.mxu0 0
      %272 = vmatpush1.bf16.xpose.msra.mxu0 0
      %273 = vmatprep.subr.bf16.mxu0 0
      %274 = vmatpush1.bf16.xpose.msra.mxu0 0
      %275 = vmatprep.subr.bf16.mxu0 0
      %276 = vmatpush1.bf16.xpose.msra.mxu0 %v259
      %277 = vmatprep.subr.bf16.mxu0 0
      %278 = vmatpush2.bf16.xpose.msra.mxu0 0
      %279 = vmatprep.subr.bf16.mxu0 0
      %280 = vmatpush2.bf16.xpose.msra.mxu0 0
      %281 = vmatprep.subr.bf16.mxu0 0
      %282 = vmatpush2.bf16.xpose.msra.mxu0 0
      %283 = vmatprep.subr.bf16.mxu0 0
      %284 = vmatpush2.bf16.xpose.msra.mxu0 0
      %285 = vmatprep.subr.bf16.mxu0 0
      %286 = vmatpush2.bf16.xpose.msra.mxu0 0
      %287 = vmatprep.subr.bf16.mxu0 0
      %288 = vmatpush2.bf16.xpose.msra.mxu0 0
      %289 = vmatprep.subr.bf16.mxu0 0
      %290 = vmatpush2.bf16.xpose.msra.mxu0 0
      %291 = vmatprep.subr.bf16.mxu0 0
      %292 = vmatpush2.bf16.xpose.msra.mxu0 0
      %293 = vmatprep.mubr.bf16.mxu0 0
      %294 = vmatmul.mubr.bf16.gmra.mxu0 %v253
      %v295 = vpop.f32.mrf.mxu0
      %v296 = vadd.f32 0.0, %v295
      %v297 = vpop.f32.mrf.mxu0
      %v298 = vpop.f32.mrf.mxu0
      %v299 = vadd.f32 0.0, %v298
      %v300 = vpop.f32.mrf.mxu0
      %301 = vdwg.mxu0
      %v302 = vld [vmem:[%s233] sm:$0x1]
      %v304 = vlaneseq
      %v305 = vshrl.u32 %v304, 7
      %v306 = vsub.s32 0, %v305
      %v307 = vrot.slane %v302, %v306
      %v309 = vsub.f32 %v296, %v307
      %v310 = vsub.f32 %v299, %v307
      %v311 = vpack.c.bf16 %v310, %v309
      %v313 = vunpack.c.l.b16 %v311
      %v314 = vunpack.c.h.b16 %v311
      %v315 = vpack.c.b16 %v313, %v313
      %v316 = vpack.c.b16 %v314, %v314
      %vm319 = vcmask 125952
      %320 = vst.msk [vmem:[%s242] sm:$0xf] %vm319, %v315
      %321 = vst.msk [vmem:[%s242 + $0x4] sm:$0xf] %vm319, %v316
      %s322 = smul.u32 2, %s19
      %p323 = scmp.lt.s32.totalorder %s18, 1
      %s324 = scalar_select %p323, %s18, 1
      %p325 = scmp.lt.s32.totalorder %s322, 1
      %s326 = scalar_select %p325, %s322, 1
      %s327 = smul.addr %s324, 2
      %s328 = sadd.s32 %s326, %s327
      %s329 = smul.addr %s328, 4
      %s330 = scalar_lea.vmem %s3, %s329
      // Predicated region
      $region33: #{dgcnn_forward.18} parent=31 // pred_check
        %p331 = pneg %p126
      $region34: #{dgcnn_forward.18} parent=31 // pred_check_branch
        %333 = sbr.rel (%p331) target = $region36
      $region35: #{dgcnn_forward.18} parent=31 // pred_region
        %s334 = smul.u32 2, %s19
      $region36: #{dgcnn_forward.18} parent=31 // pred_fallthru
        _
    $region32: #{dgcnn_forward.18} parent=5 // pred_fallthru
      _
    %p335 = scmp.le.s32.totalorder 2, %s9
    // Predicated region
    $region37: #{dgcnn_forward.18} parent=5 // pred_check
      %p336 = pneg %p335
    $region38: #{dgcnn_forward.18} parent=5 // pred_check_branch
      %338 = sbr.rel (%p336) target = $region40
    $region39: #{dgcnn_forward.18} parent=5 // pred_region
      %s339 = ssub.s32 %s9, 2
      // Predicated region
      $region41: #{dgcnn_forward.18} parent=39 // pred_check
        %p340 = pneg %p132
      $region42: #{dgcnn_forward.18} parent=39 // pred_check_branch
        %342 = sbr.rel (%p340) target = $region44
      $region43: #{dgcnn_forward.18} parent=39 // pred_region
        %s343 = smul.u32 2, %s21
        %p344 = scmp.lt.s32.totalorder %s20, 1
        %s345 = scalar_select %p344, %s20, 1
        %p346 = scmp.lt.s32.totalorder %s343, 1
        %s347 = scalar_select %p346, %s343, 1
        %s348 = smul.addr %s345, 2
        %s349 = sadd.s32 %s347, %s348
        %s350 = smul.addr %s349, 4
        %s351 = scalar_lea.vmem %s3, %s350
      $region44: #{dgcnn_forward.18} parent=39 // pred_fallthru
        _
    $region40: #{dgcnn_forward.18} parent=5 // pred_fallthru
      _
  $region6: #{dgcnn_forward.18} parent=0 // loop_footer
    %s13 = sadd.s32 1, %s9
  $region7: #{dgcnn_forward.18} parent=0 // loop_footer_branch
    %8 = sbr.rel target = $region3
  $region8: #{dgcnn_forward.18} parent=0 // loop_exit
    _

// kernel: dgcnn_forward.19
$region0: #{dgcnn_forward.19}
  #allocation0 [shape = 'u32[]', space=smem, size = 0x4, offset = 0x4, fixed_abs, tag = 'smem constant byte address 0x4 - core index']
  #allocation1 [shape = 'u32[144,128]{1,0:T(1,128)}', space=vmem, size = 0x12000, scoped, tag = 'internal scratch']
  %s0 = inlined_call_operand.vmem [shape: bf16[32,128], index: 0, kind: input, shape index: {}]
  %s1 = inlined_call_operand.vmem [shape: bf16[128,256], index: 1, kind: input, shape index: {}]
  %s2 = inlined_call_operand.vmem [shape: bf16[128,256], index: 2, kind: input, shape index: {}]
  %s3 = inlined_call_operand.vmem [shape: f32[1,256], index: 3, kind: input, shape index: {}]
  %s4 = inlined_call_operand.vmem [shape: bf16[32,256], index: 4, kind: output, shape index: {0}]
  %s5 = inlined_call_operand.vmem [shape: f32[32,256], index: 5, kind: output, shape index: {1}]
  %6 = xla_tuple %s4, %s5
  %s7 = sld [smem:[#allocation0]]
  $region34: #{dgcnn_forward.19} parent=0
    _
  %s9 = ssub.s32 1, %s7
  %s10 = scalar_select 0, %s9, %s7
  // Predicated region
  $region2: #{dgcnn_forward.19} parent=0 // pred_check
    _
  $region3: #{dgcnn_forward.19} parent=0 // pred_check_branch
    %12 = sbr.rel (0) target = $region5
  $region4: #{dgcnn_forward.19} parent=0 // pred_region
    _
  $region5: #{dgcnn_forward.19} parent=0 // pred_fallthru
    _
  // Predicated region
  $region6: #{dgcnn_forward.19} parent=0 // pred_check
    _
  $region7: #{dgcnn_forward.19} parent=0 // pred_check_branch
    %14 = sbr.rel (0) target = $region9
  $region8: #{dgcnn_forward.19} parent=0 // pred_region
    _
  $region9: #{dgcnn_forward.19} parent=0 // pred_fallthru
    _
  // Predicated region
  $region10: #{dgcnn_forward.19} parent=0 // pred_check
    _
  $region11: #{dgcnn_forward.19} parent=0 // pred_check_branch
    %16 = sbr.rel (0) target = $region13
  $region12: #{dgcnn_forward.19} parent=0 // pred_region
    _
  $region13: #{dgcnn_forward.19} parent=0 // pred_fallthru
    _
  // Predicated region
  $region14: #{dgcnn_forward.19} parent=0 // pred_check
    _
  $region15: #{dgcnn_forward.19} parent=0 // pred_check_branch
    %18 = sbr.rel (0) target = $region17
  $region16: #{dgcnn_forward.19} parent=0 // pred_region
    _
  $region17: #{dgcnn_forward.19} parent=0 // pred_fallthru
    _
  %v20 = vld [vmem:[%s0] sm:$0xf]
  %v21 = vld [vmem:[%s0 + $0x4] sm:$0xf]
  %v22 = vld [vmem:[%s0 + $0x8] sm:$0xf]
  %v23 = vld [vmem:[%s0 + $0xc] sm:$0xf]
  %v24 = vld [vmem:[%s1] sm:$0xff]
  %v25 = vld [vmem:[%s1 + $0x8] sm:$0xff]
  %v26 = vld [vmem:[%s1 + $0x10] sm:$0xff]
  %v27 = vld [vmem:[%s1 + $0x18] sm:$0xff]
  %v28 = vld [vmem:[%s1 + $0x20] sm:$0xff]
  %v29 = vld [vmem:[%s1 + $0x28] sm:$0xff]
  %v30 = vld [vmem:[%s1 + $0x30] sm:$0xff]
  %v31 = vld [vmem:[%s1 + $0x38] sm:$0xff]
  %v32 = vld [vmem:[%s1 + $0x40] sm:$0xff]
  %v33 = vld [vmem:[%s1 + $0x48] sm:$0xff]
  %v34 = vld [vmem:[%s1 + $0x50] sm:$0xff]
  %v35 = vld [vmem:[%s1 + $0x58] sm:$0xff]
  %v36 = vld [vmem:[%s1 + $0x60] sm:$0xff]
  %v37 = vld [vmem:[%s1 + $0x68] sm:$0xff]
  %v38 = vld [vmem:[%s1 + $0x70] sm:$0xff]
  %v39 = vld [vmem:[%s1 + $0x78] sm:$0xff]
  %v44 = vunpack.c.l.b16 %v20
  %v45 = vunpack.c.l.b16 %v21
  %v46 = vunpack.c.l.b16 %v22
  %v47 = vunpack.c.l.b16 %v23
  %v48 = vpack.c.b16 %v45, %v44
  %v49 = vpack.c.b16 %v47, %v46
  %v68 = vunpack.c.l.b16 %v24
  %v69 = vunpack.c.h.b16 %v24
  %v70 = vunpack.c.l.b16 %v25
  %v71 = vunpack.c.h.b16 %v25
  %v72 = vunpack.c.l.b16 %v26
  %v73 = vunpack.c.h.b16 %v26
  %v74 = vunpack.c.l.b16 %v27
  %v75 = vunpack.c.h.b16 %v27
  %v76 = vunpack.c.l.b16 %v28
  %v77 = vunpack.c.h.b16 %v28
  %v78 = vunpack.c.l.b16 %v29
  %v79 = vunpack.c.h.b16 %v29
  %v80 = vunpack.c.l.b16 %v30
  %v81 = vunpack.c.h.b16 %v30
  %v82 = vunpack.c.l.b16 %v31
  %v83 = vunpack.c.h.b16 %v31
  %v84 = vunpack.c.l.b16 %v32
  %v85 = vunpack.c.h.b16 %v32
  %v86 = vunpack.c.l.b16 %v33
  %v87 = vunpack.c.h.b16 %v33
  %v88 = vunpack.c.l.b16 %v34
  %v89 = vunpack.c.h.b16 %v34
  %v90 = vunpack.c.l.b16 %v35
  %v91 = vunpack.c.h.b16 %v35
  %v92 = vunpack.c.l.b16 %v36
  %v93 = vunpack.c.h.b16 %v36
  %v94 = vunpack.c.l.b16 %v37
  %v95 = vunpack.c.h.b16 %v37
  %v96 = vunpack.c.l.b16 %v38
  %v97 = vunpack.c.h.b16 %v38
  %v98 = vunpack.c.l.b16 %v39
  %v99 = vunpack.c.h.b16 %v39
  %v100 = vpack.c.b16 %v70, %v68
  %v101 = vpack.c.b16 %v71, %v69
  %v102 = vpack.c.b16 %v74, %v72
  %v103 = vpack.c.b16 %v75, %v73
  %v104 = vpack.c.b16 %v78, %v76
  %v105 = vpack.c.b16 %v79, %v77
  %v106 = vpack.c.b16 %v82, %v80
  %v107 = vpack.c.b16 %v83, %v81
  %v108 = vpack.c.b16 %v86, %v84
  %v109 = vpack.c.b16 %v87, %v85
  %v110 = vpack.c.b16 %v90, %v88
  %v111 = vpack.c.b16 %v91, %v89
  %v112 = vpack.c.b16 %v94, %v92
  %v113 = vpack.c.b16 %v95, %v93
  %v114 = vpack.c.b16 %v98, %v96
  %v115 = vpack.c.b16 %v99, %v97
  %132 = vmatprep.subr.bf16.mxu0 %v115
  %133 = vmatpush1.bf16.msra.mxu0 %v114
  %134 = vmatprep.subr.bf16.mxu0 %v113
  %135 = vmatpush1.bf16.msra.mxu0 %v112
  %136 = vmatprep.subr.bf16.mxu0 %v111
  %137 = vmatpush1.bf16.msra.mxu0 %v110
  %138 = vmatprep.subr.bf16.mxu0 %v109
  %139 = vmatpush1.bf16.msra.mxu0 %v108
  %140 = vmatprep.subr.bf16.mxu0 %v107
  %141 = vmatpush1.bf16.msra.mxu0 %v106
  %142 = vmatprep.subr.bf16.mxu0 %v105
  %143 = vmatpush1.bf16.msra.mxu0 %v104
  %144 = vmatprep.subr.bf16.mxu0 %v103
  %145 = vmatpush1.bf16.msra.mxu0 %v102
  %146 = vmatprep.subr.bf16.mxu0 %v101
  %147 = vmatpush1.bf16.msra.mxu0 %v100
  %148 = vmatprep.subr.bf16.mxu0 0
  %149 = vmatpush2.bf16.msra.mxu0 0
  %150 = vmatprep.subr.bf16.mxu0 0
  %151 = vmatpush2.bf16.msra.mxu0 0
  %152 = vmatprep.subr.bf16.mxu0 0
  %153 = vmatpush2.bf16.msra.mxu0 0
  %154 = vmatprep.subr.bf16.mxu0 0
  %155 = vmatpush2.bf16.msra.mxu0 0
  %156 = vmatprep.subr.bf16.mxu0 0
  %157 = vmatpush2.bf16.msra.mxu0 0
  %158 = vmatprep.subr.bf16.mxu0 0
  %159 = vmatpush2.bf16.msra.mxu0 0
  %160 = vmatprep.subr.bf16.mxu0 0
  %161 = vmatpush2.bf16.msra.mxu0 0
  %162 = vmatprep.subr.bf16.mxu0 0
  %163 = vmatpush2.bf16.msra.mxu0 0
  %164 = vmatprep.mubr.bf16.mxu0 0
  %165 = vmatmul.mubr.bf16.gmra.mxu0 %v48
  %v166 = vpop.f32.mrf.mxu0
  %v167 = vadd.f32 0.0, %v166
  %v168 = vpop.f32.mrf.mxu0
  %v169 = vadd.f32 0.0, %v168
  %v170 = vpop.f32.mrf.mxu0
  %v171 = vadd.f32 0.0, %v170
  %v172 = vpop.f32.mrf.mxu0
  %v173 = vadd.f32 0.0, %v172
  %174 = vmatprep.mubr.bf16.mxu0 0
  %175 = vmatmul.mubr.bf16.gmra.mxu0 %v49
  %v176 = vpop.f32.mrf.mxu0
  %v177 = vadd.f32 0.0, %v176
  %v178 = vpop.f32.mrf.mxu0
  %v179 = vadd.f32 0.0, %v178
  %v180 = vpop.f32.mrf.mxu0
  %v181 = vadd.f32 0.0, %v180
  %v182 = vpop.f32.mrf.mxu0
  %v183 = vadd.f32 0.0, %v182
  %184 = vdwg.mxu0
  %v185 = vpack.c.bf16 %v171, %v167
  %v186 = vpack.c.bf16 %v173, %v169
  %v187 = vpack.c.bf16 %v181, %v177
  %v188 = vpack.c.bf16 %v183, %v179
  %v193 = vunpack.c.l.b16 %v185
  %v194 = vunpack.c.l.b16 %v186
  %v195 = vunpack.c.h.b16 %v185
  %v196 = vunpack.c.h.b16 %v186
  %v197 = vunpack.c.l.b16 %v187
  %v198 = vunpack.c.l.b16 %v188
  %v199 = vunpack.c.h.b16 %v187
  %v200 = vunpack.c.h.b16 %v188
  %v201 = vpack.c.b16 %v194, %v193
  %v202 = vpack.c.b16 %v196, %v195
  %v203 = vpack.c.b16 %v198, %v197
  %v204 = vpack.c.b16 %v200, %v199
  %209 = vst [vmem:[%s4] sm:$0xff] %v201
  %210 = vst [vmem:[%s4 + $0x8] sm:$0xff] %v202
  %211 = vst [vmem:[%s4 + $0x10] sm:$0xff] %v203
  %212 = vst [vmem:[%s4 + $0x18] sm:$0xff] %v204
  %v213 = vld [vmem:[%s2] sm:$0xff]
  %v214 = vld [vmem:[%s2 + $0x8] sm:$0xff]
  %v215 = vld [vmem:[%s2 + $0x10] sm:$0xff]
  %v216 = vld [vmem:[%s2 + $0x18] sm:$0xff]
  %v217 = vld [vmem:[%s2 + $0x20] sm:$0xff]
  %v218 = vld [vmem:[%s2 + $0x28] sm:$0xff]
  %v219 = vld [vmem:[%s2 + $0x30] sm:$0xff]
  %v220 = vld [vmem:[%s2 + $0x38] sm:$0xff]
  %v221 = vld [vmem:[%s2 + $0x40] sm:$0xff]
  %v222 = vld [vmem:[%s2 + $0x48] sm:$0xff]
  %v223 = vld [vmem:[%s2 + $0x50] sm:$0xff]
  %v224 = vld [vmem:[%s2 + $0x58] sm:$0xff]
  %v225 = vld [vmem:[%s2 + $0x60] sm:$0xff]
  %v226 = vld [vmem:[%s2 + $0x68] sm:$0xff]
  %v227 = vld [vmem:[%s2 + $0x70] sm:$0xff]
  %v228 = vld [vmem:[%s2 + $0x78] sm:$0xff]
  %v229 = vld [vmem:[%s3] sm:$0x3]
  %v231 = vlaneseq
  %v232 = vshrl.u32 %v231, 7
  %v233 = vsub.s32 0, %v232
  %v234 = vrot.slane %v229, %v233
  %v235 = vlaneseq
  %v236 = vshrl.u32 %v235, 7
  %v237 = vsub.s32 1, %v236
  %v238 = vrot.slane %v229, %v237
  %v257 = vunpack.c.l.b16 %v213
  %v258 = vunpack.c.h.b16 %v213
  %v259 = vunpack.c.l.b16 %v214
  %v260 = vunpack.c.h.b16 %v214
  %v261 = vunpack.c.l.b16 %v215
  %v262 = vunpack.c.h.b16 %v215
  %v263 = vunpack.c.l.b16 %v216
  %v264 = vunpack.c.h.b16 %v216
  %v265 = vunpack.c.l.b16 %v217
  %v266 = vunpack.c.h.b16 %v217
  %v267 = vunpack.c.l.b16 %v218
  %v268 = vunpack.c.h.b16 %v218
  %v269 = vunpack.c.l.b16 %v219
  %v270 = vunpack.c.h.b16 %v219
  %v271 = vunpack.c.l.b16 %v220
  %v272 = vunpack.c.h.b16 %v220
  %v273 = vunpack.c.l.b16 %v221
  %v274 = vunpack.c.h.b16 %v221
  %v275 = vunpack.c.l.b16 %v222
  %v276 = vunpack.c.h.b16 %v222
  %v277 = vunpack.c.l.b16 %v223
  %v278 = vunpack.c.h.b16 %v223
  %v279 = vunpack.c.l.b16 %v224
  %v280 = vunpack.c.h.b16 %v224
  %v281 = vunpack.c.l.b16 %v225
  %v282 = vunpack.c.h.b16 %v225
  %v283 = vunpack.c.l.b16 %v226
  %v284 = vunpack.c.h.b16 %v226
  %v285 = vunpack.c.l.b16 %v227
  %v286 = vunpack.c.h.b16 %v227
  %v287 = vunpack.c.l.b16 %v228
  %v288 = vunpack.c.h.b16 %v228
  %v289 = vpack.c.b16 %v259, %v257
  %v290 = vpack.c.b16 %v260, %v258
  %v291 = vpack.c.b16 %v263, %v261
  %v292 = vpack.c.b16 %v264, %v262
  %v293 = vpack.c.b16 %v267, %v265
  %v294 = vpack.c.b16 %v268, %v266
  %v295 = vpack.c.b16 %v271, %v269
  %v296 = vpack.c.b16 %v272, %v270
  %v297 = vpack.c.b16 %v275, %v273
  %v298 = vpack.c.b16 %v276, %v274
  %v299 = vpack.c.b16 %v279, %v277
  %v300 = vpack.c.b16 %v280, %v278
  %v301 = vpack.c.b16 %v283, %v281
  %v302 = vpack.c.b16 %v284, %v282
  %v303 = vpack.c.b16 %v287, %v285
  %v304 = vpack.c.b16 %v288, %v286
  %321 = vmatprep.subr.bf16.mxu0 %v304
  %322 = vmatpush1.bf16.msra.mxu0 %v303
  %323 = vmatprep.subr.bf16.mxu0 %v302
  %324 = vmatpush1.bf16.msra.mxu0 %v301
  %325 = vmatprep.subr.bf16.mxu0 %v300
  %326 = vmatpush1.bf16.msra.mxu0 %v299
  %327 = vmatprep.subr.bf16.mxu0 %v298
  %328 = vmatpush1.bf16.msra.mxu0 %v297
  %329 = vmatprep.subr.bf16.mxu0 %v296
  %330 = vmatpush1.bf16.msra.mxu0 %v295
  %331 = vmatprep.subr.bf16.mxu0 %v294
  %332 = vmatpush1.bf16.msra.mxu0 %v293
  %333 = vmatprep.subr.bf16.mxu0 %v292
  %334 = vmatpush1.bf16.msra.mxu0 %v291
  %335 = vmatprep.subr.bf16.mxu0 %v290
  %336 = vmatpush1.bf16.msra.mxu0 %v289
  %337 = vmatprep.subr.bf16.mxu0 0
  %338 = vmatpush2.bf16.msra.mxu0 0
  %339 = vmatprep.subr.bf16.mxu0 0
  %340 = vmatpush2.bf16.msra.mxu0 0
  %341 = vmatprep.subr.bf16.mxu0 0
  %342 = vmatpush2.bf16.msra.mxu0 0
  %343 = vmatprep.subr.bf16.mxu0 0
  %344 = vmatpush2.bf16.msra.mxu0 0
  %345 = vmatprep.subr.bf16.mxu0 0
  %346 = vmatpush2.bf16.msra.mxu0 0
  %347 = vmatprep.subr.bf16.mxu0 0
  %348 = vmatpush2.bf16.msra.mxu0 0
  %349 = vmatprep.subr.bf16.mxu0 0
  %350 = vmatpush2.bf16.msra.mxu0 0
  %351 = vmatprep.subr.bf16.mxu0 0
  %352 = vmatpush2.bf16.msra.mxu0 0
  %353 = vmatprep.mubr.bf16.mxu0 0
  %354 = vmatmul.mubr.bf16.gmra.mxu0 %v48
  %v355 = vpop.f32.mrf.mxu0
  %v356 = vadd.f32 %v234, %v355
  %v357 = vpop.f32.mrf.mxu0
  %v358 = vadd.f32 %v238, %v357
  %v359 = vpop.f32.mrf.mxu0
  %v360 = vadd.f32 %v234, %v359
  %v361 = vpop.f32.mrf.mxu0
  %v362 = vadd.f32 %v238, %v361
  %363 = vmatprep.mubr.bf16.mxu0 0
  %364 = vmatmul.mubr.bf16.gmra.mxu0 %v49
  %v365 = vpop.f32.mrf.mxu0
  %v366 = vadd.f32 %v234, %v365
  %v367 = vpop.f32.mrf.mxu0
  %v368 = vadd.f32 %v238, %v367
  %v369 = vpop.f32.mrf.mxu0
  %v370 = vadd.f32 %v234, %v369
  %v371 = vpop.f32.mrf.mxu0
  %v372 = vadd.f32 %v238, %v371
  %373 = vdwg.mxu0
  %374 = vst [vmem:[%s5] sm:$0xff] %v356
  %375 = vst [vmem:[%s5 + $0x8] sm:$0xff] %v358
  %376 = vst [vmem:[%s5 + $0x10] sm:$0xff] %v360
  %377 = vst [vmem:[%s5 + $0x18] sm:$0xff] %v362
  %378 = vst [vmem:[%s5 + $0x20] sm:$0xff] %v366
  %379 = vst [vmem:[%s5 + $0x28] sm:$0xff] %v368
  %380 = vst [vmem:[%s5 + $0x30] sm:$0xff] %v370
  %381 = vst [vmem:[%s5 + $0x38] sm:$0xff] %v372
  // Predicated region
  $region18: #{dgcnn_forward.19} parent=0 // pred_check
    _
  $region19: #{dgcnn_forward.19} parent=0 // pred_check_branch
    %383 = sbr.rel (0) target = $region21
  $region20: #{dgcnn_forward.19} parent=0 // pred_region
    _
  $region21: #{dgcnn_forward.19} parent=0 // pred_fallthru
    _
  // Predicated region
  $region22: #{dgcnn_forward.19} parent=0 // pred_check
    _
  $region23: #{dgcnn_forward.19} parent=0 // pred_check_branch
    %385 = sbr.rel (0) target = $region25
  $region24: #{dgcnn_forward.19} parent=0 // pred_region
    _
  $region25: #{dgcnn_forward.19} parent=0 // pred_fallthru
    _
  // Predicated region
  $region26: #{dgcnn_forward.19} parent=0 // pred_check
    _
  $region27: #{dgcnn_forward.19} parent=0 // pred_check_branch
    %387 = sbr.rel (0) target = $region29
  $region28: #{dgcnn_forward.19} parent=0 // pred_region
    _
  $region29: #{dgcnn_forward.19} parent=0 // pred_fallthru
    _
  // Predicated region
  $region30: #{dgcnn_forward.19} parent=0 // pred_check
    _
  $region31: #{dgcnn_forward.19} parent=0 // pred_check_branch
    %389 = sbr.rel (0) target = $region33
  $region32: #{dgcnn_forward.19} parent=0 // pred_region
    _
  $region33: #{dgcnn_forward.19} parent=0 // pred_fallthru
    _

// kernel: dgcnn_forward.21
$region0: #{dgcnn_forward.21}
  #allocation0 [shape = 'u32[]', space=smem, size = 0x4, offset = 0x4, fixed_abs, tag = 'smem constant byte address 0x4 - core index']
  #allocation1 [shape = 'u32[144,128]{1,0:T(1,128)}', space=vmem, size = 0x12000, scoped, tag = 'internal scratch']
  %s0 = inlined_call_operand.vmem [shape: f32[2,128], index: 0, kind: input, shape index: {}]
  %s1 = inlined_call_operand.vmem [shape: f32[128,512], index: 1, kind: input, shape index: {}]
  %s2 = inlined_call_operand.vmem [shape: f32[1,512], index: 2, kind: input, shape index: {}]
  %s3 = inlined_call_operand.vmem [shape: f32[2,512], index: 3, kind: output, shape index: {}]
  %s4 = sld [smem:[#allocation0]]
  $region22: #{dgcnn_forward.21} parent=0
    _
  %s6 = ssub.s32 1, %s4
  %s7 = scalar_select 0, %s6, %s4
  // Predicated region
  $region2: #{dgcnn_forward.21} parent=0 // pred_check
    _
  $region3: #{dgcnn_forward.21} parent=0 // pred_check_branch
    %9 = sbr.rel (0) target = $region5
  $region4: #{dgcnn_forward.21} parent=0 // pred_region
    _
  $region5: #{dgcnn_forward.21} parent=0 // pred_fallthru
    _
  // Predicated region
  $region6: #{dgcnn_forward.21} parent=0 // pred_check
    _
  $region7: #{dgcnn_forward.21} parent=0 // pred_check_branch
    %11 = sbr.rel (0) target = $region9
  $region8: #{dgcnn_forward.21} parent=0 // pred_region
    _
  $region9: #{dgcnn_forward.21} parent=0 // pred_fallthru
    _
  // Predicated region
  $region10: #{dgcnn_forward.21} parent=0 // pred_check
    _
  $region11: #{dgcnn_forward.21} parent=0 // pred_check_branch
    %13 = sbr.rel (0) target = $region13
  $region12: #{dgcnn_forward.21} parent=0 // pred_region
    _
  $region13: #{dgcnn_forward.21} parent=0 // pred_fallthru
    _
  %v14 = vld [vmem:[%s0] sm:$0x3]
  %v15 = vld [vmem:[%s1] sm:$0xff]
  %v16 = vld [vmem:[%s1 + $0x8] sm:$0xff]
  %v17 = vld [vmem:[%s1 + $0x10] sm:$0xff]
  %v18 = vld [vmem:[%s1 + $0x18] sm:$0xff]
  %v19 = vld [vmem:[%s1 + $0x20] sm:$0xff]
  %v20 = vld [vmem:[%s1 + $0x28] sm:$0xff]
  %v21 = vld [vmem:[%s1 + $0x30] sm:$0xff]
  %v22 = vld [vmem:[%s1 + $0x38] sm:$0xff]
  %v23 = vld [vmem:[%s1 + $0x40] sm:$0xff]
  %v24 = vld [vmem:[%s1 + $0x48] sm:$0xff]
  %v25 = vld [vmem:[%s1 + $0x50] sm:$0xff]
  %v26 = vld [vmem:[%s1 + $0x58] sm:$0xff]
  %v27 = vld [vmem:[%s1 + $0x60] sm:$0xff]
  %v28 = vld [vmem:[%s1 + $0x68] sm:$0xff]
  %v29 = vld [vmem:[%s1 + $0x70] sm:$0xff]
  %v30 = vld [vmem:[%s1 + $0x78] sm:$0xff]
  %v31 = vld [vmem:[%s1 + $0x80] sm:$0xff]
  %v32 = vld [vmem:[%s1 + $0x88] sm:$0xff]
  %v33 = vld [vmem:[%s1 + $0x90] sm:$0xff]
  %v34 = vld [vmem:[%s1 + $0x98] sm:$0xff]
  %v35 = vld [vmem:[%s1 + $0xa0] sm:$0xff]
  %v36 = vld [vmem:[%s1 + $0xa8] sm:$0xff]
  %v37 = vld [vmem:[%s1 + $0xb0] sm:$0xff]
  %v38 = vld [vmem:[%s1 + $0xb8] sm:$0xff]
  %v39 = vld [vmem:[%s1 + $0xc0] sm:$0xff]
  %v40 = vld [vmem:[%s1 + $0xc8] sm:$0xff]
  %v41 = vld [vmem:[%s1 + $0xd0] sm:$0xff]
  %v42 = vld [vmem:[%s1 + $0xd8] sm:$0xff]
  %v43 = vld [vmem:[%s1 + $0xe0] sm:$0xff]
  %v44 = vld [vmem:[%s1 + $0xe8] sm:$0xff]
  %v45 = vld [vmem:[%s1 + $0xf0] sm:$0xff]
  %v46 = vld [vmem:[%s1 + $0xf8] sm:$0xff]
  %v47 = vld [vmem:[%s1 + $0x100] sm:$0xff]
  %v48 = vld [vmem:[%s1 + $0x108] sm:$0xff]
  %v49 = vld [vmem:[%s1 + $0x110] sm:$0xff]
  %v50 = vld [vmem:[%s1 + $0x118] sm:$0xff]
  %v51 = vld [vmem:[%s1 + $0x120] sm:$0xff]
  %v52 = vld [vmem:[%s1 + $0x128] sm:$0xff]
  %v53 = vld [vmem:[%s1 + $0x130] sm:$0xff]
  %v54 = vld [vmem:[%s1 + $0x138] sm:$0xff]
  %v55 = vld [vmem:[%s1 + $0x140] sm:$0xff]
  %v56 = vld [vmem:[%s1 + $0x148] sm:$0xff]
  %v57 = vld [vmem:[%s1 + $0x150] sm:$0xff]
  %v58 = vld [vmem:[%s1 + $0x158] sm:$0xff]
  %v59 = vld [vmem:[%s1 + $0x160] sm:$0xff]
  %v60 = vld [vmem:[%s1 + $0x168] sm:$0xff]
  %v61 = vld [vmem:[%s1 + $0x170] sm:$0xff]
  %v62 = vld [vmem:[%s1 + $0x178] sm:$0xff]
  %v63 = vld [vmem:[%s1 + $0x180] sm:$0xff]
  %v64 = vld [vmem:[%s1 + $0x188] sm:$0xff]
  %v65 = vld [vmem:[%s1 + $0x190] sm:$0xff]
  %v66 = vld [vmem:[%s1 + $0x198] sm:$0xff]
  %v67 = vld [vmem:[%s1 + $0x1a0] sm:$0xff]
  %v68 = vld [vmem:[%s1 + $0x1a8] sm:$0xff]
  %v69 = vld [vmem:[%s1 + $0x1b0] sm:$0xff]
  %v70 = vld [vmem:[%s1 + $0x1b8] sm:$0xff]
  %v71 = vld [vmem:[%s1 + $0x1c0] sm:$0xff]
  %v72 = vld [vmem:[%s1 + $0x1c8] sm:$0xff]
  %v73 = vld [vmem:[%s1 + $0x1d0] sm:$0xff]
  %v74 = vld [vmem:[%s1 + $0x1d8] sm:$0xff]
  %v75 = vld [vmem:[%s1 + $0x1e0] sm:$0xff]
  %v76 = vld [vmem:[%s1 + $0x1e8] sm:$0xff]
  %v77 = vld [vmem:[%s1 + $0x1f0] sm:$0xff]
  %v78 = vld [vmem:[%s1 + $0x1f8] sm:$0xff]
  %v79 = vld [vmem:[%s2] sm:$0xf]
  %v81 = vlaneseq
  %v82 = vshrl.u32 %v81, 7
  %v83 = vsub.s32 0, %v82
  %v84 = vrot.slane %v79, %v83
  %v85 = vlaneseq
  %v86 = vshrl.u32 %v85, 7
  %v87 = vsub.s32 1, %v86
  %v88 = vrot.slane %v79, %v87
  %v89 = vlaneseq
  %v90 = vshrl.u32 %v89, 7
  %v91 = vsub.s32 2, %v90
  %v92 = vrot.slane %v79, %v91
  %v93 = vlaneseq
  %v94 = vshrl.u32 %v93, 7
  %v95 = vsub.s32 3, %v94
  %v96 = vrot.slane %v79, %v95
  %101 = vmatprep.subr.mxu0 %v76
  %102 = vmatpush1.msra.mxu0 %v75
  %103 = vmatprep.subr.mxu0 %v72
  %104 = vmatpush1.msra.mxu0 %v71
  %105 = vmatprep.subr.mxu0 %v68
  %106 = vmatpush1.msra.mxu0 %v67
  %107 = vmatprep.subr.mxu0 %v64
  %108 = vmatpush1.msra.mxu0 %v63
  %109 = vmatprep.subr.mxu0 %v60
  %110 = vmatpush1.msra.mxu0 %v59
  %111 = vmatprep.subr.mxu0 %v56
  %112 = vmatpush1.msra.mxu0 %v55
  %113 = vmatprep.subr.mxu0 %v52
  %114 = vmatpush1.msra.mxu0 %v51
  %115 = vmatprep.subr.mxu0 %v48
  %116 = vmatpush1.msra.mxu0 %v47
  %117 = vmatprep.subr.mxu0 %v44
  %118 = vmatpush1.msra.mxu0 %v43
  %119 = vmatprep.subr.mxu0 %v40
  %120 = vmatpush1.msra.mxu0 %v39
  %121 = vmatprep.subr.mxu0 %v36
  %122 = vmatpush1.msra.mxu0 %v35
  %123 = vmatprep.subr.mxu0 %v32
  %124 = vmatpush1.msra.mxu0 %v31
  %125 = vmatprep.subr.mxu0 %v28
  %126 = vmatpush1.msra.mxu0 %v27
  %127 = vmatprep.subr.mxu0 %v24
  %128 = vmatpush1.msra.mxu0 %v23
  %129 = vmatprep.subr.mxu0 %v20
  %130 = vmatpush1.msra.mxu0 %v19
  %131 = vmatprep.subr.mxu0 %v16
  %132 = vmatpush1.msra.mxu0 %v15
  %133 = vmatprep.subr.mxu0 0.0
  %134 = vmatpush2.msra.mxu0 0.0
  %135 = vmatprep.subr.mxu0 0.0
  %136 = vmatpush2.msra.mxu0 0.0
  %137 = vmatprep.subr.mxu0 0.0
  %138 = vmatpush2.msra.mxu0 0.0
  %139 = vmatprep.subr.mxu0 0.0
  %140 = vmatpush2.msra.mxu0 0.0
  %141 = vmatprep.subr.mxu0 0.0
  %142 = vmatpush2.msra.mxu0 0.0
  %143 = vmatprep.subr.mxu0 0.0
  %144 = vmatpush2.msra.mxu0 0.0
  %145 = vmatprep.subr.mxu0 0.0
  %146 = vmatpush2.msra.mxu0 0.0
  %147 = vmatprep.subr.mxu0 0.0
  %148 = vmatpush2.msra.mxu0 0.0
  %149 = vmatprep.subr.mxu0 0.0
  %150 = vmatpush2.msra.mxu0 0.0
  %151 = vmatprep.subr.mxu0 0.0
  %152 = vmatpush2.msra.mxu0 0.0
  %153 = vmatprep.subr.mxu0 0.0
  %154 = vmatpush2.msra.mxu0 0.0
  %155 = vmatprep.subr.mxu0 0.0
  %156 = vmatpush2.msra.mxu0 0.0
  %157 = vmatprep.subr.mxu0 0.0
  %158 = vmatpush2.msra.mxu0 0.0
  %159 = vmatprep.subr.mxu0 0.0
  %160 = vmatpush2.msra.mxu0 0.0
  %161 = vmatprep.subr.mxu0 0.0
  %162 = vmatpush2.msra.mxu0 0.0
  %163 = vmatprep.subr.mxu0 0.0
  %164 = vmatpush2.msra.mxu0 0.0
  %165 = vmatprep.mubr.f32.mxu0 0.0
  %166 = vmatmul.mubr.f32.gmra.mxu0 %v14
  %v167 = vpop.f32.mrf.mxu0
  %v168 = vadd.f32 %v84, %v167
  %v169 = vpop.f32.mrf.mxu0
  %v170 = vadd.f32 %v88, %v169
  %171 = vdwg.mxu0
  %172 = vmatprep.subr.mxu0 %v78
  %173 = vmatpush1.msra.mxu0 %v77
  %174 = vmatprep.subr.mxu0 %v74
  %175 = vmatpush1.msra.mxu0 %v73
  %176 = vmatprep.subr.mxu0 %v70
  %177 = vmatpush1.msra.mxu0 %v69
  %178 = vmatprep.subr.mxu0 %v66
  %179 = vmatpush1.msra.mxu0 %v65
  %180 = vmatprep.subr.mxu0 %v62
  %181 = vmatpush1.msra.mxu0 %v61
  %182 = vmatprep.subr.mxu0 %v58
  %183 = vmatpush1.msra.mxu0 %v57
  %184 = vmatprep.subr.mxu0 %v54
  %185 = vmatpush1.msra.mxu0 %v53
  %186 = vmatprep.subr.mxu0 %v50
  %187 = vmatpush1.msra.mxu0 %v49
  %188 = vmatprep.subr.mxu0 %v46
  %189 = vmatpush1.msra.mxu0 %v45
  %190 = vmatprep.subr.mxu0 %v42
  %191 = vmatpush1.msra.mxu0 %v41
  %192 = vmatprep.subr.mxu0 %v38
  %193 = vmatpush1.msra.mxu0 %v37
  %194 = vmatprep.subr.mxu0 %v34
  %195 = vmatpush1.msra.mxu0 %v33
  %196 = vmatprep.subr.mxu0 %v30
  %197 = vmatpush1.msra.mxu0 %v29
  %198 = vmatprep.subr.mxu0 %v26
  %199 = vmatpush1.msra.mxu0 %v25
  %200 = vmatprep.subr.mxu0 %v22
  %201 = vmatpush1.msra.mxu0 %v21
  %202 = vmatprep.subr.mxu0 %v18
  %203 = vmatpush1.msra.mxu0 %v17
  %204 = vmatprep.subr.mxu0 0.0
  %205 = vmatpush2.msra.mxu0 0.0
  %206 = vmatprep.subr.mxu0 0.0
  %207 = vmatpush2.msra.mxu0 0.0
  %208 = vmatprep.subr.mxu0 0.0
  %209 = vmatpush2.msra.mxu0 0.0
  %210 = vmatprep.subr.mxu0 0.0
  %211 = vmatpush2.msra.mxu0 0.0
  %212 = vmatprep.subr.mxu0 0.0
  %213 = vmatpush2.msra.mxu0 0.0
  %214 = vmatprep.subr.mxu0 0.0
  %215 = vmatpush2.msra.mxu0 0.0
  %216 = vmatprep.subr.mxu0 0.0
  %217 = vmatpush2.msra.mxu0 0.0
  %218 = vmatprep.subr.mxu0 0.0
  %219 = vmatpush2.msra.mxu0 0.0
  %220 = vmatprep.subr.mxu0 0.0
  %221 = vmatpush2.msra.mxu0 0.0
  %222 = vmatprep.subr.mxu0 0.0
  %223 = vmatpush2.msra.mxu0 0.0
  %224 = vmatprep.subr.mxu0 0.0
  %225 = vmatpush2.msra.mxu0 0.0
  %226 = vmatprep.subr.mxu0 0.0
  %227 = vmatpush2.msra.mxu0 0.0
  %228 = vmatprep.subr.mxu0 0.0
  %229 = vmatpush2.msra.mxu0 0.0
  %230 = vmatprep.subr.mxu0 0.0
  %231 = vmatpush2.msra.mxu0 0.0
  %232 = vmatprep.subr.mxu0 0.0
  %233 = vmatpush2.msra.mxu0 0.0
  %234 = vmatprep.subr.mxu0 0.0
  %235 = vmatpush2.msra.mxu0 0.0
  %236 = vmatprep.mubr.f32.mxu0 0.0
  %237 = vmatmul.mubr.f32.gmra.mxu0 %v14
  %v238 = vpop.f32.mrf.mxu0
  %v239 = vadd.f32 %v92, %v238
  %v240 = vpop.f32.mrf.mxu0
  %v241 = vadd.f32 %v96, %v240
  %242 = vdwg.mxu0
  %vm243 = vcmp.ge.f32.partialorder %v168, 0.0
  %vm244 = vcmp.ge.f32.partialorder %v170, 0.0
  %vm245 = vcmp.ge.f32.partialorder %v239, 0.0
  %vm246 = vcmp.ge.f32.partialorder %v241, 0.0
  %v247 = vmul.f32 %v168, 0.2
  %v248 = vmul.f32 %v170, 0.2
  %v249 = vmul.f32 %v239, 0.2
  %v250 = vmul.f32 %v241, 0.2
  %v251 = vsel %vm243, %v168, %v247
  %v252 = vsel %vm244, %v170, %v248
  %v253 = vsel %vm245, %v239, %v249
  %v254 = vsel %vm246, %v241, %v250
  %v259 = vcombine.low %v251, %v252
  %v260 = vcombine.low %v253, %v254
  %v262 = vunpack.c.l.s4 1983009808
  %v263 = vunpack.c.0.s8 %v262
  %v264 = vlaneseq
  %v265 = vshrl.u32 %v264, 7
  %v266 = vsub.s32 %v263, %v265
  %v267 = vrot.slane %v259, %v266
  %v269 = vunpack.c.l.s4 1983009808
  %v270 = vunpack.c.0.s8 %v269
  %v271 = vlaneseq
  %v272 = vshrl.u32 %v271, 7
  %v273 = vsub.s32 %v270, %v272
  %v274 = vrot.slane %v260, %v273
  %v275 = vcombine.low %v267, %v274
  %277 = vst [vmem:[%s3] sm:$0xff] %v275
  // Predicated region
  $region14: #{dgcnn_forward.21} parent=0 // pred_check
    _
  $region15: #{dgcnn_forward.21} parent=0 // pred_check_branch
    %279 = sbr.rel (0) target = $region17
  $region16: #{dgcnn_forward.21} parent=0 // pred_region
    _
  $region17: #{dgcnn_forward.21} parent=0 // pred_fallthru
    _
  // Predicated region
  $region18: #{dgcnn_forward.21} parent=0 // pred_check
    _
  $region19: #{dgcnn_forward.21} parent=0 // pred_check_branch
    %281 = sbr.rel (0) target = $region21
  $region20: #{dgcnn_forward.21} parent=0 // pred_region
    _
  $region21: #{dgcnn_forward.21} parent=0 // pred_fallthru
    _

// kernel: dgcnn_forward.20
$region0: #{dgcnn_forward.20}
  #allocation0 [shape = 'u32[]', space=smem, size = 0x4, offset = 0x4, fixed_abs, tag = 'smem constant byte address 0x4 - core index']
  #allocation1 [shape = 'u32[144,128]{1,0:T(1,128)}', space=vmem, size = 0x12000, scoped, tag = 'internal scratch']
  #allocation2 [shape = 'f32[8,64]{1,0:T(8,128)}', space=vmem, size = 0x1000, scoped, tag = 'scratch operand']
  #allocation3 [shape = 'f32[8,64]{1,0:T(8,128)}', space=vmem, size = 0x1000, scoped, tag = 'scratch operand']
  %s0 = inlined_call_operand.vmem [shape: bf16[2,16,64], index: 0, kind: input, shape index: {}]
  %s1 = inlined_call_operand.vmem [shape: bf16[2,16,64], index: 1, kind: input, shape index: {}]
  %s2 = inlined_call_operand.vmem [shape: bf16[2,16,128], index: 2, kind: input, shape index: {}]
  %s3 = inlined_call_operand.vmem [shape: bf16[2,16,256], index: 3, kind: input, shape index: {}]
  %s4 = inlined_call_operand.vmem [shape: bf16[64,64], index: 4, kind: input, shape index: {}]
  %s5 = inlined_call_operand.vmem [shape: bf16[64,64], index: 5, kind: input, shape index: {}]
  %s6 = inlined_call_operand.vmem [shape: bf16[128,64], index: 6, kind: input, shape index: {}]
  %s7 = inlined_call_operand.vmem [shape: bf16[256,64], index: 7, kind: input, shape index: {}]
  %s8 = inlined_call_operand.vmem [shape: f32[1,64], index: 8, kind: input, shape index: {}]
  %s9 = inlined_call_operand.vmem [shape: f32[2,1,64], index: 9, kind: output, shape index: {0}]
  %s10 = inlined_call_operand.vmem [shape: f32[2,1,64], index: 10, kind: output, shape index: {1}]
  %11 = xla_tuple %s9, %s10
  %s12 = sld [smem:[#allocation0]]
  $region85: #{dgcnn_forward.20} parent=0
    _
  %s14 = ssub.s32 1, %s12
  %s15 = scalar_select 0, %s14, %s12
  loop: start=0, step=1, limit=4
  $region2: #{dgcnn_forward.20} parent=0 // loop_pre_header
    _
  $region3: #{dgcnn_forward.20} parent=0 // loop_header
    %s17 = sphi 0, %s21
    %p18 = scmp.ge.s32.totalorder %s17, 4
    %s24 = sphi 0, %s36
    %s25 = sphi 0, %s32
    %s26 = sphi 0, %s24
    %s27 = sphi 0, %s25
    %s28 = sphi 0, %s26
    %s29 = sphi 0, %s27
    %s41 = sphi 0, %s43
    %s44 = sphi 0, %s41
    %s45 = sphi 0, %s44
    %s61 = sphi 0, %s45
    %s69 = sphi 0, %s71
    %s72 = sphi 0, %s69
    %s73 = sphi 0, %s72
    %s89 = sphi 0, %s73
    %s97 = sphi 0, %s99
    %s100 = sphi 0, %s97
    %s101 = sphi 0, %s100
    %s117 = sphi 0, %s101
    %s125 = sphi 0, %s127
    %s128 = sphi 0, %s125
    %s129 = sphi 0, %s128
    %s145 = sphi 0, %s129
    %s149 = sphi 0, %s149
    %s151 = sphi 0, %s149
    %s152 = sphi 0, %s151
    %s166 = sphi 0, %s152
    %s170 = sphi 0, %s170
    %s172 = sphi 0, %s170
    %s173 = sphi 0, %s172
    %s187 = sphi 0, %s173
    %s191 = sphi 0, %s191
    %s193 = sphi 0, %s191
    %s194 = sphi 0, %s193
    %s208 = sphi 0, %s194
    %s212 = sphi 0, %s212
    %s214 = sphi 0, %s212
    %s215 = sphi 0, %s214
    %s229 = sphi 0, %s215
    %s233 = sphi 0, %s233
    %s235 = sphi 0, %s233
    %s236 = sphi 0, %s235
    %s250 = sphi 0, %s236
    %s256 = sphi 0, %s258
    %s259 = sphi 0, %s256
    %s260 = sphi 0, %s259
    %s276 = sphi 0, %s260
    %s282 = sphi 0, %s284
    %s285 = sphi 0, %s282
    %s286 = sphi 0, %s285
    %s302 = sphi 0, %s286
  $region4: #{dgcnn_forward.20} parent=0 // loop_header_branch
    %20 = sbr.rel (%p18) target = $region8
  $region5: #{dgcnn_forward.20} parent=0 // loop_body
    %s22 = ssub.s32 %s17, 1
    %s23 = ssub.s32 %s17, 2
    %s30 = sadd.s32 1, %s25
    %p31 = scmp.ge.s32.totalorder %s30, 1
    %s32 = scalar_select %p31, 0, %s30
    %s33 = sadd.s32 1, %s24
    %s34 = scalar_select %p31, %s33, %s24
    %p35 = scmp.ge.s32.totalorder %s34, 2
    %s36 = scalar_select %p35, 0, %s34
    %s37 = ssub.s32 %s24, %s36
    %s38 = ssub.s32 %s25, %s32
    %s39 = sor.u32 %s37, %s38
    %p40 = scmp.eq.s32.totalorder %s39, 0
    %s42 = sadd.s32 %s41, 1
    %s43 = scalar_select %p40, %s41, %s42
    %p46 = pneg %p40
    %p47 = scmp.eq.s32.totalorder %s17, 1
    %p48 = por %p46, %p47
    %p49 = scmp.ne.s32.totalorder %s41, %s44
    %p50 = scmp.eq.s32.totalorder %s17, 0
    %p51 = por %p49, %p50
    %p52 = scmp.ne.s32.totalorder %s41, %s44
    %p53 = scmp.eq.s32.totalorder %s22, 1
    %p54 = por %p52, %p53
    %p55 = scmp.ne.s32.totalorder %s44, %s45
    %p56 = scmp.eq.s32.totalorder %s22, 0
    %p57 = por %p55, %p56
    %p58 = scmp.ne.s32.totalorder %s44, %s45
    %p59 = scmp.eq.s32.totalorder %s23, 1
    %p60 = por %p58, %p59
    %p62 = scmp.ne.s32.totalorder %s45, %s61
    %p63 = scmp.eq.s32.totalorder %s23, 0
    %p64 = por %p62, %p63
    %s65 = ssub.s32 %s24, %s36
    %s66 = ssub.s32 %s25, %s32
    %s67 = sor.u32 %s65, %s66
    %p68 = scmp.eq.s32.totalorder %s67, 0
    %s70 = sadd.s32 %s69, 1
    %s71 = scalar_select %p68, %s69, %s70
    %p74 = pneg %p68
    %p75 = scmp.eq.s32.totalorder %s17, 1
    %p76 = por %p74, %p75
    %p77 = scmp.ne.s32.totalorder %s69, %s72
    %p78 = scmp.eq.s32.totalorder %s17, 0
    %p79 = por %p77, %p78
    %p80 = scmp.ne.s32.totalorder %s69, %s72
    %p81 = scmp.eq.s32.totalorder %s22, 1
    %p82 = por %p80, %p81
    %p83 = scmp.ne.s32.totalorder %s72, %s73
    %p84 = scmp.eq.s32.totalorder %s22, 0
    %p85 = por %p83, %p84
    %p86 = scmp.ne.s32.totalorder %s72, %s73
    %p87 = scmp.eq.s32.totalorder %s23, 1
    %p88 = por %p86, %p87
    %p90 = scmp.ne.s32.totalorder %s73, %s89
    %p91 = scmp.eq.s32.totalorder %s23, 0
    %p92 = por %p90, %p91
    %s93 = ssub.s32 %s24, %s36
    %s94 = ssub.s32 %s25, %s32
    %s95 = sor.u32 %s93, %s94
    %p96 = scmp.eq.s32.totalorder %s95, 0
    %s98 = sadd.s32 %s97, 1
    %s99 = scalar_select %p96, %s97, %s98
    %p102 = pneg %p96
    %p103 = scmp.eq.s32.totalorder %s17, 1
    %p104 = por %p102, %p103
    %p105 = scmp.ne.s32.totalorder %s97, %s100
    %p106 = scmp.eq.s32.totalorder %s17, 0
    %p107 = por %p105, %p106
    %p108 = scmp.ne.s32.totalorder %s97, %s100
    %p109 = scmp.eq.s32.totalorder %s22, 1
    %p110 = por %p108, %p109
    %p111 = scmp.ne.s32.totalorder %s100, %s101
    %p112 = scmp.eq.s32.totalorder %s22, 0
    %p113 = por %p111, %p112
    %p114 = scmp.ne.s32.totalorder %s100, %s101
    %p115 = scmp.eq.s32.totalorder %s23, 1
    %p116 = por %p114, %p115
    %p118 = scmp.ne.s32.totalorder %s101, %s117
    %p119 = scmp.eq.s32.totalorder %s23, 0
    %p120 = por %p118, %p119
    %s121 = ssub.s32 %s24, %s36
    %s122 = ssub.s32 %s25, %s32
    %s123 = sor.u32 %s121, %s122
    %p124 = scmp.eq.s32.totalorder %s123, 0
    %s126 = sadd.s32 %s125, 1
    %s127 = scalar_select %p124, %s125, %s126
    %p130 = pneg %p124
    %p131 = scmp.eq.s32.totalorder %s17, 1
    %p132 = por %p130, %p131
    %p133 = scmp.ne.s32.totalorder %s125, %s128
    %p134 = scmp.eq.s32.totalorder %s17, 0
    %p135 = por %p133, %p134
    %p136 = scmp.ne.s32.totalorder %s125, %s128
    %p137 = scmp.eq.s32.totalorder %s22, 1
    %p138 = por %p136, %p137
    %p139 = scmp.ne.s32.totalorder %s128, %s129
    %p140 = scmp.eq.s32.totalorder %s22, 0
    %p141 = por %p139, %p140
    %p142 = scmp.ne.s32.totalorder %s128, %s129
    %p143 = scmp.eq.s32.totalorder %s23, 1
    %p144 = por %p142, %p143
    %p146 = scmp.ne.s32.totalorder %s129, %s145
    %p147 = scmp.eq.s32.totalorder %s23, 0
    %p148 = por %p146, %p147
    %s150 = sadd.s32 %s149, 1
    %p153 = scmp.eq.s32.totalorder %s17, 1
    %p154 = scmp.ne.s32.totalorder %s149, %s151
    %p155 = scmp.eq.s32.totalorder %s17, 0
    %p156 = por %p154, %p155
    %p157 = scmp.ne.s32.totalorder %s149, %s151
    %p158 = scmp.eq.s32.totalorder %s22, 1
    %p159 = por %p157, %p158
    %p160 = scmp.ne.s32.totalorder %s151, %s152
    %p161 = scmp.eq.s32.totalorder %s22, 0
    %p162 = por %p160, %p161
    %p163 = scmp.ne.s32.totalorder %s151, %s152
    %p164 = scmp.eq.s32.totalorder %s23, 1
    %p165 = por %p163, %p164
    %p167 = scmp.ne.s32.totalorder %s152, %s166
    %p168 = scmp.eq.s32.totalorder %s23, 0
    %p169 = por %p167, %p168
    %s171 = sadd.s32 %s170, 1
    %p174 = scmp.eq.s32.totalorder %s17, 1
    %p175 = scmp.ne.s32.totalorder %s170, %s172
    %p176 = scmp.eq.s32.totalorder %s17, 0
    %p177 = por %p175, %p176
    %p178 = scmp.ne.s32.totalorder %s170, %s172
    %p179 = scmp.eq.s32.totalorder %s22, 1
    %p180 = por %p178, %p179
    %p181 = scmp.ne.s32.totalorder %s172, %s173
    %p182 = scmp.eq.s32.totalorder %s22, 0
    %p183 = por %p181, %p182
    %p184 = scmp.ne.s32.totalorder %s172, %s173
    %p185 = scmp.eq.s32.totalorder %s23, 1
    %p186 = por %p184, %p185
    %p188 = scmp.ne.s32.totalorder %s173, %s187
    %p189 = scmp.eq.s32.totalorder %s23, 0
    %p190 = por %p188, %p189
    %s192 = sadd.s32 %s191, 1
    %p195 = scmp.eq.s32.totalorder %s17, 1
    %p196 = scmp.ne.s32.totalorder %s191, %s193
    %p197 = scmp.eq.s32.totalorder %s17, 0
    %p198 = por %p196, %p197
    %p199 = scmp.ne.s32.totalorder %s191, %s193
    %p200 = scmp.eq.s32.totalorder %s22, 1
    %p201 = por %p199, %p200
    %p202 = scmp.ne.s32.totalorder %s193, %s194
    %p203 = scmp.eq.s32.totalorder %s22, 0
    %p204 = por %p202, %p203
    %p205 = scmp.ne.s32.totalorder %s193, %s194
    %p206 = scmp.eq.s32.totalorder %s23, 1
    %p207 = por %p205, %p206
    %p209 = scmp.ne.s32.totalorder %s194, %s208
    %p210 = scmp.eq.s32.totalorder %s23, 0
    %p211 = por %p209, %p210
    %s213 = sadd.s32 %s212, 1
    %p216 = scmp.eq.s32.totalorder %s17, 1
    %p217 = scmp.ne.s32.totalorder %s212, %s214
    %p218 = scmp.eq.s32.totalorder %s17, 0
    %p219 = por %p217, %p218
    %p220 = scmp.ne.s32.totalorder %s212, %s214
    %p221 = scmp.eq.s32.totalorder %s22, 1
    %p222 = por %p220, %p221
    %p223 = scmp.ne.s32.totalorder %s214, %s215
    %p224 = scmp.eq.s32.totalorder %s22, 0
    %p225 = por %p223, %p224
    %p226 = scmp.ne.s32.totalorder %s214, %s215
    %p227 = scmp.eq.s32.totalorder %s23, 1
    %p228 = por %p226, %p227
    %p230 = scmp.ne.s32.totalorder %s215, %s229
    %p231 = scmp.eq.s32.totalorder %s23, 0
    %p232 = por %p230, %p231
    %s234 = sadd.s32 %s233, 1
    %p237 = scmp.eq.s32.totalorder %s17, 1
    %p238 = scmp.ne.s32.totalorder %s233, %s235
    %p239 = scmp.eq.s32.totalorder %s17, 0
    %p240 = por %p238, %p239
    %p241 = scmp.ne.s32.totalorder %s233, %s235
    %p242 = scmp.eq.s32.totalorder %s22, 1
    %p243 = por %p241, %p242
    %p244 = scmp.ne.s32.totalorder %s235, %s236
    %p245 = scmp.eq.s32.totalorder %s22, 0
    %p246 = por %p244, %p245
    %p247 = scmp.ne.s32.totalorder %s235, %s236
    %p248 = scmp.eq.s32.totalorder %s23, 1
    %p249 = por %p247, %p248
    %p251 = scmp.ne.s32.totalorder %s236, %s250
    %p252 = scmp.eq.s32.totalorder %s23, 0
    %p253 = por %p251, %p252
    %s254 = ssub.s32 %s24, %s36
    %p255 = scmp.eq.s32.totalorder %s254, 0
    %s257 = sadd.s32 %s256, 1
    %s258 = scalar_select %p255, %s256, %s257
    %p261 = pneg %p255
    %p262 = scmp.eq.s32.totalorder %s17, 1
    %p263 = por %p261, %p262
    %p264 = scmp.ne.s32.totalorder %s256, %s259
    %p265 = scmp.eq.s32.totalorder %s17, 0
    %p266 = por %p264, %p265
    %p267 = scmp.ne.s32.totalorder %s256, %s259
    %p268 = scmp.eq.s32.totalorder %s22, 1
    %p269 = por %p267, %p268
    %p270 = scmp.ne.s32.totalorder %s259, %s260
    %p271 = scmp.eq.s32.totalorder %s22, 0
    %p272 = por %p270, %p271
    %p273 = scmp.ne.s32.totalorder %s259, %s260
    %p274 = scmp.eq.s32.totalorder %s23, 1
    %p275 = por %p273, %p274
    %p277 = scmp.ne.s32.totalorder %s260, %s276
    %p278 = scmp.eq.s32.totalorder %s23, 0
    %p279 = por %p277, %p278
    %s280 = ssub.s32 %s24, %s36
    %p281 = scmp.eq.s32.totalorder %s280, 0
    %s283 = sadd.s32 %s282, 1
    %s284 = scalar_select %p281, %s282, %s283
    %p287 = pneg %p281
    %p288 = scmp.eq.s32.totalorder %s17, 1
    %p289 = por %p287, %p288
    %p290 = scmp.ne.s32.totalorder %s282, %s285
    %p291 = scmp.eq.s32.totalorder %s17, 0
    %p292 = por %p290, %p291
    %p293 = scmp.ne.s32.totalorder %s282, %s285
    %p294 = scmp.eq.s32.totalorder %s22, 1
    %p295 = por %p293, %p294
    %p296 = scmp.ne.s32.totalorder %s285, %s286
    %p297 = scmp.eq.s32.totalorder %s22, 0
    %p298 = por %p296, %p297
    %p299 = scmp.ne.s32.totalorder %s285, %s286
    %p300 = scmp.eq.s32.totalorder %s23, 1
    %p301 = por %p299, %p300
    %p303 = scmp.ne.s32.totalorder %s286, %s302
    %p304 = scmp.eq.s32.totalorder %s23, 0
    %p305 = por %p303, %p304
    %p306 = scmp.le.s32.totalorder 1, %s17
    %p307 = scmp.lt.s32.totalorder %s17, 3
    %p308 = pnand %p306, %p307
    %p309 = pneg %p308
    // Predicated region
    $region9: #{dgcnn_forward.20} parent=5 // pred_check
      _
    $region10: #{dgcnn_forward.20} parent=5 // pred_check_branch
      %311 = sbr.rel (%p308) target = $region12
    $region11: #{dgcnn_forward.20} parent=5 // pred_region
      %s312 = ssub.s32 %s17, 1
      // Predicated region
      $region13: #{dgcnn_forward.20} parent=11 // pred_check
        %p313 = pneg %p162
      $region14: #{dgcnn_forward.20} parent=11 // pred_check_branch
        %315 = sbr.rel (%p313) target = $region16
      $region15: #{dgcnn_forward.20} parent=11 // pred_region
        _
      $region16: #{dgcnn_forward.20} parent=11 // pred_fallthru
        _
      // Predicated region
      $region17: #{dgcnn_forward.20} parent=11 // pred_check
        %p316 = pneg %p183
      $region18: #{dgcnn_forward.20} parent=11 // pred_check_branch
        %318 = sbr.rel (%p316) target = $region20
      $region19: #{dgcnn_forward.20} parent=11 // pred_region
        _
      $region20: #{dgcnn_forward.20} parent=11 // pred_fallthru
        _
      // Predicated region
      $region21: #{dgcnn_forward.20} parent=11 // pred_check
        %p319 = pneg %p204
      $region22: #{dgcnn_forward.20} parent=11 // pred_check_branch
        %321 = sbr.rel (%p319) target = $region24
      $region23: #{dgcnn_forward.20} parent=11 // pred_region
        _
      $region24: #{dgcnn_forward.20} parent=11 // pred_fallthru
        _
      // Predicated region
      $region25: #{dgcnn_forward.20} parent=11 // pred_check
        %p322 = pneg %p225
      $region26: #{dgcnn_forward.20} parent=11 // pred_check_branch
        %324 = sbr.rel (%p322) target = $region28
      $region27: #{dgcnn_forward.20} parent=11 // pred_region
        _
      $region28: #{dgcnn_forward.20} parent=11 // pred_fallthru
        _
      // Predicated region
      $region29: #{dgcnn_forward.20} parent=11 // pred_check
        %p325 = pneg %p246
      $region30: #{dgcnn_forward.20} parent=11 // pred_check_branch
        %327 = sbr.rel (%p325) target = $region32
      $region31: #{dgcnn_forward.20} parent=11 // pred_region
        _
      $region32: #{dgcnn_forward.20} parent=11 // pred_fallthru
        _
    $region12: #{dgcnn_forward.20} parent=5 // pred_fallthru
      _
    %p328 = scmp.lt.s32.totalorder %s17, 2
    // Predicated region
    $region33: #{dgcnn_forward.20} parent=5 // pred_check
      %p329 = pneg %p328
    $region34: #{dgcnn_forward.20} parent=5 // pred_check_branch
      %331 = sbr.rel (%p329) target = $region36
    $region35: #{dgcnn_forward.20} parent=5 // pred_region
      // Predicated region
      $region37: #{dgcnn_forward.20} parent=35 // pred_check
        %p332 = pneg %p51
      $region38: #{dgcnn_forward.20} parent=35 // pred_check_branch
        %334 = sbr.rel (%p332) target = $region40
      $region39: #{dgcnn_forward.20} parent=35 // pred_region
        %s335 = smul.u32 2, %s25
        %p336 = scmp.lt.s32.totalorder %s24, 1
        %s337 = scalar_select %p336, %s24, 1
        %p338 = scmp.lt.s32.totalorder %s335, 1
        %s339 = scalar_select %p338, %s335, 1
        %s340 = smul.addr %s337, 2
        %s341 = sadd.s32 %s339, %s340
        %s342 = smul.addr %s341, 4
        %s343 = scalar_lea.vmem %s0, %s342
        %s344 = smul.u32 2, %s25
      $region40: #{dgcnn_forward.20} parent=35 // pred_fallthru
        _
      // Predicated region
      $region41: #{dgcnn_forward.20} parent=35 // pred_check
        %p345 = pneg %p79
      $region42: #{dgcnn_forward.20} parent=35 // pred_check_branch
        %347 = sbr.rel (%p345) target = $region44
      $region43: #{dgcnn_forward.20} parent=35 // pred_region
        %s348 = smul.u32 2, %s25
        %p349 = scmp.lt.s32.totalorder %s24, 1
        %s350 = scalar_select %p349, %s24, 1
        %p351 = scmp.lt.s32.totalorder %s348, 1
        %s352 = scalar_select %p351, %s348, 1
        %s353 = smul.addr %s350, 2
        %s354 = sadd.s32 %s352, %s353
        %s355 = smul.addr %s354, 4
        %s356 = scalar_lea.vmem %s1, %s355
        %s357 = smul.u32 2, %s25
      $region44: #{dgcnn_forward.20} parent=35 // pred_fallthru
        _
      // Predicated region
      $region45: #{dgcnn_forward.20} parent=35 // pred_check
        %p358 = pneg %p107
      $region46: #{dgcnn_forward.20} parent=35 // pred_check_branch
        %360 = sbr.rel (%p358) target = $region48
      $region47: #{dgcnn_forward.20} parent=35 // pred_region
        %s361 = smul.u32 2, %s25
        %p362 = scmp.lt.s32.totalorder %s24, 1
        %s363 = scalar_select %p362, %s24, 1
        %p364 = scmp.lt.s32.totalorder %s361, 1
        %s365 = scalar_select %p364, %s361, 1
        %s366 = smul.addr %s363, 2
        %s367 = sadd.s32 %s365, %s366
        %s368 = smul.addr %s367, 4
        %s369 = scalar_lea.vmem %s2, %s368
        %s370 = smul.u32 2, %s25
      $region48: #{dgcnn_forward.20} parent=35 // pred_fallthru
        _
      // Predicated region
      $region49: #{dgcnn_forward.20} parent=35 // pred_check
        %p371 = pneg %p135
      $region50: #{dgcnn_forward.20} parent=35 // pred_check_branch
        %373 = sbr.rel (%p371) target = $region52
      $region51: #{dgcnn_forward.20} parent=35 // pred_region
        %s374 = smul.u32 2, %s25
        %p375 = scmp.lt.s32.totalorder %s24, 1
        %s376 = scalar_select %p375, %s24, 1
        %p377 = scmp.lt.s32.totalorder %s374, 1
        %s378 = scalar_select %p377, %s374, 1
        %s379 = smul.addr %s378, 2
        %s380 = smul.addr %s376, 4
        %s381 = sadd.s32 %s379, %s380
        %s382 = smul.addr %s381, 4
        %s383 = scalar_lea.vmem %s3, %s382
        %s384 = smul.u32 2, %s25
      $region52: #{dgcnn_forward.20} parent=35 // pred_fallthru
        _
    $region36: #{dgcnn_forward.20} parent=5 // pred_fallthru
      _
    %p385 = scmp.le.s32.totalorder 1, %s17
    %p386 = scmp.lt.s32.totalorder %s17, 3
    %p387 = pnand %p385, %p386
    %p388 = pneg %p387
    // Predicated region
    $region53: #{dgcnn_forward.20} parent=5 // pred_check
      _
    $region54: #{dgcnn_forward.20} parent=5 // pred_check_branch
      %390 = sbr.rel (%p387) target = $region56
    $region55: #{dgcnn_forward.20} parent=5 // pred_region
      %s391 = ssub.s32 %s17, 1
      %s392 = smul.u32 2, %s27
      %p393 = scmp.lt.s32.totalorder %s26, 1
      %s394 = scalar_select %p393, %s26, 1
      %p395 = scmp.lt.s32.totalorder %s392, 1
      %s396 = scalar_select %p395, %s392, 1
      %s397 = smul.addr %s394, 2
      %s398 = sadd.s32 %s396, %s397
      %s399 = smul.addr %s398, 4
      %s400 = scalar_lea.vmem %s0, %s399
      %p401 = pneg %p57
      %p402 = pneg %p54
      %s403 = smul.u32 2, %s27
      %p404 = scmp.lt.s32.totalorder %s26, 1
      %s405 = scalar_select %p404, %s26, 1
      %p406 = scmp.lt.s32.totalorder %s403, 1
      %s407 = scalar_select %p406, %s403, 1
      %s408 = smul.addr %s405, 2
      %s409 = sadd.s32 %s407, %s408
      %s410 = smul.addr %s409, 4
      %s411 = scalar_lea.vmem %s1, %s410
      %p412 = pneg %p85
      %p413 = pneg %p82
      %s414 = smul.u32 2, %s27
      %p415 = scmp.lt.s32.totalorder %s26, 1
      %s416 = scalar_select %p415, %s26, 1
      %p417 = scmp.lt.s32.totalorder %s414, 1
      %s418 = scalar_select %p417, %s414, 1
      %s419 = smul.addr %s416, 2
      %s420 = sadd.s32 %s418, %s419
      %s421 = smul.addr %s420, 4
      %s422 = scalar_lea.vmem %s2, %s421
      %p423 = pneg %p113
      %p424 = pneg %p110
      %s425 = smul.u32 2, %s27
      %p426 = scmp.lt.s32.totalorder %s26, 1
      %s427 = scalar_select %p426, %s26, 1
      %p428 = scmp.lt.s32.totalorder %s425, 1
      %s429 = scalar_select %p428, %s425, 1
      %s430 = smul.addr %s429, 2
      %s431 = smul.addr %s427, 4
      %s432 = sadd.s32 %s430, %s431
      %s433 = smul.addr %s432, 4
      %s434 = scalar_lea.vmem %s3, %s433
      %p435 = pneg %p141
      %p436 = pneg %p138
      %p437 = pneg %p162
      %p438 = pneg %p159
      %p439 = pneg %p183
      %p440 = pneg %p180
      %p441 = pneg %p204
      %p442 = pneg %p201
      %p443 = pneg %p225
      %p444 = pneg %p222
      %p445 = pneg %p246
      %p446 = pneg %p243
      %p447 = pneg %p272
      %p448 = pneg %p269
      %p449 = scmp.lt.s32.totalorder %s26, 1
      %s450 = scalar_select %p449, %s26, 1
      %s451 = scalar_lea.vmem %s9, %s450
      %p452 = pneg %p298
      %p453 = pneg %p295
      %p454 = scmp.lt.s32.totalorder %s26, 1
      %s455 = scalar_select %p454, %s26, 1
      %s456 = scalar_lea.vmem %s10, %s455
      %s457 = smul.u32 2, %s27
      %p458 = scmp.lt.s32.totalorder %s26, 1
      %s459 = scalar_select %p458, %s26, 1
      %p460 = scmp.lt.s32.totalorder %s457, 1
      %s461 = scalar_select %p460, %s457, 1
      %s462 = smul.addr %s459, 2
      %s463 = sadd.s32 %s461, %s462
      %s464 = smul.addr %s463, 4
      %s465 = scalar_lea.vmem %s0, %s464
      %s466 = smul.u32 2, %s27
      %s467 = smul.u32 2, %s27
      %p468 = scmp.lt.s32.totalorder %s26, 1
      %s469 = scalar_select %p468, %s26, 1
      %p470 = scmp.lt.s32.totalorder %s467, 1
      %s471 = scalar_select %p470, %s467, 1
      %s472 = smul.addr %s469, 2
      %s473 = sadd.s32 %s471, %s472
      %s474 = smul.addr %s473, 4
      %s475 = scalar_lea.vmem %s1, %s474
      %s476 = smul.u32 2, %s27
      %s477 = smul.u32 2, %s27
      %p478 = scmp.lt.s32.totalorder %s26, 1
      %s479 = scalar_select %p478, %s26, 1
      %p480 = scmp.lt.s32.totalorder %s477, 1
      %s481 = scalar_select %p480, %s477, 1
      %s482 = smul.addr %s479, 2
      %s483 = sadd.s32 %s481, %s482
      %s484 = smul.addr %s483, 4
      %s485 = scalar_lea.vmem %s2, %s484
      %s486 = smul.u32 2, %s27
      %s487 = smul.u32 2, %s27
      %p488 = scmp.lt.s32.totalorder %s26, 1
      %s489 = scalar_select %p488, %s26, 1
      %p490 = scmp.lt.s32.totalorder %s487, 1
      %s491 = scalar_select %p490, %s487, 1
      %s492 = smul.addr %s491, 2
      %s493 = smul.addr %s489, 4
      %s494 = sadd.s32 %s492, %s493
      %s495 = smul.addr %s494, 4
      %s496 = scalar_lea.vmem %s3, %s495
      %s497 = smul.u32 2, %s27
      %p498 = scmp.lt.s32.totalorder %s26, 1
      %s499 = scalar_select %p498, %s26, 1
      %s500 = scalar_lea.vmem %s9, %s499
      %p501 = scmp.lt.s32.totalorder %s26, 1
      %s502 = scalar_select %p501, %s26, 1
      %s503 = scalar_lea.vmem %s10, %s502
      %p505 = scmp.eq.s32.totalorder %s27, 0
      // Predicated region
      $region57: #{dgcnn_forward.20} parent=55 // pred_check
        %p506 = pneg %p505
      $region58: #{dgcnn_forward.20} parent=55 // pred_check_branch
        %508 = sbr.rel (%p506) target = $region60
      $region59: #{dgcnn_forward.20} parent=55 // pred_region
        %vm509 = vcmask 523264
        %510 = vst.msk [vmem:[#allocation2] sm:$0xff] %vm509, -inf
        %511 = vst.msk [vmem:[#allocation3] sm:$0xff] %vm509, 0.0
      $region60: #{dgcnn_forward.20} parent=55 // pred_fallthru
        _
      %v512 = vld [vmem:[%s465] sm:$0xf]
      %v513 = vld [vmem:[%s465 + $0x4] sm:$0xf]
      %v514 = vld [vmem:[%s4] sm:$0xf]
      %v515 = vld [vmem:[%s4 + $0x4] sm:$0xf]
      %v516 = vld [vmem:[%s4 + $0x8] sm:$0xf]
      %v517 = vld [vmem:[%s4 + $0xc] sm:$0xf]
      %v518 = vld [vmem:[%s4 + $0x10] sm:$0xf]
      %v519 = vld [vmem:[%s4 + $0x14] sm:$0xf]
      %v520 = vld [vmem:[%s4 + $0x18] sm:$0xf]
      %v521 = vld [vmem:[%s4 + $0x1c] sm:$0xf]
      %v522 = vld [vmem:[%s475] sm:$0xf]
      %v523 = vld [vmem:[%s475 + $0x4] sm:$0xf]
      %v524 = vld [vmem:[%s5] sm:$0xf]
      %v525 = vld [vmem:[%s5 + $0x4] sm:$0xf]
      %v526 = vld [vmem:[%s5 + $0x8] sm:$0xf]
      %v527 = vld [vmem:[%s5 + $0xc] sm:$0xf]
      %v528 = vld [vmem:[%s5 + $0x10] sm:$0xf]
      %v529 = vld [vmem:[%s5 + $0x14] sm:$0xf]
      %v530 = vld [vmem:[%s5 + $0x18] sm:$0xf]
      %v531 = vld [vmem:[%s5 + $0x1c] sm:$0xf]
      %v534 = vunpack.c.l.b16 %v522
      %v535 = vunpack.c.l.b16 %v523
      %v536 = vpack.c.b16 %v535, %v534
      %v545 = vunpack.c.l.b16 %v524
      %v546 = vunpack.c.l.b16 %v525
      %v547 = vunpack.c.l.b16 %v526
      %v548 = vunpack.c.l.b16 %v527
      %v549 = vunpack.c.l.b16 %v528
      %v550 = vunpack.c.l.b16 %v529
      %v551 = vunpack.c.l.b16 %v530
      %v552 = vunpack.c.l.b16 %v531
      %v553 = vpack.c.b16 %v546, %v545
      %v554 = vpack.c.b16 %v548, %v547
      %v555 = vpack.c.b16 %v550, %v549
      %v556 = vpack.c.b16 %v552, %v551
      %vm561 = vcmask 523264
      %v563 = vsel %vm561, %v536, 0
      %565 = vmatprep.subr.bf16.mxu0 0
      %566 = vmatpush1.bf16.msra.mxu0 0
      %567 = vmatprep.subr.bf16.mxu0 0
      %568 = vmatpush1.bf16.msra.mxu0 0
      %569 = vmatprep.subr.bf16.mxu0 0
      %570 = vmatpush1.bf16.msra.mxu0 0
      %571 = vmatprep.subr.bf16.mxu0 0
      %572 = vmatpush1.bf16.msra.mxu0 0
      %573 = vmatprep.subr.bf16.mxu0 0
      %574 = vmatpush1.bf16.msra.mxu0 %v556
      %575 = vmatprep.subr.bf16.mxu0 0
      %576 = vmatpush1.bf16.msra.mxu0 %v555
      %577 = vmatprep.subr.bf16.mxu0 0
      %578 = vmatpush1.bf16.msra.mxu0 %v554
      %579 = vmatprep.subr.bf16.mxu0 0
      %580 = vmatpush1.bf16.msra.mxu0 %v553
      %581 = vmatprep.subr.bf16.mxu0 0
      %582 = vmatpush2.bf16.msra.mxu0 0
      %583 = vmatprep.subr.bf16.mxu0 0
      %584 = vmatpush2.bf16.msra.mxu0 0
      %585 = vmatprep.subr.bf16.mxu0 0
      %586 = vmatpush2.bf16.msra.mxu0 0
      %587 = vmatprep.subr.bf16.mxu0 0
      %588 = vmatpush2.bf16.msra.mxu0 0
      %589 = vmatprep.subr.bf16.mxu0 0
      %590 = vmatpush2.bf16.msra.mxu0 0
      %591 = vmatprep.subr.bf16.mxu0 0
      %592 = vmatpush2.bf16.msra.mxu0 0
      %593 = vmatprep.subr.bf16.mxu0 0
      %594 = vmatpush2.bf16.msra.mxu0 0
      %595 = vmatprep.subr.bf16.mxu0 0
      %596 = vmatpush2.bf16.msra.mxu0 0
      %597 = vmatprep.mubr.bf16.mxu0 0
      %598 = vmatmul.mubr.bf16.gmra.mxu0 %v563
      %v599 = vpop.f32.mrf.mxu0
      %v600 = vadd.f32 0.0, %v599
      %v601 = vpop.f32.mrf.mxu0
      %v602 = vpop.f32.mrf.mxu0
      %v603 = vadd.f32 0.0, %v602
      %v604 = vpop.f32.mrf.mxu0
      %605 = vdwg.mxu0
      %v608 = vunpack.c.l.b16 %v512
      %v609 = vunpack.c.l.b16 %v513
      %v610 = vpack.c.b16 %v609, %v608
      %v619 = vunpack.c.l.b16 %v514
      %v620 = vunpack.c.l.b16 %v515
      %v621 = vunpack.c.l.b16 %v516
      %v622 = vunpack.c.l.b16 %v517
      %v623 = vunpack.c.l.b16 %v518
      %v624 = vunpack.c.l.b16 %v519
      %v625 = vunpack.c.l.b16 %v520
      %v626 = vunpack.c.l.b16 %v521
      %v627 = vpack.c.b16 %v620, %v619
      %v628 = vpack.c.b16 %v622, %v621
      %v629 = vpack.c.b16 %v624, %v623
      %v630 = vpack.c.b16 %v626, %v625
      %v636 = vsel %vm561, %v610, 0
      %638 = vmatprep.subr.bf16.mxu0 0
      %639 = vmatpush1.bf16.msra.mxu0 0
      %640 = vmatprep.subr.bf16.mxu0 0
      %641 = vmatpush1.bf16.msra.mxu0 0
      %642 = vmatprep.subr.bf16.mxu0 0
      %643 = vmatpush1.bf16.msra.mxu0 0
      %644 = vmatprep.subr.bf16.mxu0 0
      %645 = vmatpush1.bf16.msra.mxu0 0
      %646 = vmatprep.subr.bf16.mxu0 0
      %647 = vmatpush1.bf16.msra.mxu0 %v630
      %648 = vmatprep.subr.bf16.mxu0 0
      %649 = vmatpush1.bf16.msra.mxu0 %v629
      %650 = vmatprep.subr.bf16.mxu0 0
      %651 = vmatpush1.bf16.msra.mxu0 %v628
      %652 = vmatprep.subr.bf16.mxu0 0
      %653 = vmatpush1.bf16.msra.mxu0 %v627
      %654 = vmatprep.subr.bf16.mxu0 0
      %655 = vmatpush2.bf16.msra.mxu0 0
      %656 = vmatprep.subr.bf16.mxu0 0
      %657 = vmatpush2.bf16.msra.mxu0 0
      %658 = vmatprep.subr.bf16.mxu0 0
      %659 = vmatpush2.bf16.msra.mxu0 0
      %660 = vmatprep.subr.bf16.mxu0 0
      %661 = vmatpush2.bf16.msra.mxu0 0
      %662 = vmatprep.subr.bf16.mxu0 0
      %663 = vmatpush2.bf16.msra.mxu0 0
      %664 = vmatprep.subr.bf16.mxu0 0
      %665 = vmatpush2.bf16.msra.mxu0 0
      %666 = vmatprep.subr.bf16.mxu0 0
      %667 = vmatpush2.bf16.msra.mxu0 0
      %668 = vmatprep.subr.bf16.mxu0 0
      %669 = vmatpush2.bf16.msra.mxu0 0
      %670 = vmatprep.mubr.bf16.mxu0 0
      %671 = vmatmul.mubr.bf16.gmra.mxu0 %v636
      %v672 = vpop.f32.mrf.mxu0
      %v673 = vadd.f32 %v600, %v672
      %v674 = vpop.f32.mrf.mxu0
      %v675 = vpop.f32.mrf.mxu0
      %v676 = vadd.f32 %v603, %v675
      %v677 = vpop.f32.mrf.mxu0
      %678 = vdwg.mxu0
      %v679 = vld [vmem:[%s485] sm:$0xf]
      %v680 = vld [vmem:[%s485 + $0x4] sm:$0xf]
      %v681 = vld [vmem:[%s6] sm:$0xf]
      %v682 = vld [vmem:[%s6 + $0x4] sm:$0xf]
      %v683 = vld [vmem:[%s6 + $0x8] sm:$0xf]
      %v684 = vld [vmem:[%s6 + $0xc] sm:$0xf]
      %v685 = vld [vmem:[%s6 + $0x10] sm:$0xf]
      %v686 = vld [vmem:[%s6 + $0x14] sm:$0xf]
      %v687 = vld [vmem:[%s6 + $0x18] sm:$0xf]
      %v688 = vld [vmem:[%s6 + $0x1c] sm:$0xf]
      %v689 = vld [vmem:[%s6 + $0x20] sm:$0xf]
      %v690 = vld [vmem:[%s6 + $0x24] sm:$0xf]
      %v691 = vld [vmem:[%s6 + $0x28] sm:$0xf]
      %v692 = vld [vmem:[%s6 + $0x2c] sm:$0xf]
      %v693 = vld [vmem:[%s6 + $0x30] sm:$0xf]
      %v694 = vld [vmem:[%s6 + $0x34] sm:$0xf]
      %v695 = vld [vmem:[%s6 + $0x38] sm:$0xf]
      %v696 = vld [vmem:[%s6 + $0x3c] sm:$0xf]
      %v699 = vunpack.c.l.b16 %v679
      %v700 = vunpack.c.l.b16 %v680
      %v701 = vpack.c.b16 %v700, %v699
      %v719 = vunpack.c.l.b16 %v681
      %v720 = vunpack.c.l.b16 %v682
      %v721 = vunpack.c.l.b16 %v683
      %v722 = vunpack.c.l.b16 %v684
      %v723 = vunpack.c.l.b16 %v685
      %v724 = vunpack.c.l.b16 %v686
      %v725 = vunpack.c.l.b16 %v687
      %v726 = vunpack.c.l.b16 %v688
      %v727 = vunpack.c.l.b16 %v689
      %v728 = vunpack.c.l.b16 %v690
      %v729 = vunpack.c.l.b16 %v691
      %v730 = vunpack.c.l.b16 %v692
      %v731 = vunpack.c.l.b16 %v693
      %v732 = vunpack.c.l.b16 %v694
      %v733 = vunpack.c.l.b16 %v695
      %v734 = vunpack.c.l.b16 %v696
      %v735 = vpack.c.b16 %v720, %v719
      %v736 = vpack.c.b16 %v722, %v721
      %v737 = vpack.c.b16 %v724, %v723
      %v738 = vpack.c.b16 %v726, %v725
      %v739 = vpack.c.b16 %v728, %v727
      %v740 = vpack.c.b16 %v730, %v729
      %v741 = vpack.c.b16 %v732, %v731
      %v742 = vpack.c.b16 %v734, %v733
      %751 = vmatprep.subr.bf16.mxu0 0
      %752 = vmatpush1.bf16.msra.mxu0 %v742
      %753 = vmatprep.subr.bf16.mxu0 0
      %754 = vmatpush1.bf16.msra.mxu0 %v741
      %755 = vmatprep.subr.bf16.mxu0 0
      %756 = vmatpush1.bf16.msra.mxu0 %v740
      %757 = vmatprep.subr.bf16.mxu0 0
      %758 = vmatpush1.bf16.msra.mxu0 %v739
      %759 = vmatprep.subr.bf16.mxu0 0
      %760 = vmatpush1.bf16.msra.mxu0 %v738
      %761 = vmatprep.subr.bf16.mxu0 0
      %762 = vmatpush1.bf16.msra.mxu0 %v737
      %763 = vmatprep.subr.bf16.mxu0 0
      %764 = vmatpush1.bf16.msra.mxu0 %v736
      %765 = vmatprep.subr.bf16.mxu0 0
      %766 = vmatpush1.bf16.msra.mxu0 %v735
      %767 = vmatprep.subr.bf16.mxu0 0
      %768 = vmatpush2.bf16.msra.mxu0 0
      %769 = vmatprep.subr.bf16.mxu0 0
      %770 = vmatpush2.bf16.msra.mxu0 0
      %771 = vmatprep.subr.bf16.mxu0 0
      %772 = vmatpush2.bf16.msra.mxu0 0
      %773 = vmatprep.subr.bf16.mxu0 0
      %774 = vmatpush2.bf16.msra.mxu0 0
      %775 = vmatprep.subr.bf16.mxu0 0
      %776 = vmatpush2.bf16.msra.mxu0 0
      %777 = vmatprep.subr.bf16.mxu0 0
      %778 = vmatpush2.bf16.msra.mxu0 0
      %779 = vmatprep.subr.bf16.mxu0 0
      %780 = vmatpush2.bf16.msra.mxu0 0
      %781 = vmatprep.subr.bf16.mxu0 0
      %782 = vmatpush2.bf16.msra.mxu0 0
      %783 = vmatprep.mubr.bf16.mxu0 0
      %784 = vmatmul.mubr.bf16.gmra.mxu0 %v701
      %v785 = vpop.f32.mrf.mxu0
      %v786 = vadd.f32 0.0, %v785
      %v787 = vpop.f32.mrf.mxu0
      %v788 = vpop.f32.mrf.mxu0
      %v789 = vadd.f32 0.0, %v788
      %v790 = vpop.f32.mrf.mxu0
      %791 = vdwg.mxu0
      %v792 = vadd.f32 %v673, %v786
      %v793 = vadd.f32 %v676, %v789
      %v794 = vld [vmem:[%s496] sm:$0xff]
      %v795 = vld [vmem:[%s496 + $0x8] sm:$0xff]
      %v796 = vld [vmem:[%s7] sm:$0xf]
      %v797 = vld [vmem:[%s7 + $0x4] sm:$0xf]
      %v798 = vld [vmem:[%s7 + $0x8] sm:$0xf]
      %v799 = vld [vmem:[%s7 + $0xc] sm:$0xf]
      %v800 = vld [vmem:[%s7 + $0x10] sm:$0xf]
      %v801 = vld [vmem:[%s7 + $0x14] sm:$0xf]
      %v802 = vld [vmem:[%s7 + $0x18] sm:$0xf]
      %v803 = vld [vmem:[%s7 + $0x1c] sm:$0xf]
      %v804 = vld [vmem:[%s7 + $0x20] sm:$0xf]
      %v805 = vld [vmem:[%s7 + $0x24] sm:$0xf]
      %v806 = vld [vmem:[%s7 + $0x28] sm:$0xf]
      %v807 = vld [vmem:[%s7 + $0x2c] sm:$0xf]
      %v808 = vld [vmem:[%s7 + $0x30] sm:$0xf]
      %v809 = vld [vmem:[%s7 + $0x34] sm:$0xf]
      %v810 = vld [vmem:[%s7 + $0x38] sm:$0xf]
      %v811 = vld [vmem:[%s7 + $0x3c] sm:$0xf]
      %v812 = vld [vmem:[%s7 + $0x40] sm:$0xf]
      %v813 = vld [vmem:[%s7 + $0x44] sm:$0xf]
      %v814 = vld [vmem:[%s7 + $0x48] sm:$0xf]
      %v815 = vld [vmem:[%s7 + $0x4c] sm:$0xf]
      %v816 = vld [vmem:[%s7 + $0x50] sm:$0xf]
      %v817 = vld [vmem:[%s7 + $0x54] sm:$0xf]
      %v818 = vld [vmem:[%s7 + $0x58] sm:$0xf]
      %v819 = vld [vmem:[%s7 + $0x5c] sm:$0xf]
      %v820 = vld [vmem:[%s7 + $0x60] sm:$0xf]
      %v821 = vld [vmem:[%s7 + $0x64] sm:$0xf]
      %v822 = vld [vmem:[%s7 + $0x68] sm:$0xf]
      %v823 = vld [vmem:[%s7 + $0x6c] sm:$0xf]
      %v824 = vld [vmem:[%s7 + $0x70] sm:$0xf]
      %v825 = vld [vmem:[%s7 + $0x74] sm:$0xf]
      %v826 = vld [vmem:[%s7 + $0x78] sm:$0xf]
      %v827 = vld [vmem:[%s7 + $0x7c] sm:$0xf]
      %v830 = vunpack.c.l.b16 %v794
      %v831 = vunpack.c.h.b16 %v794
      %v832 = vunpack.c.l.b16 %v795
      %v833 = vunpack.c.h.b16 %v795
      %v834 = vpack.c.b16 %v832, %v830
      %v835 = vpack.c.b16 %v833, %v831
      %v870 = vunpack.c.l.b16 %v796
      %v871 = vunpack.c.l.b16 %v797
      %v872 = vunpack.c.l.b16 %v798
      %v873 = vunpack.c.l.b16 %v799
      %v874 = vunpack.c.l.b16 %v800
      %v875 = vunpack.c.l.b16 %v801
      %v876 = vunpack.c.l.b16 %v802
      %v877 = vunpack.c.l.b16 %v803
      %v878 = vunpack.c.l.b16 %v804
      %v879 = vunpack.c.l.b16 %v805
      %v880 = vunpack.c.l.b16 %v806
      %v881 = vunpack.c.l.b16 %v807
      %v882 = vunpack.c.l.b16 %v808
      %v883 = vunpack.c.l.b16 %v809
      %v884 = vunpack.c.l.b16 %v810
      %v885 = vunpack.c.l.b16 %v811
      %v886 = vunpack.c.l.b16 %v812
      %v887 = vunpack.c.l.b16 %v813
      %v888 = vunpack.c.l.b16 %v814
      %v889 = vunpack.c.l.b16 %v815
      %v890 = vunpack.c.l.b16 %v816
      %v891 = vunpack.c.l.b16 %v817
      %v892 = vunpack.c.l.b16 %v818
      %v893 = vunpack.c.l.b16 %v819
      %v894 = vunpack.c.l.b16 %v820
      %v895 = vunpack.c.l.b16 %v821
      %v896 = vunpack.c.l.b16 %v822
      %v897 = vunpack.c.l.b16 %v823
      %v898 = vunpack.c.l.b16 %v824
      %v899 = vunpack.c.l.b16 %v825
      %v900 = vunpack.c.l.b16 %v826
      %v901 = vunpack.c.l.b16 %v827
      %v902 = vpack.c.b16 %v871, %v870
      %v903 = vpack.c.b16 %v873, %v872
      %v904 = vpack.c.b16 %v875, %v874
      %v905 = vpack.c.b16 %v877, %v876
      %v906 = vpack.c.b16 %v879, %v878
      %v907 = vpack.c.b16 %v881, %v880
      %v908 = vpack.c.b16 %v883, %v882
      %v909 = vpack.c.b16 %v885, %v884
      %v910 = vpack.c.b16 %v887, %v886
      %v911 = vpack.c.b16 %v889, %v888
      %v912 = vpack.c.b16 %v891, %v890
      %v913 = vpack.c.b16 %v893, %v892
      %v914 = vpack.c.b16 %v895, %v894
      %v915 = vpack.c.b16 %v897, %v896
      %v916 = vpack.c.b16 %v899, %v898
      %v917 = vpack.c.b16 %v901, %v900
      %934 = vmatprep.subr.bf16.mxu0 0
      %935 = vmatpush1.bf16.msra.mxu0 %v909
      %936 = vmatprep.subr.bf16.mxu0 0
      %937 = vmatpush1.bf16.msra.mxu0 %v908
      %938 = vmatprep.subr.bf16.mxu0 0
      %939 = vmatpush1.bf16.msra.mxu0 %v907
      %940 = vmatprep.subr.bf16.mxu0 0
      %941 = vmatpush1.bf16.msra.mxu0 %v906
      %942 = vmatprep.subr.bf16.mxu0 0
      %943 = vmatpush1.bf16.msra.mxu0 %v905
      %944 = vmatprep.subr.bf16.mxu0 0
      %945 = vmatpush1.bf16.msra.mxu0 %v904
      %946 = vmatprep.subr.bf16.mxu0 0
      %947 = vmatpush1.bf16.msra.mxu0 %v903
      %948 = vmatprep.subr.bf16.mxu0 0
      %949 = vmatpush1.bf16.msra.mxu0 %v902
      %950 = vmatprep.subr.bf16.mxu0 0
      %951 = vmatpush2.bf16.msra.mxu0 %v917
      %952 = vmatprep.subr.bf16.mxu0 0
      %953 = vmatpush2.bf16.msra.mxu0 %v916
      %954 = vmatprep.subr.bf16.mxu0 0
      %955 = vmatpush2.bf16.msra.mxu0 %v915
      %956 = vmatprep.subr.bf16.mxu0 0
      %957 = vmatpush2.bf16.msra.mxu0 %v914
      %958 = vmatprep.subr.bf16.mxu0 0
      %959 = vmatpush2.bf16.msra.mxu0 %v913
      %960 = vmatprep.subr.bf16.mxu0 0
      %961 = vmatpush2.bf16.msra.mxu0 %v912
      %962 = vmatprep.subr.bf16.mxu0 0
      %963 = vmatpush2.bf16.msra.mxu0 %v911
      %964 = vmatprep.subr.bf16.mxu0 0
      %965 = vmatpush2.bf16.msra.mxu0 %v910
      %966 = vmatprep.mubr.bf16.mxu0 %v835
      %967 = vmatmul.mubr.bf16.gmra.mxu0 %v834
      %v968 = vpop.f32.mrf.mxu0
      %v969 = vadd.f32 0.0, %v968
      %v970 = vpop.f32.mrf.mxu0
      %v971 = vpop.f32.mrf.mxu0
      %v972 = vadd.f32 0.0, %v971
      %v973 = vpop.f32.mrf.mxu0
      %974 = vdwg.mxu0
      %v975 = vadd.f32 %v792, %v969
      %v976 = vadd.f32 %v793, %v972
      %v977 = vld [vmem:[%s8] sm:$0x1]
      %v979 = vlaneseq
      %v980 = vshrl.u32 %v979, 7
      %v981 = vsub.s32 0, %v980
      %v982 = vrot.slane %v977, %v981
      %v984 = vadd.f32 %v975, %v982
      %v985 = vadd.f32 %v976, %v982
      %vm986 = vcmp.ge.f32.partialorder %v984, 0.0
      %vm987 = vcmp.ge.f32.partialorder %v985, 0.0
      %v988 = vmul.f32 %v984, 0.2
      %v989 = vmul.f32 %v985, 0.2
      %v990 = vsel %vm986, %v984, %v988
      %v991 = vsel %vm987, %v985, %v989
      %v992 = vld [vmem:[#allocation2] sm:$0xff]
      %v993 = vsel %vm561, %v990, -inf
      %v994 = vsel %vm561, %v991, -inf
      %v995 = vmax.f32 %v993, %v994
      %v996 = vmax.f32 %v992, %v995
      %997 = vst.msk [vmem:[#allocation2] sm:$0xff] %vm561, %v996
      %v998 = vld [vmem:[#allocation3] sm:$0xff]
      %v999 = vsel %vm561, %v990, 0.0
      %v1000 = vsel %vm561, %v991, 0.0
      %v1001 = vadd.f32 %v999, %v1000
      %v1002 = vadd.f32 %v998, %v1001
      %1003 = vst.msk [vmem:[#allocation3] sm:$0xff] %vm561, %v1002
      // Predicated region
      $region61: #{dgcnn_forward.20} parent=55 // pred_check
        %p1004 = pneg %p505
      $region62: #{dgcnn_forward.20} parent=55 // pred_check_branch
        %1006 = sbr.rel (%p1004) target = $region64
      $region63: #{dgcnn_forward.20} parent=55 // pred_region
        %v1007 = vld [vmem:[#allocation2] sm:$0xff]
        %v1008 = vsel %vm561, %v1007, -inf
        %v1009 = vrot.slane %v1008, 4
        %v1010 = vmax.f32 %v1008, %v1009
        %v1011 = vrot.slane %v1010, 2
        %v1012 = vmax.f32 %v1010, %v1011
        %v1013 = vrot.slane %v1012, 1
        %v1014 = vmax.f32 %v1012, %v1013
        %vm1015 = vcmask 516096
        %1016 = vst.msk [vmem:[%s500] sm:$0x1] %vm1015, %v1014
        %v1017 = vld [vmem:[#allocation3] sm:$0xff]
        %v1018 = vsel %vm561, %v1017, 0.0
        %v1019 = vrot.slane %v1018, 4
        %v1020 = vadd.f32 %v1018, %v1019
        %v1021 = vrot.slane %v1020, 2
        %v1022 = vadd.f32 %v1020, %v1021
        %v1023 = vrot.slane %v1022, 1
        %v1024 = vadd.f32 %v1022, %v1023
        %v1025 = vmul.f32 %v1024, 0.0625
        %1026 = vst.msk [vmem:[%s503] sm:$0x1] %vm1015, %v1025
      $region64: #{dgcnn_forward.20} parent=55 // pred_fallthru
        _
      %p1027 = scmp.lt.s32.totalorder %s26, 1
      %s1028 = scalar_select %p1027, %s26, 1
      %s1029 = scalar_lea.vmem %s9, %s1028
      %p1030 = scmp.lt.s32.totalorder %s26, 1
      %s1031 = scalar_select %p1030, %s26, 1
      %s1032 = scalar_lea.vmem %s10, %s1031
      // Predicated region
      $region65: #{dgcnn_forward.20} parent=55 // pred_check
        %p1033 = pneg %p269
      $region66: #{dgcnn_forward.20} parent=55 // pred_check_branch
        %1035 = sbr.rel (%p1033) target = $region68
      $region67: #{dgcnn_forward.20} parent=55 // pred_region
        _
      $region68: #{dgcnn_forward.20} parent=55 // pred_fallthru
        _
      // Predicated region
      $region69: #{dgcnn_forward.20} parent=55 // pred_check
        %p1036 = pneg %p295
      $region70: #{dgcnn_forward.20} parent=55 // pred_check_branch
        %1038 = sbr.rel (%p1036) target = $region72
      $region71: #{dgcnn_forward.20} parent=55 // pred_region
        _
      $region72: #{dgcnn_forward.20} parent=55 // pred_fallthru
        _
    $region56: #{dgcnn_forward.20} parent=5 // pred_fallthru
      _
    %p1039 = scmp.le.s32.totalorder 2, %s17
    // Predicated region
    $region73: #{dgcnn_forward.20} parent=5 // pred_check
      %p1040 = pneg %p1039
    $region74: #{dgcnn_forward.20} parent=5 // pred_check_branch
      %1042 = sbr.rel (%p1040) target = $region76
    $region75: #{dgcnn_forward.20} parent=5 // pred_region
      %s1043 = ssub.s32 %s17, 2
      // Predicated region
      $region77: #{dgcnn_forward.20} parent=75 // pred_check
        %p1044 = pneg %p275
      $region78: #{dgcnn_forward.20} parent=75 // pred_check_branch
        %1046 = sbr.rel (%p1044) target = $region80
      $region79: #{dgcnn_forward.20} parent=75 // pred_region
        %p1047 = scmp.lt.s32.totalorder %s28, 1
        %s1048 = scalar_select %p1047, %s28, 1
        %s1049 = scalar_lea.vmem %s9, %s1048
      $region80: #{dgcnn_forward.20} parent=75 // pred_fallthru
        _
      // Predicated region
      $region81: #{dgcnn_forward.20} parent=75 // pred_check
        %p1050 = pneg %p301
      $region82: #{dgcnn_forward.20} parent=75 // pred_check_branch
        %1052 = sbr.rel (%p1050) target = $region84
      $region83: #{dgcnn_forward.20} parent=75 // pred_region
        %p1053 = scmp.lt.s32.totalorder %s28, 1
        %s1054 = scalar_select %p1053, %s28, 1
        %s1055 = scalar_lea.vmem %s10, %s1054
      $region84: #{dgcnn_forward.20} parent=75 // pred_fallthru
        _
    $region76: #{dgcnn_forward.20} parent=5 // pred_fallthru
      _
  $region6: #{dgcnn_forward.20} parent=0 // loop_footer
    %s21 = sadd.s32 1, %s17
  $region7: #{dgcnn_forward.20} parent=0 // loop_footer_branch
    %16 = sbr.rel target = $region3
  $region8: #{dgcnn_forward.20} parent=0 // loop_exit
    _

// kernel: dgcnn_forward.22
$region0: #{dgcnn_forward.22}
  #allocation0 [shape = 'u32[]', space=smem, size = 0x4, offset = 0x4, fixed_abs, tag = 'smem constant byte address 0x4 - core index']
  #allocation1 [shape = 'u32[144,128]{1,0:T(1,128)}', space=vmem, size = 0x12000, scoped, tag = 'internal scratch']
  %s0 = inlined_call_operand.vmem [shape: f32[2,512], index: 0, kind: input, shape index: {}]
  %s1 = inlined_call_operand.vmem [shape: f32[512,256], index: 1, kind: input, shape index: {}]
  %s2 = inlined_call_operand.vmem [shape: f32[1,256], index: 2, kind: input, shape index: {}]
  %s3 = inlined_call_operand.vmem [shape: f32[2,256], index: 3, kind: output, shape index: {}]
  %s4 = sld [smem:[#allocation0]]
  $region22: #{dgcnn_forward.22} parent=0
    _
  %s6 = ssub.s32 1, %s4
  %s7 = scalar_select 0, %s6, %s4
  // Predicated region
  $region2: #{dgcnn_forward.22} parent=0 // pred_check
    _
  $region3: #{dgcnn_forward.22} parent=0 // pred_check_branch
    %9 = sbr.rel (0) target = $region5
  $region4: #{dgcnn_forward.22} parent=0 // pred_region
    _
  $region5: #{dgcnn_forward.22} parent=0 // pred_fallthru
    _
  // Predicated region
  $region6: #{dgcnn_forward.22} parent=0 // pred_check
    _
  $region7: #{dgcnn_forward.22} parent=0 // pred_check_branch
    %11 = sbr.rel (0) target = $region9
  $region8: #{dgcnn_forward.22} parent=0 // pred_region
    _
  $region9: #{dgcnn_forward.22} parent=0 // pred_fallthru
    _
  // Predicated region
  $region10: #{dgcnn_forward.22} parent=0 // pred_check
    _
  $region11: #{dgcnn_forward.22} parent=0 // pred_check_branch
    %13 = sbr.rel (0) target = $region13
  $region12: #{dgcnn_forward.22} parent=0 // pred_region
    _
  $region13: #{dgcnn_forward.22} parent=0 // pred_fallthru
    _
  %v14 = vld [vmem:[%s0] sm:$0xff]
  %v15 = vld [vmem:[%s1] sm:$0xff]
  %v16 = vld [vmem:[%s1 + $0x8] sm:$0xff]
  %v17 = vld [vmem:[%s1 + $0x10] sm:$0xff]
  %v18 = vld [vmem:[%s1 + $0x18] sm:$0xff]
  %v19 = vld [vmem:[%s1 + $0x20] sm:$0xff]
  %v20 = vld [vmem:[%s1 + $0x28] sm:$0xff]
  %v21 = vld [vmem:[%s1 + $0x30] sm:$0xff]
  %v22 = vld [vmem:[%s1 + $0x38] sm:$0xff]
  %v23 = vld [vmem:[%s1 + $0x40] sm:$0xff]
  %v24 = vld [vmem:[%s1 + $0x48] sm:$0xff]
  %v25 = vld [vmem:[%s1 + $0x50] sm:$0xff]
  %v26 = vld [vmem:[%s1 + $0x58] sm:$0xff]
  %v27 = vld [vmem:[%s1 + $0x60] sm:$0xff]
  %v28 = vld [vmem:[%s1 + $0x68] sm:$0xff]
  %v29 = vld [vmem:[%s1 + $0x70] sm:$0xff]
  %v30 = vld [vmem:[%s1 + $0x78] sm:$0xff]
  %v31 = vld [vmem:[%s1 + $0x80] sm:$0xff]
  %v32 = vld [vmem:[%s1 + $0x88] sm:$0xff]
  %v33 = vld [vmem:[%s1 + $0x90] sm:$0xff]
  %v34 = vld [vmem:[%s1 + $0x98] sm:$0xff]
  %v35 = vld [vmem:[%s1 + $0xa0] sm:$0xff]
  %v36 = vld [vmem:[%s1 + $0xa8] sm:$0xff]
  %v37 = vld [vmem:[%s1 + $0xb0] sm:$0xff]
  %v38 = vld [vmem:[%s1 + $0xb8] sm:$0xff]
  %v39 = vld [vmem:[%s1 + $0xc0] sm:$0xff]
  %v40 = vld [vmem:[%s1 + $0xc8] sm:$0xff]
  %v41 = vld [vmem:[%s1 + $0xd0] sm:$0xff]
  %v42 = vld [vmem:[%s1 + $0xd8] sm:$0xff]
  %v43 = vld [vmem:[%s1 + $0xe0] sm:$0xff]
  %v44 = vld [vmem:[%s1 + $0xe8] sm:$0xff]
  %v45 = vld [vmem:[%s1 + $0xf0] sm:$0xff]
  %v46 = vld [vmem:[%s1 + $0xf8] sm:$0xff]
  %v47 = vld [vmem:[%s1 + $0x100] sm:$0xff]
  %v48 = vld [vmem:[%s1 + $0x108] sm:$0xff]
  %v49 = vld [vmem:[%s1 + $0x110] sm:$0xff]
  %v50 = vld [vmem:[%s1 + $0x118] sm:$0xff]
  %v51 = vld [vmem:[%s1 + $0x120] sm:$0xff]
  %v52 = vld [vmem:[%s1 + $0x128] sm:$0xff]
  %v53 = vld [vmem:[%s1 + $0x130] sm:$0xff]
  %v54 = vld [vmem:[%s1 + $0x138] sm:$0xff]
  %v55 = vld [vmem:[%s1 + $0x140] sm:$0xff]
  %v56 = vld [vmem:[%s1 + $0x148] sm:$0xff]
  %v57 = vld [vmem:[%s1 + $0x150] sm:$0xff]
  %v58 = vld [vmem:[%s1 + $0x158] sm:$0xff]
  %v59 = vld [vmem:[%s1 + $0x160] sm:$0xff]
  %v60 = vld [vmem:[%s1 + $0x168] sm:$0xff]
  %v61 = vld [vmem:[%s1 + $0x170] sm:$0xff]
  %v62 = vld [vmem:[%s1 + $0x178] sm:$0xff]
  %v63 = vld [vmem:[%s1 + $0x180] sm:$0xff]
  %v64 = vld [vmem:[%s1 + $0x188] sm:$0xff]
  %v65 = vld [vmem:[%s1 + $0x190] sm:$0xff]
  %v66 = vld [vmem:[%s1 + $0x198] sm:$0xff]
  %v67 = vld [vmem:[%s1 + $0x1a0] sm:$0xff]
  %v68 = vld [vmem:[%s1 + $0x1a8] sm:$0xff]
  %v69 = vld [vmem:[%s1 + $0x1b0] sm:$0xff]
  %v70 = vld [vmem:[%s1 + $0x1b8] sm:$0xff]
  %v71 = vld [vmem:[%s1 + $0x1c0] sm:$0xff]
  %v72 = vld [vmem:[%s1 + $0x1c8] sm:$0xff]
  %v73 = vld [vmem:[%s1 + $0x1d0] sm:$0xff]
  %v74 = vld [vmem:[%s1 + $0x1d8] sm:$0xff]
  %v75 = vld [vmem:[%s1 + $0x1e0] sm:$0xff]
  %v76 = vld [vmem:[%s1 + $0x1e8] sm:$0xff]
  %v77 = vld [vmem:[%s1 + $0x1f0] sm:$0xff]
  %v78 = vld [vmem:[%s1 + $0x1f8] sm:$0xff]
  %v79 = vld [vmem:[%s1 + $0x200] sm:$0xff]
  %v80 = vld [vmem:[%s1 + $0x208] sm:$0xff]
  %v81 = vld [vmem:[%s1 + $0x210] sm:$0xff]
  %v82 = vld [vmem:[%s1 + $0x218] sm:$0xff]
  %v83 = vld [vmem:[%s1 + $0x220] sm:$0xff]
  %v84 = vld [vmem:[%s1 + $0x228] sm:$0xff]
  %v85 = vld [vmem:[%s1 + $0x230] sm:$0xff]
  %v86 = vld [vmem:[%s1 + $0x238] sm:$0xff]
  %v87 = vld [vmem:[%s1 + $0x240] sm:$0xff]
  %v88 = vld [vmem:[%s1 + $0x248] sm:$0xff]
  %v89 = vld [vmem:[%s1 + $0x250] sm:$0xff]
  %v90 = vld [vmem:[%s1 + $0x258] sm:$0xff]
  %v91 = vld [vmem:[%s1 + $0x260] sm:$0xff]
  %v92 = vld [vmem:[%s1 + $0x268] sm:$0xff]
  %v93 = vld [vmem:[%s1 + $0x270] sm:$0xff]
  %v94 = vld [vmem:[%s1 + $0x278] sm:$0xff]
  %v95 = vld [vmem:[%s1 + $0x280] sm:$0xff]
  %v96 = vld [vmem:[%s1 + $0x288] sm:$0xff]
  %v97 = vld [vmem:[%s1 + $0x290] sm:$0xff]
  %v98 = vld [vmem:[%s1 + $0x298] sm:$0xff]
  %v99 = vld [vmem:[%s1 + $0x2a0] sm:$0xff]
  %v100 = vld [vmem:[%s1 + $0x2a8] sm:$0xff]
  %v101 = vld [vmem:[%s1 + $0x2b0] sm:$0xff]
  %v102 = vld [vmem:[%s1 + $0x2b8] sm:$0xff]
  %v103 = vld [vmem:[%s1 + $0x2c0] sm:$0xff]
  %v104 = vld [vmem:[%s1 + $0x2c8] sm:$0xff]
  %v105 = vld [vmem:[%s1 + $0x2d0] sm:$0xff]
  %v106 = vld [vmem:[%s1 + $0x2d8] sm:$0xff]
  %v107 = vld [vmem:[%s1 + $0x2e0] sm:$0xff]
  %v108 = vld [vmem:[%s1 + $0x2e8] sm:$0xff]
  %v109 = vld [vmem:[%s1 + $0x2f0] sm:$0xff]
  %v110 = vld [vmem:[%s1 + $0x2f8] sm:$0xff]
  %v111 = vld [vmem:[%s1 + $0x300] sm:$0xff]
  %v112 = vld [vmem:[%s1 + $0x308] sm:$0xff]
  %v113 = vld [vmem:[%s1 + $0x310] sm:$0xff]
  %v114 = vld [vmem:[%s1 + $0x318] sm:$0xff]
  %v115 = vld [vmem:[%s1 + $0x320] sm:$0xff]
  %v116 = vld [vmem:[%s1 + $0x328] sm:$0xff]
  %v117 = vld [vmem:[%s1 + $0x330] sm:$0xff]
  %v118 = vld [vmem:[%s1 + $0x338] sm:$0xff]
  %v119 = vld [vmem:[%s1 + $0x340] sm:$0xff]
  %v120 = vld [vmem:[%s1 + $0x348] sm:$0xff]
  %v121 = vld [vmem:[%s1 + $0x350] sm:$0xff]
  %v122 = vld [vmem:[%s1 + $0x358] sm:$0xff]
  %v123 = vld [vmem:[%s1 + $0x360] sm:$0xff]
  %v124 = vld [vmem:[%s1 + $0x368] sm:$0xff]
  %v125 = vld [vmem:[%s1 + $0x370] sm:$0xff]
  %v126 = vld [vmem:[%s1 + $0x378] sm:$0xff]
  %v127 = vld [vmem:[%s1 + $0x380] sm:$0xff]
  %v128 = vld [vmem:[%s1 + $0x388] sm:$0xff]
  %v129 = vld [vmem:[%s1 + $0x390] sm:$0xff]
  %v130 = vld [vmem:[%s1 + $0x398] sm:$0xff]
  %v131 = vld [vmem:[%s1 + $0x3a0] sm:$0xff]
  %v132 = vld [vmem:[%s1 + $0x3a8] sm:$0xff]
  %v133 = vld [vmem:[%s1 + $0x3b0] sm:$0xff]
  %v134 = vld [vmem:[%s1 + $0x3b8] sm:$0xff]
  %v135 = vld [vmem:[%s1 + $0x3c0] sm:$0xff]
  %v136 = vld [vmem:[%s1 + $0x3c8] sm:$0xff]
  %v137 = vld [vmem:[%s1 + $0x3d0] sm:$0xff]
  %v138 = vld [vmem:[%s1 + $0x3d8] sm:$0xff]
  %v139 = vld [vmem:[%s1 + $0x3e0] sm:$0xff]
  %v140 = vld [vmem:[%s1 + $0x3e8] sm:$0xff]
  %v141 = vld [vmem:[%s1 + $0x3f0] sm:$0xff]
  %v142 = vld [vmem:[%s1 + $0x3f8] sm:$0xff]
  %v143 = vld [vmem:[%s2] sm:$0x3]
  %v145 = vlaneseq
  %v146 = vshrl.u32 %v145, 7
  %v147 = vsub.s32 0, %v146
  %v148 = vrot.slane %v143, %v147
  %v149 = vlaneseq
  %v150 = vshrl.u32 %v149, 7
  %v151 = vsub.s32 1, %v150
  %v152 = vrot.slane %v143, %v151
  %v156 = vcombine.high %v14, %v14
  %v158 = vunpack.c.l.s4 1983009808
  %v159 = vunpack.c.0.s8 %v158
  %v160 = vlaneseq
  %v161 = vshrl.u32 %v160, 7
  %v162 = vsub.s32 %v159, %v161
  %v163 = vrot.slane %v14, %v162
  %v165 = vunpack.c.l.s4 1983009808
  %v166 = vunpack.c.0.s8 %v165
  %v167 = vlaneseq
  %v168 = vshrl.u32 %v167, 7
  %v169 = vsub.s32 %v166, %v168
  %v170 = vrot.slane %v156, %v169
  %v171 = vcombine.high %v163, %v163
  %v172 = vcombine.high %v170, %v170
  %177 = vmatprep.subr.mxu0 %v46
  %178 = vmatpush1.msra.mxu0 %v45
  %179 = vmatprep.subr.mxu0 %v44
  %180 = vmatpush1.msra.mxu0 %v43
  %181 = vmatprep.subr.mxu0 %v42
  %182 = vmatpush1.msra.mxu0 %v41
  %183 = vmatprep.subr.mxu0 %v40
  %184 = vmatpush1.msra.mxu0 %v39
  %185 = vmatprep.subr.mxu0 %v38
  %186 = vmatpush1.msra.mxu0 %v37
  %187 = vmatprep.subr.mxu0 %v36
  %188 = vmatpush1.msra.mxu0 %v35
  %189 = vmatprep.subr.mxu0 %v34
  %190 = vmatpush1.msra.mxu0 %v33
  %191 = vmatprep.subr.mxu0 %v32
  %192 = vmatpush1.msra.mxu0 %v31
  %193 = vmatprep.subr.mxu0 %v30
  %194 = vmatpush1.msra.mxu0 %v29
  %195 = vmatprep.subr.mxu0 %v28
  %196 = vmatpush1.msra.mxu0 %v27
  %197 = vmatprep.subr.mxu0 %v26
  %198 = vmatpush1.msra.mxu0 %v25
  %199 = vmatprep.subr.mxu0 %v24
  %200 = vmatpush1.msra.mxu0 %v23
  %201 = vmatprep.subr.mxu0 %v22
  %202 = vmatpush1.msra.mxu0 %v21
  %203 = vmatprep.subr.mxu0 %v20
  %204 = vmatpush1.msra.mxu0 %v19
  %205 = vmatprep.subr.mxu0 %v18
  %206 = vmatpush1.msra.mxu0 %v17
  %207 = vmatprep.subr.mxu0 %v16
  %208 = vmatpush1.msra.mxu0 %v15
  %209 = vmatprep.subr.mxu0 %v78
  %210 = vmatpush2.msra.mxu0 %v77
  %211 = vmatprep.subr.mxu0 %v76
  %212 = vmatpush2.msra.mxu0 %v75
  %213 = vmatprep.subr.mxu0 %v74
  %214 = vmatpush2.msra.mxu0 %v73
  %215 = vmatprep.subr.mxu0 %v72
  %216 = vmatpush2.msra.mxu0 %v71
  %217 = vmatprep.subr.mxu0 %v70
  %218 = vmatpush2.msra.mxu0 %v69
  %219 = vmatprep.subr.mxu0 %v68
  %220 = vmatpush2.msra.mxu0 %v67
  %221 = vmatprep.subr.mxu0 %v66
  %222 = vmatpush2.msra.mxu0 %v65
  %223 = vmatprep.subr.mxu0 %v64
  %224 = vmatpush2.msra.mxu0 %v63
  %225 = vmatprep.subr.mxu0 %v62
  %226 = vmatpush2.msra.mxu0 %v61
  %227 = vmatprep.subr.mxu0 %v60
  %228 = vmatpush2.msra.mxu0 %v59
  %229 = vmatprep.subr.mxu0 %v58
  %230 = vmatpush2.msra.mxu0 %v57
  %231 = vmatprep.subr.mxu0 %v56
  %232 = vmatpush2.msra.mxu0 %v55
  %233 = vmatprep.subr.mxu0 %v54
  %234 = vmatpush2.msra.mxu0 %v53
  %235 = vmatprep.subr.mxu0 %v52
  %236 = vmatpush2.msra.mxu0 %v51
  %237 = vmatprep.subr.mxu0 %v50
  %238 = vmatpush2.msra.mxu0 %v49
  %239 = vmatprep.subr.mxu0 %v48
  %240 = vmatpush2.msra.mxu0 %v47
  %241 = vmatprep.mubr.f32.mxu0 %v171
  %242 = vmatmul.mubr.f32.gmra.mxu0 %v163
  %v243 = vpop.f32.mrf.mxu0
  %v244 = vadd.f32 %v148, %v243
  %v245 = vpop.f32.mrf.mxu0
  %v246 = vadd.f32 %v152, %v245
  %247 = vdwg.mxu0
  %248 = vmatprep.subr.mxu0 %v110
  %249 = vmatpush1.msra.mxu0 %v109
  %250 = vmatprep.subr.mxu0 %v108
  %251 = vmatpush1.msra.mxu0 %v107
  %252 = vmatprep.subr.mxu0 %v106
  %253 = vmatpush1.msra.mxu0 %v105
  %254 = vmatprep.subr.mxu0 %v104
  %255 = vmatpush1.msra.mxu0 %v103
  %256 = vmatprep.subr.mxu0 %v102
  %257 = vmatpush1.msra.mxu0 %v101
  %258 = vmatprep.subr.mxu0 %v100
  %259 = vmatpush1.msra.mxu0 %v99
  %260 = vmatprep.subr.mxu0 %v98
  %261 = vmatpush1.msra.mxu0 %v97
  %262 = vmatprep.subr.mxu0 %v96
  %263 = vmatpush1.msra.mxu0 %v95
  %264 = vmatprep.subr.mxu0 %v94
  %265 = vmatpush1.msra.mxu0 %v93
  %266 = vmatprep.subr.mxu0 %v92
  %267 = vmatpush1.msra.mxu0 %v91
  %268 = vmatprep.subr.mxu0 %v90
  %269 = vmatpush1.msra.mxu0 %v89
  %270 = vmatprep.subr.mxu0 %v88
  %271 = vmatpush1.msra.mxu0 %v87
  %272 = vmatprep.subr.mxu0 %v86
  %273 = vmatpush1.msra.mxu0 %v85
  %274 = vmatprep.subr.mxu0 %v84
  %275 = vmatpush1.msra.mxu0 %v83
  %276 = vmatprep.subr.mxu0 %v82
  %277 = vmatpush1.msra.mxu0 %v81
  %278 = vmatprep.subr.mxu0 %v80
  %279 = vmatpush1.msra.mxu0 %v79
  %280 = vmatprep.subr.mxu0 %v142
  %281 = vmatpush2.msra.mxu0 %v141
  %282 = vmatprep.subr.mxu0 %v140
  %283 = vmatpush2.msra.mxu0 %v139
  %284 = vmatprep.subr.mxu0 %v138
  %285 = vmatpush2.msra.mxu0 %v137
  %286 = vmatprep.subr.mxu0 %v136
  %287 = vmatpush2.msra.mxu0 %v135
  %288 = vmatprep.subr.mxu0 %v134
  %289 = vmatpush2.msra.mxu0 %v133
  %290 = vmatprep.subr.mxu0 %v132
  %291 = vmatpush2.msra.mxu0 %v131
  %292 = vmatprep.subr.mxu0 %v130
  %293 = vmatpush2.msra.mxu0 %v129
  %294 = vmatprep.subr.mxu0 %v128
  %295 = vmatpush2.msra.mxu0 %v127
  %296 = vmatprep.subr.mxu0 %v126
  %297 = vmatpush2.msra.mxu0 %v125
  %298 = vmatprep.subr.mxu0 %v124
  %299 = vmatpush2.msra.mxu0 %v123
  %300 = vmatprep.subr.mxu0 %v122
  %301 = vmatpush2.msra.mxu0 %v121
  %302 = vmatprep.subr.mxu0 %v120
  %303 = vmatpush2.msra.mxu0 %v119
  %304 = vmatprep.subr.mxu0 %v118
  %305 = vmatpush2.msra.mxu0 %v117
  %306 = vmatprep.subr.mxu0 %v116
  %307 = vmatpush2.msra.mxu0 %v115
  %308 = vmatprep.subr.mxu0 %v114
  %309 = vmatpush2.msra.mxu0 %v113
  %310 = vmatprep.subr.mxu0 %v112
  %311 = vmatpush2.msra.mxu0 %v111
  %312 = vmatprep.mubr.f32.mxu0 %v172
  %313 = vmatmul.mubr.f32.gmra.mxu0 %v170
  %v314 = vpop.f32.mrf.mxu0
  %v315 = vadd.f32 %v244, %v314
  %v316 = vpop.f32.mrf.mxu0
  %v317 = vadd.f32 %v246, %v316
  %318 = vdwg.mxu0
  %vm319 = vcmp.ge.f32.partialorder %v315, 0.0
  %vm320 = vcmp.ge.f32.partialorder %v317, 0.0
  %v321 = vmul.f32 %v315, 0.2
  %v322 = vmul.f32 %v317, 0.2
  %v323 = vsel %vm319, %v315, %v321
  %v324 = vsel %vm320, %v317, %v322
  %v327 = vcombine.low %v323, %v324
  %v329 = vunpack.c.l.s4 1983009808
  %v330 = vunpack.c.0.s8 %v329
  %v331 = vlaneseq
  %v332 = vshrl.u32 %v331, 7
  %v333 = vsub.s32 %v330, %v332
  %v334 = vrot.slane %v327, %v333
  %336 = vst [vmem:[%s3] sm:$0xf] %v334
  // Predicated region
  $region14: #{dgcnn_forward.22} parent=0 // pred_check
    _
  $region15: #{dgcnn_forward.22} parent=0 // pred_check_branch
    %338 = sbr.rel (0) target = $region17
  $region16: #{dgcnn_forward.22} parent=0 // pred_region
    _
  $region17: #{dgcnn_forward.22} parent=0 // pred_fallthru
    _
  // Predicated region
  $region18: #{dgcnn_forward.22} parent=0 // pred_check
    _
  $region19: #{dgcnn_forward.22} parent=0 // pred_check_branch
    %340 = sbr.rel (0) target = $region21
  $region20: #{dgcnn_forward.22} parent=0 // pred_region
    _
  $region21: #{dgcnn_forward.22} parent=0 // pred_fallthru
    _

// kernel: dgcnn_forward.23
$region0: #{dgcnn_forward.23}
  #allocation0 [shape = 'u32[]', space=smem, size = 0x4, offset = 0x4, fixed_abs, tag = 'smem constant byte address 0x4 - core index']
  #allocation1 [shape = 'u32[144,128]{1,0:T(1,128)}', space=vmem, size = 0x12000, scoped, tag = 'internal scratch']
  %s0 = inlined_call_operand.vmem [shape: f32[2,256], index: 0, kind: input, shape index: {}]
  %s1 = inlined_call_operand.vmem [shape: f32[256,40], index: 1, kind: input, shape index: {}]
  %s2 = inlined_call_operand.vmem [shape: f32[1,40], index: 2, kind: input, shape index: {}]
  %s3 = inlined_call_operand.hbm [shape: f32[2,40], index: 3, kind: output, shape index: {}]
  %s4 = sld [smem:[#allocation0]]
  $region22: #{dgcnn_forward.23} parent=0
    _
  %s6 = ssub.s32 1, %s4
  %s7 = scalar_select 0, %s6, %s4
  $region1: #{dgcnn_forward.23} parent=0
    #allocation2 [shape = 'u8[1024]{0}', space=vmem, size = 0x400, scoped, tag = 'output window, operand 0, single buffered']
    #allocation3 [shape = 's32[1]{0}', space=sflag, size = 0x4, scoped, tag = 'scoped memory for dgcnn_forward.23']
    %8 = vsyncpa [#allocation3], 0
    // Predicated region
    $region2: #{dgcnn_forward.23} parent=1 // pred_check
      _
    $region3: #{dgcnn_forward.23} parent=1 // pred_check_branch
      %10 = sbr.rel (0) target = $region5
    $region4: #{dgcnn_forward.23} parent=1 // pred_region
      _
    $region5: #{dgcnn_forward.23} parent=1 // pred_fallthru
      _
    // Predicated region
    $region6: #{dgcnn_forward.23} parent=1 // pred_check
      _
    $region7: #{dgcnn_forward.23} parent=1 // pred_check_branch
      %12 = sbr.rel (0) target = $region9
    $region8: #{dgcnn_forward.23} parent=1 // pred_region
      _
    $region9: #{dgcnn_forward.23} parent=1 // pred_fallthru
      _
    // Predicated region
    $region10: #{dgcnn_forward.23} parent=1 // pred_check
      _
    $region11: #{dgcnn_forward.23} parent=1 // pred_check_branch
      %14 = sbr.rel (0) target = $region13
    $region12: #{dgcnn_forward.23} parent=1 // pred_region
      _
    $region13: #{dgcnn_forward.23} parent=1 // pred_fallthru
      _
    %v15 = vld [vmem:[%s0] sm:$0xf]
    %v16 = vld [vmem:[%s1] sm:$0xff]
    %v17 = vld [vmem:[%s1 + $0x8] sm:$0xff]
    %v18 = vld [vmem:[%s1 + $0x10] sm:$0xff]
    %v19 = vld [vmem:[%s1 + $0x18] sm:$0xff]
    %v20 = vld [vmem:[%s1 + $0x20] sm:$0xff]
    %v21 = vld [vmem:[%s1 + $0x28] sm:$0xff]
    %v22 = vld [vmem:[%s1 + $0x30] sm:$0xff]
    %v23 = vld [vmem:[%s1 + $0x38] sm:$0xff]
    %v24 = vld [vmem:[%s1 + $0x40] sm:$0xff]
    %v25 = vld [vmem:[%s1 + $0x48] sm:$0xff]
    %v26 = vld [vmem:[%s1 + $0x50] sm:$0xff]
    %v27 = vld [vmem:[%s1 + $0x58] sm:$0xff]
    %v28 = vld [vmem:[%s1 + $0x60] sm:$0xff]
    %v29 = vld [vmem:[%s1 + $0x68] sm:$0xff]
    %v30 = vld [vmem:[%s1 + $0x70] sm:$0xff]
    %v31 = vld [vmem:[%s1 + $0x78] sm:$0xff]
    %v32 = vld [vmem:[%s1 + $0x80] sm:$0xff]
    %v33 = vld [vmem:[%s1 + $0x88] sm:$0xff]
    %v34 = vld [vmem:[%s1 + $0x90] sm:$0xff]
    %v35 = vld [vmem:[%s1 + $0x98] sm:$0xff]
    %v36 = vld [vmem:[%s1 + $0xa0] sm:$0xff]
    %v37 = vld [vmem:[%s1 + $0xa8] sm:$0xff]
    %v38 = vld [vmem:[%s1 + $0xb0] sm:$0xff]
    %v39 = vld [vmem:[%s1 + $0xb8] sm:$0xff]
    %v40 = vld [vmem:[%s1 + $0xc0] sm:$0xff]
    %v41 = vld [vmem:[%s1 + $0xc8] sm:$0xff]
    %v42 = vld [vmem:[%s1 + $0xd0] sm:$0xff]
    %v43 = vld [vmem:[%s1 + $0xd8] sm:$0xff]
    %v44 = vld [vmem:[%s1 + $0xe0] sm:$0xff]
    %v45 = vld [vmem:[%s1 + $0xe8] sm:$0xff]
    %v46 = vld [vmem:[%s1 + $0xf0] sm:$0xff]
    %v47 = vld [vmem:[%s1 + $0xf8] sm:$0xff]
    %v48 = vld [vmem:[%s2] sm:$0x1]
    %v50 = vlaneseq
    %v51 = vshrl.u32 %v50, 7
    %v52 = vsub.s32 0, %v51
    %v53 = vrot.slane %v48, %v52
    %v57 = vunpack.c.l.s4 1983009808
    %v58 = vunpack.c.0.s8 %v57
    %v59 = vlaneseq
    %v60 = vshrl.u32 %v59, 7
    %v61 = vsub.s32 %v58, %v60
    %v62 = vrot.slane %v15, %v61
    %v63 = vcombine.high %v62, %v62
    %66 = vmatprep.subr.mxu0 0.0
    %67 = vmatpush1.msra.mxu0 %v31
    %68 = vmatprep.subr.mxu0 0.0
    %69 = vmatpush1.msra.mxu0 %v30
    %70 = vmatprep.subr.mxu0 0.0
    %71 = vmatpush1.msra.mxu0 %v29
    %72 = vmatprep.subr.mxu0 0.0
    %73 = vmatpush1.msra.mxu0 %v28
    %74 = vmatprep.subr.mxu0 0.0
    %75 = vmatpush1.msra.mxu0 %v27
    %76 = vmatprep.subr.mxu0 0.0
    %77 = vmatpush1.msra.mxu0 %v26
    %78 = vmatprep.subr.mxu0 0.0
    %79 = vmatpush1.msra.mxu0 %v25
    %80 = vmatprep.subr.mxu0 0.0
    %81 = vmatpush1.msra.mxu0 %v24
    %82 = vmatprep.subr.mxu0 0.0
    %83 = vmatpush1.msra.mxu0 %v23
    %84 = vmatprep.subr.mxu0 0.0
    %85 = vmatpush1.msra.mxu0 %v22
    %86 = vmatprep.subr.mxu0 0.0
    %87 = vmatpush1.msra.mxu0 %v21
    %88 = vmatprep.subr.mxu0 0.0
    %89 = vmatpush1.msra.mxu0 %v20
    %90 = vmatprep.subr.mxu0 0.0
    %91 = vmatpush1.msra.mxu0 %v19
    %92 = vmatprep.subr.mxu0 0.0
    %93 = vmatpush1.msra.mxu0 %v18
    %94 = vmatprep.subr.mxu0 0.0
    %95 = vmatpush1.msra.mxu0 %v17
    %96 = vmatprep.subr.mxu0 0.0
    %97 = vmatpush1.msra.mxu0 %v16
    %98 = vmatprep.subr.mxu0 0.0
    %99 = vmatpush2.msra.mxu0 %v47
    %100 = vmatprep.subr.mxu0 0.0
    %101 = vmatpush2.msra.mxu0 %v46
    %102 = vmatprep.subr.mxu0 0.0
    %103 = vmatpush2.msra.mxu0 %v45
    %104 = vmatprep.subr.mxu0 0.0
    %105 = vmatpush2.msra.mxu0 %v44
    %106 = vmatprep.subr.mxu0 0.0
    %107 = vmatpush2.msra.mxu0 %v43
    %108 = vmatprep.subr.mxu0 0.0
    %109 = vmatpush2.msra.mxu0 %v42
    %110 = vmatprep.subr.mxu0 0.0
    %111 = vmatpush2.msra.mxu0 %v41
    %112 = vmatprep.subr.mxu0 0.0
    %113 = vmatpush2.msra.mxu0 %v40
    %114 = vmatprep.subr.mxu0 0.0
    %115 = vmatpush2.msra.mxu0 %v39
    %116 = vmatprep.subr.mxu0 0.0
    %117 = vmatpush2.msra.mxu0 %v38
    %118 = vmatprep.subr.mxu0 0.0
    %119 = vmatpush2.msra.mxu0 %v37
    %120 = vmatprep.subr.mxu0 0.0
    %121 = vmatpush2.msra.mxu0 %v36
    %122 = vmatprep.subr.mxu0 0.0
    %123 = vmatpush2.msra.mxu0 %v35
    %124 = vmatprep.subr.mxu0 0.0
    %125 = vmatpush2.msra.mxu0 %v34
    %126 = vmatprep.subr.mxu0 0.0
    %127 = vmatpush2.msra.mxu0 %v33
    %128 = vmatprep.subr.mxu0 0.0
    %129 = vmatpush2.msra.mxu0 %v32
    %130 = vmatprep.mubr.f32.mxu0 %v63
    %131 = vmatmul.mubr.f32.gmra.mxu0 %v62
    %v132 = vpop.f32.mrf.mxu0
    %v133 = vadd.f32 %v53, %v132
    %v134 = vpop.f32.mrf.mxu0
    %135 = vdwg.mxu0
    %vm136 = vcmask 320512
    %137 = vst.msk [vmem:[#allocation2] sm:$0x3] %vm136, %v133
    // Predicated region
    $region14: #{dgcnn_forward.23} parent=1 // pred_check
      _
    $region15: #{dgcnn_forward.23} parent=1 // pred_check_branch
      %139 = sbr.rel (0) target = $region17
    $region16: #{dgcnn_forward.23} parent=1 // pred_region
      %s141 = ssub.s32 32, 32
      %142 = vsyncadd [#allocation3], %s141
      %s144 = sshll.u32 [#allocation2], 4
      %s145 = int_to_ptr.vmem [resolvable:$true] %s144
      %147 = dma.vmem_to_hbm [thread:$0]  %s145, 32, %s3, [#allocation3]
    $region17: #{dgcnn_forward.23} parent=1 // pred_fallthru
      _
    // Predicated region
    $region18: #{dgcnn_forward.23} parent=1 // pred_check
      _
    $region19: #{dgcnn_forward.23} parent=1 // pred_check_branch
      %149 = sbr.rel (0) target = $region21
    $region20: #{dgcnn_forward.23} parent=1 // pred_region
      %150 = dma.done [#allocation3], 32
    $region21: #{dgcnn_forward.23} parent=1 // pred_fallthru
      _
    %151 = vsyncpa [#allocation3], 1

</llo_original>
